<compile_context>
chip_gen: v6e
topology: v6e:2x2x1
jax: 0.10.0
libtpu: 0.0.40
codegen_flags: <defaults>
</compile_context>

<pallas_src>
import functools

import jax
import jax.numpy as jnp
from jax import lax
from jax.experimental import pallas as pl
from jax.experimental.pallas import tpu as pltpu


def _round_up(x, m):
    return (x + m - 1) // m * m


def _pad2(a, rows, cols):
    out = jnp.zeros((rows, cols), jnp.float32)
    return out.at[: a.shape[0], : a.shape[1]].set(a)


# ----------------------------- Pallas kernel --------------------------------

def make_gmm_layer_kernel(*, K, dim, n_edges, tile_e, residual, apply_readout):
    """One fused MoNet layer: input projection -> fc -> per-edge Gaussian
    weighting -> index gather/scatter aggregation -> BN -> ReLU -> residual
    [-> MLP readout for the last layer]."""

    def kernel(src_ref, dst_ref,                      # SMEM scalar-prefetch (E_pad,)
               x_ref, win_ref, bin_ref, wfc_ref,      # VMEM, full blocks
               ps_s_ref, ps_d_ref,                    # VMEM, (tile_e, 1) edge blocks
               wp_ref, bp_ref, mu_ref, isig_ref,      # SMEM small parameter tables
               bn_scale_ref, bn_shift_ref,            # VMEM, (1, O_pad)
               *rest):
        if apply_readout:
            (w1_ref, b1_ref, w2_ref, b2_ref, w3_ref, b3_ref,
             out_ref, h_sc, hfc_sc, hsrc_sc, m_sc, acc_sc) = rest
        else:
            (out_ref, h_sc, hfc_sc, hsrc_sc, m_sc, acc_sc) = rest

        t = pl.program_id(0)
        n_tiles = pl.num_programs(0)
        base = t * tile_e
        O_pad = m_sc.shape[1]                         # per-kernel padded width (128)

        # ---- once per layer: input projection (embedding / identity) + fc ----
        @pl.when(t == 0)
        def _init():
            hp = (jnp.dot(x_ref[...], win_ref[...],
                          preferred_element_type=jnp.float32) + bin_ref[...])
            h_sc[...] = hp
            hfc_sc[...] = jnp.dot(hp, wfc_ref[...],
                                  preferred_element_type=jnp.float32)
            acc_sc[...] = jnp.zeros(acc_sc.shape, jnp.float32)

        # ---- index-based gather of source-node features for this edge tile ----
        # (replaces the old dense one-hot S[E,N] @ hfc matmul)
        def gather_body(e, carry):
            s = src_ref[base + e]
            hsrc_sc[pl.ds(e, 1), :] = hfc_sc[pl.ds(s, 1), :]
            return carry
        lax.fori_loop(0, tile_e, gather_body, 0)

        # ---- Gaussian mixture weights on the VPU/EUP (dim, K unrolled) ----
        ps_s = ps_s_ref[...]                          # (tile_e, 1)
        ps_d = ps_d_ref[...]
        u = [jnp.tanh(ps_s * wp_ref[0, d] + ps_d * wp_ref[1, d] + bp_ref[0, d])
             for d in range(dim)]

        # Per-edge message, already summed over the K kernels (fuses the old
        # per-K scatter loop into one pass).
        m_val = jnp.zeros((tile_e, O_pad), jnp.float32)
        for k in range(K):
            dist = jnp.zeros((tile_e, 1), jnp.float32)
            for d in range(dim):
                diff = u[d] - mu_ref[k, d]
                dist = dist + diff * diff * (isig_ref[k, d] * isig_ref[k, d])
            w_k = jnp.exp(-0.5 * dist)                # (tile_e, 1)
            m_val = m_val + w_k * hsrc_sc[:, k * O_pad:(k + 1) * O_pad]

        # Mask padded edges so they contribute nothing to the aggregation.
        eids = lax.broadcasted_iota(jnp.int32, (tile_e, 1), 0) + base
        m_sc[...] = jnp.where(eids < n_edges, m_val, 0.0)

        # ---- scatter-add messages to destination nodes ('sum' aggregation) ----
        # (replaces the old dense D^T[N,E] @ m matmul)
        def scatter_body(e, carry):
            dnode = dst_ref[base + e]
            acc_sc[pl.ds(dnode, 1), :] = (acc_sc[pl.ds(dnode, 1), :]
                                          + m_sc[pl.ds(e, 1), :])
            return carry
        lax.fori_loop(0, tile_e, scatter_body, 0)

        # ---- finalize: BN (eval affine) -> ReLU -> residual [-> MLP readout] ----
        @pl.when(t == n_tiles - 1)
        def _fin():
            out = jnp.maximum(acc_sc[...] * bn_scale_ref[...]
                              + bn_shift_ref[...], 0.0)
            if residual:
                out = h_sc[...] + out                 # h = h_in + relu(bn(conv))
            if apply_readout:
                y = jnp.maximum(
                    jnp.dot(out, w1_ref[...],
                            preferred_element_type=jnp.float32) + b1_ref[...], 0.0)
                y = jnp.maximum(
                    jnp.dot(y, w2_ref[...],
                            preferred_element_type=jnp.float32) + b2_ref[...], 0.0)
                out = (jnp.dot(y, w3_ref[...],
                               preferred_element_type=jnp.float32) + b3_ref[...])
            out_ref[...] = out

    return kernel


def gmm_layer_call(layer_kp, mlp_kp, src_p, dst_p, ps_s_p, ps_d_p, x_p, *,
                   n_edges, tile_e, apply_readout):
    N_pad = x_p.shape[0]
    E_pad = src_p.shape[0]
    n_tiles = E_pad // tile_e
    H_pad = layer_kp['win'].shape[1]                  # padded layer-input width
    KO = layer_kp['wfc'].shape[1]                     # K * O_pad
    O_pad = layer_kp['bn_scale'].shape[1]
    K = KO // O_pad
    dim = layer_kp['wp'].shape[1]
    out_w = mlp_kp['w3'].shape[1] if apply_readout else O_pad

    kernel = make_gmm_layer_kernel(
        K=K, dim=dim, n_edges=n_edges, tile_e=tile_e,
        residual=layer_kp['residual'], apply_readout=apply_readout)

    def full(shape):
        return pl.BlockSpec(shape, lambda t, s, d, _shape=shape: (0,) * len(_shape))

    smem = pl.BlockSpec(memory_space=pltpu.MemorySpace.SMEM)
    edge = pl.BlockSpec((tile_e, 1), lambda t, s, d: (t, 0))

    in_specs = [
        full(x_p.shape), full(layer_kp['win'].shape), full(layer_kp['bin'].shape),
        full(layer_kp['wfc'].shape), edge, edge,
        smem, smem, smem, smem,
        full(layer_kp['bn_scale'].shape), full(layer_kp['bn_shift'].shape),
    ]
    args = [x_p, layer_kp['win'], layer_kp['bin'], layer_kp['wfc'],
            ps_s_p, ps_d_p,
            layer_kp['wp'], layer_kp['bp'], layer_kp['mu'], layer_kp['inv_sigma'],
            layer_kp['bn_scale'], layer_kp['bn_shift']]
    if apply_readout:
        for name in ('w1', 'b1', 'w2', 'b2', 'w3', 'b3'):
            in_specs.append(full(mlp_kp[name].shape))
            args.append(mlp_kp[name])

    grid_spec = pltpu.PrefetchScalarGridSpec(
        num_scalar_prefetch=2,                         # src, dst -> SMEM
        grid=(n_tiles,),                               # edge tiles (accumulator axis)
        in_specs=in_specs,
        out_specs=pl.BlockSpec((N_pad, out_w), lambda t, s, d: (0, 0)),
        scratch_shapes=[
            pltpu.VMEM((N_pad, H_pad), jnp.float32),   # projected input h
            pltpu.VMEM((N_pad, KO), jnp.float32),      # hfc = h @ Wfc (resident)
            pltpu.VMEM((tile_e, KO), jnp.float32),     # gathered per-edge src feats
            pltpu.VMEM((tile_e, O_pad), jnp.float32),  # K-summed per-edge messages
            pltpu.VMEM((N_pad, O_pad), jnp.float32),   # node accumulator
        ],
    )
    return pl.pallas_call(
        kernel,
        grid_spec=grid_spec,
        out_shape=jax.ShapeDtypeStruct((N_pad, out_w), jnp.float32),
        compiler_params=pltpu.CompilerParams(
            dimension_semantics=("arbitrary",),        # edge axis = accumulation
            vmem_limit_bytes=32 * 1024 * 1024),        # explicit; safe on v5e/v6e/v7x
    )(src_p, dst_p, *args)


# ------------------------- parameter initialization -------------------------

def init_monet_params(net_params, key):
    """Unpadded ("logical") parameters mirroring the PyTorch module
    (BatchNorm in eval mode folded to an affine)."""
    in_dim = net_params['in_dim']
    hidden = net_params['hidden_dim']
    out_dim = net_params['out_dim']
    K = net_params['kernel']
    dim = net_params['pseudo_dim_MoNet']
    n_classes = net_params['n_classes']
    L = net_params['L']
    eps = 1e-5

    keys = iter(jax.random.split(key, 64))

    def nrm(shape, scale=0.1):
        return scale * jax.random.normal(next(keys), shape, jnp.float32)

    params = {
        'embed_w': nrm((in_dim, hidden)),      # embedding_h.weight^T
        'embed_b': nrm((1, hidden)),           # embedding_h.bias
        'layers': [],
        'n_classes': n_classes,
    }

    layer_dims = [(hidden, hidden)] * (L - 1) + [(hidden, out_dim)]
    for din, dout in layer_dims:
        gamma = 1.0 + nrm((1, dout))
        beta = nrm((1, dout))
        rmean = nrm((1, dout))
        rvar = 1.0 + jnp.abs(nrm((1, dout)))
        bn_scale = gamma / jnp.sqrt(rvar + eps)
        bn_shift = beta - rmean * bn_scale
        params['layers'].append({
            'K': K, 'O': dout, 'din': din, 'dim': dim,
            'residual': bool(net_params['residual']) and (din == dout),
            'wp': nrm((2, dim)),               # pseudo_proj Linear(2, dim).weight^T
            'bp': nrm((1, dim)),
            'mu': nrm((K, dim)),
            'inv_sigma': 1.0 + nrm((K, dim)),
            'wfc': nrm((din, K * dout)),       # GMM fc.weight^T
            'bn_scale': bn_scale,
            'bn_shift': bn_shift,
            # NOTE: GMMLayer also allocates a bias parameter that the reference
            # forward never uses, so it is intentionally omitted.
        })

    d1, d2 = out_dim // 2, out_dim // 4
    params['mlp'] = {
        'w1': nrm((out_dim, d1)), 'b1': nrm((1, d1)),
        'w2': nrm((d1, d2)),      'b2': nrm((1, d2)),
        'w3': nrm((d2, n_classes)), 'b3': nrm((1, n_classes)),
    }
    return params


def build_kernel_params(params, net_params):
    """Lane-dense (128-padded) parameter layout for the Pallas kernels.
    Each Gaussian kernel k gets its own 128-lane chunk of Wfc so per-k slices
    are lane-tile aligned; the embedding linear is folded into layer 0's
    input projection (identity projection for later layers)."""
    in_dim = net_params['in_dim']
    IN = _round_up(in_dim, 128)

    kp = {'layers': [], 'n_classes': params['n_classes']}
    for i, lp in enumerate(params['layers']):
        K, O, din = lp['K'], lp['O'], lp['din']
        OP = _round_up(O, 128)
        DP = _round_up(din, 128)
        if i == 0:
            win = _pad2(params['embed_w'], IN, DP)
            bin_ = _pad2(params['embed_b'], 1, DP)
        else:
            in_w = _round_up(params['layers'][i - 1]['O'], 128)
            win = jnp.eye(in_w, DP, dtype=jnp.float32)   # identity projection
            bin_ = jnp.zeros((1, DP), jnp.float32)
        wfc = jnp.zeros((DP, K * OP), jnp.float32)
        for k in range(K):
            wfc = wfc.at[:din, k * OP:k * OP + O].set(lp['wfc'][:, k * O:(k + 1) * O])
        kp['layers'].append({
            'residual': lp['residual'],
            'win': win, 'bin': bin_, 'wfc': wfc,
            'wp': lp['wp'], 'bp': lp['bp'],
            'mu': lp['mu'], 'inv_sigma': lp['inv_sigma'],
            'bn_scale': _pad2(lp['bn_scale'], 1, OP),
            'bn_shift': _pad2(lp['bn_shift'], 1, OP),
        })

    m = params['mlp']
    OP_last = _round_up(params['layers'][-1]['O'], 128)
    D1P = _round_up(m['w1'].shape[1], 128)
    D2P = _round_up(m['w2'].shape[1], 128)
    CP = _round_up(m['w3'].shape[1], 128)
    kp['mlp'] = {
        'w1': _pad2(m['w1'], OP_last, D1P), 'b1': _pad2(m['b1'], 1, D1P),
        'w2': _pad2(m['w2'], D1P, D2P),     'b2': _pad2(m['b2'], 1, D2P),
        'w3': _pad2(m['w3'], D2P, CP),      'b3': _pad2(m['b3'], 1, CP),
    }
    return kp


# -------------------------------- forward -----------------------------------

def monet_forward_pallas(kparams, src, dst, x, *, tile_e=32):
    assert tile_e % 8 == 0
    N, in_dim = x.shape
    E = src.shape[0]
    N_pad = _round_up(N, 8)
    IN_pad = kparams['layers'][0]['win'].shape[0]
    E_pad = _round_up(E, tile_e)

    # graph bookkeeping (plain-JAX glue, O(E)): in-degrees + pseudo coords
    # compute_pseudo: 1 / sqrt(in_degree + 1) for both edge endpoints.
    deg = jnp.zeros((N,), jnp.float32).at[dst].add(1.0)
    inv = 1.0 / jnp.sqrt(deg + 1.0)
    ps_s = inv[src]
    ps_d = inv[dst]

    src_p = jnp.zeros((E_pad,), jnp.int32).at[:E].set(src.astype(jnp.int32))
    dst_p = jnp.zeros((E_pad,), jnp.int32).at[:E].set(dst.astype(jnp.int32))
    ps_s_p = jnp.zeros((E_pad, 1), jnp.float32).at[:E, 0].set(ps_s)
    ps_d_p = jnp.zeros((E_pad, 1), jnp.float32).at[:E, 0].set(ps_d)
    x_p = jnp.zeros((N_pad, IN_pad), jnp.float32).at[:N, :in_dim].set(x)

    h = x_p
    n_layers = len(kparams['layers'])
    for i, lp in enumerate(kparams['layers']):
        h = gmm_layer_call(lp, kparams['mlp'], src_p, dst_p, ps_s_p, ps_d_p, h,
                           n_edges=E, tile_e=tile_e,
                           apply_readout=(i == n_layers - 1))
    return h[:N, :kparams['n_classes']]


def monet_forward_reference(params, src, dst, x):
    """Plain-JAX forward mirroring the PyTorch module (eval mode), for checking."""
    N = x.shape[0]
    deg = jnp.zeros((N,), jnp.float32).at[dst].add(1.0)
    inv = 1.0 / jnp.sqrt(deg + 1.0)
    pseudo = jnp.stack([inv[src], inv[dst]], axis=1)                  # (E, 2)
    h = x @ params['embed_w'] + params['embed_b']
    for lp in params['layers']:
        h_in = h
        u = jnp.tanh(pseudo @ lp['wp'] + lp['bp'])                    # (E, dim)
        diff = u[:, None, :] - lp['mu'][None, :, :]                   # (E, K, dim)
        w = jnp.exp(-0.5 * jnp.sum(diff * diff
                                   * (lp['inv_sigma'][None, :, :] ** 2), axis=-1))
        hfc = (h @ lp['wfc']).reshape(N, lp['K'], lp['O'])
        msg = hfc[src] * w[:, :, None]                                # (E, K, O)
        agg = jnp.zeros((N, lp['K'], lp['O']), jnp.float32).at[dst].add(msg)
        hh = agg.sum(axis=1)
        hh = hh * lp['bn_scale'] + lp['bn_shift']
        hh = jnp.maximum(hh, 0.0)
        h = h_in + hh if lp['residual'] else hh
    p = params['mlp']
    y = jnp.maximum(h @ p['w1'] + p['b1'], 0.0)
    y = jnp.maximum(y @ p['w2'] + p['b2'], 0.0)
    return y @ p['w3'] + p['b3']


# ---------------------------------- main -------------------------------------

if __name__ == "__main__":
    net_params = dict(
        in_dim=16, hidden_dim=32, out_dim=32, kernel=3, pseudo_dim_MoNet=2,
        n_classes=3, dropout=0.0, L=2, readout='mean', batch_norm=True,
        residual=True, device=None, pos_enc=False, pos_enc_type='None',
    )

    key = jax.random.PRNGKey(0)
    kparam_key, kx, ks, kd = jax.random.split(key, 4)

    params = init_monet_params(net_params, kparam_key)
    kparams = build_kernel_params(params, net_params)

    N, E = 32, 80     # E not a multiple of the edge tile -> exercises mask path
    x = jax.random.normal(kx, (N, net_params['in_dim']), jnp.float32)
    src = jax.random.randint(ks, (E,), 0, N)
    dst = jax.random.randint(kd, (E,), 0, N)

    fwd = jax.jit(functools.partial(monet_forward_pallas, kparams, tile_e=32))
    out = jax.block_until_ready(fwd(src, dst, x))

    ref = monet_forward_reference(params, src, dst, x)
    err = float(jnp.max(jnp.abs(out - ref)))

    assert out.shape == (N, net_params['n_classes'])
    assert bool(jnp.all(jnp.isfinite(out)))
    assert err < 1e-2, f"mismatch vs plain-JAX reference: {err}"
    print("KERNEL_OK")
</pallas_src>

<mosaic_0001>
module attributes {stable_mosaic.version = 11 : i64} {
  func.func private @main(%arg0: i32) attributes {dimension_semantics = [#tpu.dimension_semantics<core_parallel>], iteration_bounds = array<i64: 2>, tpu.core_type = #tpu.core_type<sc_scalar_subcore>, window_params = []} {
    return
  }
}

module attributes {stable_mosaic.version = 11 : i64} {
  func.func private @main(%arg0: i32) attributes {dimension_semantics = [#tpu.dimension_semantics<core_parallel>], iteration_bounds = array<i64: 2>, tpu.core_type = #tpu.core_type<sc_scalar_subcore>, window_params = []} {
    return
  }
}

module attributes {stable_mosaic.version = 11 : i64} {
  func.func @kernel(%arg0: i32, %arg1: memref<96xi32, #tpu.memory_space<smem>>, %arg2: memref<96xi32, #tpu.memory_space<smem>>, %arg3: memref<32x128xf32, #tpu.memory_space<vmem>>, %arg4: memref<128x128xf32, #tpu.memory_space<vmem>>, %arg5: memref<1x128xf32, #tpu.memory_space<vmem>>, %arg6: memref<128x384xf32, #tpu.memory_space<vmem>>, %arg7: memref<32x1xf32, #tpu.memory_space<vmem>>, %arg8: memref<32x1xf32, #tpu.memory_space<vmem>>, %arg9: memref<2x2xf32, #tpu.memory_space<smem>>, %arg10: memref<1x2xf32, #tpu.memory_space<smem>>, %arg11: memref<3x2xf32, #tpu.memory_space<smem>>, %arg12: memref<3x2xf32, #tpu.memory_space<smem>>, %arg13: memref<1x128xf32, #tpu.memory_space<vmem>>, %arg14: memref<1x128xf32, #tpu.memory_space<vmem>>, %arg15: memref<32x128xf32, #tpu.memory_space<vmem>>, %arg16: memref<32x128xf32, #tpu.memory_space<vmem>>, %arg17: memref<32x384xf32, #tpu.memory_space<vmem>>, %arg18: memref<32x384xf32, #tpu.memory_space<vmem>>, %arg19: memref<32x128xf32, #tpu.memory_space<vmem>>, %arg20: memref<32x128xf32, #tpu.memory_space<vmem>>) attributes {dimension_semantics = [#tpu.dimension_semantics<arbitrary>], iteration_bounds = array<i64: 3>, scalar_prefetch = 2 : i64, scratch_operands = 5 : i64, tpu.core_type = #tpu.core_type<tc>, window_params = [{pipeline_mode = #tpu.pipeline_mode<synchronous>, transform_indices = @transform_0, window_bounds = array<i64: 32, 128>}, {pipeline_mode = #tpu.pipeline_mode<synchronous>, transform_indices = @transform_1, window_bounds = array<i64: 128, 128>}, {pipeline_mode = #tpu.pipeline_mode<synchronous>, transform_indices = @transform_2, window_bounds = array<i64: 1, 128>}, {pipeline_mode = #tpu.pipeline_mode<synchronous>, transform_indices = @transform_3, window_bounds = array<i64: 128, 384>}, {transform_indices = @transform_4, window_bounds = array<i64: 32, 1>}, {transform_indices = @transform_5, window_bounds = array<i64: 32, 1>}, {transform_indices = @transform_6, window_bounds = array<i64: 2, 2>}, {transform_indices = @transform_7, window_bounds = array<i64: 1, 2>}, {transform_indices = @transform_8, window_bounds = array<i64: 3, 2>}, {transform_indices = @transform_9, window_bounds = array<i64: 3, 2>}, {pipeline_mode = #tpu.pipeline_mode<synchronous>, transform_indices = @transform_10, window_bounds = array<i64: 1, 128>}, {pipeline_mode = #tpu.pipeline_mode<synchronous>, transform_indices = @transform_11, window_bounds = array<i64: 1, 128>}, {pipeline_mode = #tpu.pipeline_mode<synchronous>, transform_indices = @transform_12, window_bounds = array<i64: 32, 128>}]} {
    %c32_i32 = arith.constant 32 : i32
    %0 = arith.muli %arg0, %c32_i32 : i32
    %c0_i32 = arith.constant 0 : i32
    %1 = arith.cmpi eq, %arg0, %c0_i32 : i32
    %2 = arith.extui %1 : i1 to i32
    %c0_i32_0 = arith.constant 0 : i32
    %3 = arith.cmpi ne, %2, %c0_i32_0 : i32
    scf.if %3 {
      %c0_71 = arith.constant 0 : index
      %c0_72 = arith.constant 0 : index
      %128 = vector.load %arg3[%c0_71, %c0_72] : memref<32x128xf32, #tpu.memory_space<vmem>>, vector<32x128xf32>
      %c0_73 = arith.constant 0 : index
      %c0_74 = arith.constant 0 : index
      %129 = vector.load %arg4[%c0_73, %c0_74] : memref<128x128xf32, #tpu.memory_space<vmem>>, vector<128x128xf32>
      %cst_75 = arith.constant dense<0.000000e+00> : vector<32x128xf32>
      %130 = tpu.matmul %128, %129, %cst_75 {dimension_numbers = #tpu.dot_dimension_numbers<[1], [0], [0], [1], [0, 0, 1, 1], [], []>} : vector<32x128xf32>, vector<128x128xf32>, vector<32x128xf32> -> vector<32x128xf32>
      %c0_76 = arith.constant 0 : index
      %c0_77 = arith.constant 0 : index
      %131 = vector.load %arg5[%c0_76, %c0_77] : memref<1x128xf32, #tpu.memory_space<vmem>>, vector<1x128xf32>
      %132 = vector.broadcast %131 : vector<1x128xf32> to vector<32x128xf32>
      %133 = arith.addf %130, %132 : vector<32x128xf32>
      %c0_78 = arith.constant 0 : index
      %c0_79 = arith.constant 0 : index
      %134 = vector.load %arg16[%c0_78, %c0_79] : memref<32x128xf32, #tpu.memory_space<vmem>>, vector<32x128xf32>
      tpu.vector_store %arg16[%c0_78, %c0_79], %133 {strides = array<i32>} : memref<32x128xf32, #tpu.memory_space<vmem>>, vector<32x128xf32>,
      %c0_80 = arith.constant 0 : index
      %c0_81 = arith.constant 0 : index
      %135 = vector.load %arg6[%c0_80, %c0_81] : memref<128x384xf32, #tpu.memory_space<vmem>>, vector<128x384xf32>
      %cst_82 = arith.constant dense<0.000000e+00> : vector<32x384xf32>
      %136 = tpu.matmul %133, %135, %cst_82 {dimension_numbers = #tpu.dot_dimension_numbers<[1], [0], [0], [1], [0, 0, 1, 1], [], []>} : vector<32x128xf32>, vector<128x384xf32>, vector<32x384xf32> -> vector<32x384xf32>
      %c0_83 = arith.constant 0 : index
      %c0_84 = arith.constant 0 : index
      %137 = vector.load %arg17[%c0_83, %c0_84] : memref<32x384xf32, #tpu.memory_space<vmem>>, vector<32x384xf32>
      tpu.vector_store %arg17[%c0_83, %c0_84], %136 {strides = array<i32>} : memref<32x384xf32, #tpu.memory_space<vmem>>, vector<32x384xf32>,
      %cst_85 = arith.constant 0.000000e+00 : f32
      %138 = vector.broadcast %cst_85 : f32 to vector<32x128xf32>
      %c0_86 = arith.constant 0 : index
      %c0_87 = arith.constant 0 : index
      %139 = vector.load %arg20[%c0_86, %c0_87] : memref<32x128xf32, #tpu.memory_space<vmem>>, vector<32x128xf32>
      tpu.vector_store %arg20[%c0_86, %c0_87], %138 {strides = array<i32>} : memref<32x128xf32, #tpu.memory_space<vmem>>, vector<32x128xf32>,
    } else {
    }
    %c0_i32_1 = arith.constant 0 : i32
    %c32_i32_2 = arith.constant 32 : i32
    %4 = arith.addi %c0_i32_1, %c32_i32_2 : i32
    %c1_i32 = arith.constant 1 : i32
    scf.for %arg21 = %c0_i32_1 to %4 step %c1_i32  : i32 {
      %128 = arith.addi %0, %arg21 : i32
      %129 = arith.index_cast %128 : i32 to index
      %130 = memref.load %arg1[%129] : memref<96xi32, #tpu.memory_space<smem>>
      %131 = arith.index_cast %130 : i32 to index
      %c0_71 = arith.constant 0 : index
      %132 = vector.load %arg17[%131, %c0_71] : memref<32x384xf32, #tpu.memory_space<vmem>>, vector<1x384xf32>
      %133 = arith.index_cast %arg21 : i32 to index
      %c0_72 = arith.constant 0 : index
      %134 = vector.load %arg18[%133, %c0_72] : memref<32x384xf32, #tpu.memory_space<vmem>>, vector<1x384xf32>
      tpu.vector_store %arg18[%133, %c0_72], %132 {strides = array<i32>} : memref<32x384xf32, #tpu.memory_space<vmem>>, vector<1x384xf32>,
    }
    %c32_i32_3 = arith.constant 32 : i32
    %c0 = arith.constant 0 : index
    %c0_4 = arith.constant 0 : index
    %5 = vector.load %arg7[%c0, %c0_4] : memref<32x1xf32, #tpu.memory_space<vmem>>, vector<32x1xf32>
    %c0_5 = arith.constant 0 : index
    %c0_6 = arith.constant 0 : index
    %6 = vector.load %arg8[%c0_5, %c0_6] : memref<32x1xf32, #tpu.memory_space<vmem>>, vector<32x1xf32>
    %c0_7 = arith.constant 0 : index
    %c0_8 = arith.constant 0 : index
    %7 = memref.load %arg9[%c0_7, %c0_8] : memref<2x2xf32, #tpu.memory_space<smem>>
    %8 = vector.broadcast %7 : f32 to vector<32x1xf32>
    %9 = arith.mulf %5, %8 : vector<32x1xf32>
    %c1 = arith.constant 1 : index
    %c0_9 = arith.constant 0 : index
    %10 = memref.load %arg9[%c1, %c0_9] : memref<2x2xf32, #tpu.memory_space<smem>>
    %11 = vector.broadcast %10 : f32 to vector<32x1xf32>
    %12 = arith.mulf %6, %11 : vector<32x1xf32>
    %13 = arith.addf %9, %12 : vector<32x1xf32>
    %c0_10 = arith.constant 0 : index
    %c0_11 = arith.constant 0 : index
    %14 = memref.load %arg10[%c0_10, %c0_11] : memref<1x2xf32, #tpu.memory_space<smem>>
    %15 = vector.broadcast %14 : f32 to vector<32x1xf32>
    %16 = arith.addf %13, %15 : vector<32x1xf32>
    %17 = math.tanh %16 : vector<32x1xf32>
    %c0_12 = arith.constant 0 : index
    %c1_13 = arith.constant 1 : index
    %18 = memref.load %arg9[%c0_12, %c1_13] : memref<2x2xf32, #tpu.memory_space<smem>>
    %19 = vector.broadcast %18 : f32 to vector<32x1xf32>
    %20 = arith.mulf %5, %19 : vector<32x1xf32>
    %c1_14 = arith.constant 1 : index
    %c1_15 = arith.constant 1 : index
    %21 = memref.load %arg9[%c1_14, %c1_15] : memref<2x2xf32, #tpu.memory_space<smem>>
    %22 = vector.broadcast %21 : f32 to vector<32x1xf32>
    %23 = arith.mulf %6, %22 : vector<32x1xf32>
    %24 = arith.addf %20, %23 : vector<32x1xf32>
    %c0_16 = arith.constant 0 : index
    %c1_17 = arith.constant 1 : index
    %25 = memref.load %arg10[%c0_16, %c1_17] : memref<1x2xf32, #tpu.memory_space<smem>>
    %26 = vector.broadcast %25 : f32 to vector<32x1xf32>
    %27 = arith.addf %24, %26 : vector<32x1xf32>
    %28 = math.tanh %27 : vector<32x1xf32>
    %cst = arith.constant 0.000000e+00 : f32
    %29 = vector.broadcast %cst : f32 to vector<32x128xf32>
    %cst_18 = arith.constant 0.000000e+00 : f32
    %30 = vector.broadcast %cst_18 : f32 to vector<32x1xf32>
    %c0_19 = arith.constant 0 : index
    %c0_20 = arith.constant 0 : index
    %31 = memref.load %arg11[%c0_19, %c0_20] : memref<3x2xf32, #tpu.memory_space<smem>>
    %32 = vector.broadcast %31 : f32 to vector<32x1xf32>
    %33 = arith.subf %17, %32 : vector<32x1xf32>
    %34 = arith.mulf %33, %33 : vector<32x1xf32>
    %c0_21 = arith.constant 0 : index
    %c0_22 = arith.constant 0 : index
    %35 = memref.load %arg12[%c0_21, %c0_22] : memref<3x2xf32, #tpu.memory_space<smem>>
    %c0_23 = arith.constant 0 : index
    %c0_24 = arith.constant 0 : index
    %36 = memref.load %arg12[%c0_23, %c0_24] : memref<3x2xf32, #tpu.memory_space<smem>>
    %37 = arith.mulf %35, %36 : f32
    %38 = vector.broadcast %37 : f32 to vector<32x1xf32>
    %39 = arith.mulf %34, %38 : vector<32x1xf32>
    %40 = arith.addf %30, %39 : vector<32x1xf32>
    %c0_25 = arith.constant 0 : index
    %c1_26 = arith.constant 1 : index
    %41 = memref.load %arg11[%c0_25, %c1_26] : memref<3x2xf32, #tpu.memory_space<smem>>
    %42 = vector.broadcast %41 : f32 to vector<32x1xf32>
    %43 = arith.subf %28, %42 : vector<32x1xf32>
    %44 = arith.mulf %43, %43 : vector<32x1xf32>
    %c0_27 = arith.constant 0 : index
    %c1_28 = arith.constant 1 : index
    %45 = memref.load %arg12[%c0_27, %c1_28] : memref<3x2xf32, #tpu.memory_space<smem>>
    %c0_29 = arith.constant 0 : index
    %c1_30 = arith.constant 1 : index
    %46 = memref.load %arg12[%c0_29, %c1_30] : memref<3x2xf32, #tpu.memory_space<smem>>
    %47 = arith.mulf %45, %46 : f32
    %48 = vector.broadcast %47 : f32 to vector<32x1xf32>
    %49 = arith.mulf %44, %48 : vector<32x1xf32>
    %50 = arith.addf %40, %49 : vector<32x1xf32>
    %cst_31 = arith.constant -5.000000e-01 : f32
    %51 = vector.broadcast %cst_31 : f32 to vector<32x1xf32>
    %52 = arith.mulf %51, %50 : vector<32x1xf32>
    %53 = math.exp %52 : vector<32x1xf32>
    %c0_32 = arith.constant 0 : index
    %c0_33 = arith.constant 0 : index
    %54 = vector.load %arg18[%c0_32, %c0_33] : memref<32x384xf32, #tpu.memory_space<vmem>>, vector<32x128xf32>
    %55 = vector.broadcast %53 : vector<32x1xf32> to vector<32x128xf32>
    %56 = arith.mulf %55, %54 : vector<32x128xf32>
    %57 = arith.addf %29, %56 : vector<32x128xf32>
    %cst_34 = arith.constant 0.000000e+00 : f32
    %58 = vector.broadcast %cst_34 : f32 to vector<32x1xf32>
    %c1_35 = arith.constant 1 : index
    %c0_36 = arith.constant 0 : index
    %59 = memref.load %arg11[%c1_35, %c0_36] : memref<3x2xf32, #tpu.memory_space<smem>>
    %60 = vector.broadcast %59 : f32 to vector<32x1xf32>
    %61 = arith.subf %17, %60 : vector<32x1xf32>
    %62 = arith.mulf %61, %61 : vector<32x1xf32>
    %c1_37 = arith.constant 1 : index
    %c0_38 = arith.constant 0 : index
    %63 = memref.load %arg12[%c1_37, %c0_38] : memref<3x2xf32, #tpu.memory_space<smem>>
    %c1_39 = arith.constant 1 : index
    %c0_40 = arith.constant 0 : index
    %64 = memref.load %arg12[%c1_39, %c0_40] : memref<3x2xf32, #tpu.memory_space<smem>>
    %65 = arith.mulf %63, %64 : f32
    %66 = vector.broadcast %65 : f32 to vector<32x1xf32>
    %67 = arith.mulf %62, %66 : vector<32x1xf32>
    %68 = arith.addf %58, %67 : vector<32x1xf32>
    %c1_41 = arith.constant 1 : index
    %c1_42 = arith.constant 1 : index
    %69 = memref.load %arg11[%c1_41, %c1_42] : memref<3x2xf32, #tpu.memory_space<smem>>
    %70 = vector.broadcast %69 : f32 to vector<32x1xf32>
    %71 = arith.subf %28, %70 : vector<32x1xf32>
    %72 = arith.mulf %71, %71 : vector<32x1xf32>
    %c1_43 = arith.constant 1 : index
    %c1_44 = arith.constant 1 : index
    %73 = memref.load %arg12[%c1_43, %c1_44] : memref<3x2xf32, #tpu.memory_space<smem>>
    %c1_45 = arith.constant 1 : index
    %c1_46 = arith.constant 1 : index
    %74 = memref.load %arg12[%c1_45, %c1_46] : memref<3x2xf32, #tpu.memory_space<smem>>
    %75 = arith.mulf %73, %74 : f32
    %76 = vector.broadcast %75 : f32 to vector<32x1xf32>
    %77 = arith.mulf %72, %76 : vector<32x1xf32>
    %78 = arith.addf %68, %77 : vector<32x1xf32>
    %cst_47 = arith.constant -5.000000e-01 : f32
    %79 = vector.broadcast %cst_47 : f32 to vector<32x1xf32>
    %80 = arith.mulf %79, %78 : vector<32x1xf32>
    %81 = math.exp %80 : vector<32x1xf32>
    %c0_48 = arith.constant 0 : index
    %c128 = arith.constant 128 : index
    %82 = vector.load %arg18[%c0_48, %c128] : memref<32x384xf32, #tpu.memory_space<vmem>>, vector<32x128xf32>
    %83 = vector.broadcast %81 : vector<32x1xf32> to vector<32x128xf32>
    %84 = arith.mulf %83, %82 : vector<32x128xf32>
    %85 = arith.addf %57, %84 : vector<32x128xf32>
    %cst_49 = arith.constant 0.000000e+00 : f32
    %86 = vector.broadcast %cst_49 : f32 to vector<32x1xf32>
    %c2 = arith.constant 2 : index
    %c0_50 = arith.constant 0 : index
    %87 = memref.load %arg11[%c2, %c0_50] : memref<3x2xf32, #tpu.memory_space<smem>>
    %88 = vector.broadcast %87 : f32 to vector<32x1xf32>
    %89 = arith.subf %17, %88 : vector<32x1xf32>
    %90 = arith.mulf %89, %89 : vector<32x1xf32>
    %c2_51 = arith.constant 2 : index
    %c0_52 = arith.constant 0 : index
    %91 = memref.load %arg12[%c2_51, %c0_52] : memref<3x2xf32, #tpu.memory_space<smem>>
    %c2_53 = arith.constant 2 : index
    %c0_54 = arith.constant 0 : index
    %92 = memref.load %arg12[%c2_53, %c0_54] : memref<3x2xf32, #tpu.memory_space<smem>>
    %93 = arith.mulf %91, %92 : f32
    %94 = vector.broadcast %93 : f32 to vector<32x1xf32>
    %95 = arith.mulf %90, %94 : vector<32x1xf32>
    %96 = arith.addf %86, %95 : vector<32x1xf32>
    %c2_55 = arith.constant 2 : index
    %c1_56 = arith.constant 1 : index
    %97 = memref.load %arg11[%c2_55, %c1_56] : memref<3x2xf32, #tpu.memory_space<smem>>
    %98 = vector.broadcast %97 : f32 to vector<32x1xf32>
    %99 = arith.subf %28, %98 : vector<32x1xf32>
    %100 = arith.mulf %99, %99 : vector<32x1xf32>
    %c2_57 = arith.constant 2 : index
    %c1_58 = arith.constant 1 : index
    %101 = memref.load %arg12[%c2_57, %c1_58] : memref<3x2xf32, #tpu.memory_space<smem>>
    %c2_59 = arith.constant 2 : index
    %c1_60 = arith.constant 1 : index
    %102 = memref.load %arg12[%c2_59, %c1_60] : memref<3x2xf32, #tpu.memory_space<smem>>
    %103 = arith.mulf %101, %102 : f32
    %104 = vector.broadcast %103 : f32 to vector<32x1xf32>
    %105 = arith.mulf %100, %104 : vector<32x1xf32>
    %106 = arith.addf %96, %105 : vector<32x1xf32>
    %cst_61 = arith.constant -5.000000e-01 : f32
    %107 = vector.broadcast %cst_61 : f32 to vector<32x1xf32>
    %108 = arith.mulf %107, %106 : vector<32x1xf32>
    %109 = math.exp %108 : vector<32x1xf32>
    %c0_62 = arith.constant 0 : index
    %c256 = arith.constant 256 : index
    %110 = vector.load %arg18[%c0_62, %c256] : memref<32x384xf32, #tpu.memory_space<vmem>>, vector<32x128xf32>
    %111 = vector.broadcast %109 : vector<32x1xf32> to vector<32x128xf32>
    %112 = arith.mulf %111, %110 : vector<32x128xf32>
    %113 = arith.addf %85, %112 : vector<32x128xf32>
    %114 = tpu.iota {dimensions = array<i32: 0>} : vector<32x1xi32>
    %115 = vector.broadcast %0 : i32 to vector<32x1xi32>
    %116 = arith.addi %114, %115 : vector<32x1xi32>
    %c80_i32 = arith.constant 80 : i32
    %117 = vector.broadcast %c80_i32 : i32 to vector<32x1xi32>
    %118 = arith.cmpi slt, %116, %117 : vector<32x1xi32>
    %cst_63 = arith.constant 0.000000e+00 : f32
    %119 = vector.shape_cast %118 : vector<32x1xi1> to vector<32x1xi1>
    %120 = vector.broadcast %119 : vector<32x1xi1> to vector<32x128xi1>
    %121 = vector.broadcast %cst_63 : f32 to vector<32x128xf32>
    %122 = arith.select %120, %113, %121 : vector<32x128xi1>, vector<32x128xf32>
    %c0_64 = arith.constant 0 : index
    %c0_65 = arith.constant 0 : index
    %123 = vector.load %arg19[%c0_64, %c0_65] : memref<32x128xf32, #tpu.memory_space<vmem>>, vector<32x128xf32>
    tpu.vector_store %arg19[%c0_64, %c0_65], %122 {strides = array<i32>} : memref<32x128xf32, #tpu.memory_space<vmem>>, vector<32x128xf32>,
    %c0_i32_66 = arith.constant 0 : i32
    %c32_i32_67 = arith.constant 32 : i32
    %124 = arith.addi %c0_i32_66, %c32_i32_67 : i32
    %c1_i32_68 = arith.constant 1 : i32
    scf.for %arg21 = %c0_i32_66 to %124 step %c1_i32_68  : i32 {
      %128 = arith.addi %0, %arg21 : i32
      %129 = arith.index_cast %128 : i32 to index
      %130 = memref.load %arg2[%129] : memref<96xi32, #tpu.memory_space<smem>>
      %131 = arith.index_cast %130 : i32 to index
      %c0_71 = arith.constant 0 : index
      %132 = vector.load %arg20[%131, %c0_71] : memref<32x128xf32, #tpu.memory_space<vmem>>, vector<1x128xf32>
      %133 = arith.index_cast %arg21 : i32 to index
      %c0_72 = arith.constant 0 : index
      %134 = vector.load %arg19[%133, %c0_72] : memref<32x128xf32, #tpu.memory_space<vmem>>, vector<1x128xf32>
      %135 = arith.addf %132, %134 : vector<1x128xf32>
      %136 = arith.index_cast %130 : i32 to index
      %c0_73 = arith.constant 0 : index
      %137 = vector.load %arg20[%136, %c0_73] : memref<32x128xf32, #tpu.memory_space<vmem>>, vector<1x128xf32>
      tpu.vector_store %arg20[%136, %c0_73], %135 {strides = array<i32>} : memref<32x128xf32, #tpu.memory_space<vmem>>, vector<1x128xf32>,
    }
    %c32_i32_69 = arith.constant 32 : i32
    %c2_i32 = arith.constant 2 : i32
    %125 = arith.cmpi eq, %arg0, %c2_i32 : i32
    %126 = arith.extui %125 : i1 to i32
    %c0_i32_70 = arith.constant 0 : i32
    %127 = arith.cmpi ne, %126, %c0_i32_70 : i32
    scf.if %127 {
      %c0_71 = arith.constant 0 : index
      %c0_72 = arith.constant 0 : index
      %128 = vector.load %arg20[%c0_71, %c0_72] : memref<32x128xf32, #tpu.memory_space<vmem>>, vector<32x128xf32>
      %c0_73 = arith.constant 0 : index
      %c0_74 = arith.constant 0 : index
      %129 = vector.load %arg13[%c0_73, %c0_74] : memref<1x128xf32, #tpu.memory_space<vmem>>, vector<1x128xf32>
      %130 = vector.broadcast %129 : vector<1x128xf32> to vector<32x128xf32>
      %131 = arith.mulf %128, %130 : vector<32x128xf32>
      %c0_75 = arith.constant 0 : index
      %c0_76 = arith.constant 0 : index
      %132 = vector.load %arg14[%c0_75, %c0_76] : memref<1x128xf32, #tpu.memory_space<vmem>>, vector<1x128xf32>
      %133 = vector.broadcast %132 : vector<1x128xf32> to vector<32x128xf32>
      %134 = arith.addf %131, %133 : vector<32x128xf32>
      %cst_77 = arith.constant 0.000000e+00 : f32
      %135 = vector.broadcast %cst_77 : f32 to vector<32x128xf32>
      %136 = arith.maximumf %134, %135 : vector<32x128xf32>
      %c0_78 = arith.constant 0 : index
      %c0_79 = arith.constant 0 : index
      %137 = vector.load %arg16[%c0_78, %c0_79] : memref<32x128xf32, #tpu.memory_space<vmem>>, vector<32x128xf32>
      %138 = arith.addf %137, %136 : vector<32x128xf32>
      %c0_80 = arith.constant 0 : index
      %c0_81 = arith.constant 0 : index
      %139 = vector.load %arg15[%c0_80, %c0_81] : memref<32x128xf32, #tpu.memory_space<vmem>>, vector<32x128xf32>
      tpu.vector_store %arg15[%c0_80, %c0_81], %138 {strides = array<i32>} : memref<32x128xf32, #tpu.memory_space<vmem>>, vector<32x128xf32>,
    } else {
    }
    return
  }
  func.func @transform_0(%arg0: i32, %arg1: memref<96xi32, #tpu.memory_space<smem>>, %arg2: memref<96xi32, #tpu.memory_space<smem>>) -> (i32, i32) {
    %c0_i32 = arith.constant 0 : i32
    %c0_i32_0 = arith.constant 0 : i32
    %c0_i32_1 = arith.constant 0 : i32
    return %c0_i32, %c0_i32_0 : i32, i32
  }
  func.func @transform_1(%arg0: i32, %arg1: memref<96xi32, #tpu.memory_space<smem>>, %arg2: memref<96xi32, #tpu.memory_space<smem>>) -> (i32, i32) {
    %c0_i32 = arith.constant 0 : i32
    %c0_i32_0 = arith.constant 0 : i32
    %c0_i32_1 = arith.constant 0 : i32
    return %c0_i32, %c0_i32_0 : i32, i32
  }
  func.func @transform_2(%arg0: i32, %arg1: memref<96xi32, #tpu.memory_space<smem>>, %arg2: memref<96xi32, #tpu.memory_space<smem>>) -> (i32, i32) {
    %c0_i32 = arith.constant 0 : i32
    %c0_i32_0 = arith.constant 0 : i32
    %c0_i32_1 = arith.constant 0 : i32
    return %c0_i32, %c0_i32_0 : i32, i32
  }
  func.func @transform_3(%arg0: i32, %arg1: memref<96xi32, #tpu.memory_space<smem>>, %arg2: memref<96xi32, #tpu.memory_space<smem>>) -> (i32, i32) {
    %c0_i32 = arith.constant 0 : i32
    %c0_i32_0 = arith.constant 0 : i32
    %c0_i32_1 = arith.constant 0 : i32
    return %c0_i32, %c0_i32_0 : i32, i32
  }
  func.func @transform_4(%arg0: i32, %arg1: memref<96xi32, #tpu.memory_space<smem>>, %arg2: memref<96xi32, #tpu.memory_space<smem>>) -> (i32, i32) {
    %c0_i32 = arith.constant 0 : i32
    %c0_i32_0 = arith.constant 0 : i32
    return %arg0, %c0_i32 : i32, i32
  }
  func.func @transform_5(%arg0: i32, %arg1: memref<96xi32, #tpu.memory_space<smem>>, %arg2: memref<96xi32, #tpu.memory_space<smem>>) -> (i32, i32) {
    %c0_i32 = arith.constant 0 : i32
    %c0_i32_0 = arith.constant 0 : i32
    return %arg0, %c0_i32 : i32, i32
  }
  func.func @transform_6(%arg0: i32, %arg1: memref<96xi32, #tpu.memory_space<smem>>, %arg2: memref<96xi32, #tpu.memory_space<smem>>) -> (i32, i32) {
    %c0_i32 = arith.constant 0 : i32
    %c0_i32_0 = arith.constant 0 : i32
    %c0_i32_1 = arith.constant 0 : i32
    return %c0_i32, %c0_i32_0 : i32, i32
  }
  func.func @transform_7(%arg0: i32, %arg1: memref<96xi32, #tpu.memory_space<smem>>, %arg2: memref<96xi32, #tpu.memory_space<smem>>) -> (i32, i32) {
    %c0_i32 = arith.constant 0 : i32
    %c0_i32_0 = arith.constant 0 : i32
    %c0_i32_1 = arith.constant 0 : i32
    return %c0_i32, %c0_i32_0 : i32, i32
  }
  func.func @transform_8(%arg0: i32, %arg1: memref<96xi32, #tpu.memory_space<smem>>, %arg2: memref<96xi32, #tpu.memory_space<smem>>) -> (i32, i32) {
    %c0_i32 = arith.constant 0 : i32
    %c0_i32_0 = arith.constant 0 : i32
    %c0_i32_1 = arith.constant 0 : i32
    return %c0_i32, %c0_i32_0 : i32, i32
  }
  func.func @transform_9(%arg0: i32, %arg1: memref<96xi32, #tpu.memory_space<smem>>, %arg2: memref<96xi32, #tpu.memory_space<smem>>) -> (i32, i32) {
    %c0_i32 = arith.constant 0 : i32
    %c0_i32_0 = arith.constant 0 : i32
    %c0_i32_1 = arith.constant 0 : i32
    return %c0_i32, %c0_i32_0 : i32, i32
  }
  func.func @transform_10(%arg0: i32, %arg1: memref<96xi32, #tpu.memory_space<smem>>, %arg2: memref<96xi32, #tpu.memory_space<smem>>) -> (i32, i32) {
    %c0_i32 = arith.constant 0 : i32
    %c0_i32_0 = arith.constant 0 : i32
    %c0_i32_1 = arith.constant 0 : i32
    return %c0_i32, %c0_i32_0 : i32, i32
  }
  func.func @transform_11(%arg0: i32, %arg1: memref<96xi32, #tpu.memory_space<smem>>, %arg2: memref<96xi32, #tpu.memory_space<smem>>) -> (i32, i32) {
    %c0_i32 = arith.constant 0 : i32
    %c0_i32_0 = arith.constant 0 : i32
    %c0_i32_1 = arith.constant 0 : i32
    return %c0_i32, %c0_i32_0 : i32, i32
  }
  func.func @transform_12(%arg0: i32, %arg1: memref<96xi32, #tpu.memory_space<smem>>, %arg2: memref<96xi32, #tpu.memory_space<smem>>) -> (i32, i32) {
    %c0_i32 = arith.constant 0 : i32
    %c0_i32_0 = arith.constant 0 : i32
    %c0_i32_1 = arith.constant 0 : i32
    return %c0_i32, %c0_i32_0 : i32, i32
  }
}

module attributes {stable_mosaic.version = 11 : i64} {
  func.func @kernel(%arg0: i32, %arg1: memref<96xi32, #tpu.memory_space<smem>>, %arg2: memref<96xi32, #tpu.memory_space<smem>>, %arg3: memref<32x128xf32, #tpu.memory_space<vmem>>, %arg4: memref<128x128xf32, #tpu.memory_space<vmem>>, %arg5: memref<1x128xf32, #tpu.memory_space<vmem>>, %arg6: memref<128x384xf32, #tpu.memory_space<vmem>>, %arg7: memref<32x1xf32, #tpu.memory_space<vmem>>, %arg8: memref<32x1xf32, #tpu.memory_space<vmem>>, %arg9: memref<2x2xf32, #tpu.memory_space<smem>>, %arg10: memref<1x2xf32, #tpu.memory_space<smem>>, %arg11: memref<3x2xf32, #tpu.memory_space<smem>>, %arg12: memref<3x2xf32, #tpu.memory_space<smem>>, %arg13: memref<1x128xf32, #tpu.memory_space<vmem>>, %arg14: memref<1x128xf32, #tpu.memory_space<vmem>>, %arg15: memref<128x128xf32, #tpu.memory_space<vmem>>, %arg16: memref<1x128xf32, #tpu.memory_space<vmem>>, %arg17: memref<128x128xf32, #tpu.memory_space<vmem>>, %arg18: memref<1x128xf32, #tpu.memory_space<vmem>>, %arg19: memref<128x128xf32, #tpu.memory_space<vmem>>, %arg20: memref<1x128xf32, #tpu.memory_space<vmem>>, %arg21: memref<32x128xf32, #tpu.memory_space<vmem>>, %arg22: memref<32x128xf32, #tpu.memory_space<vmem>>, %arg23: memref<32x384xf32, #tpu.memory_space<vmem>>, %arg24: memref<32x384xf32, #tpu.memory_space<vmem>>, %arg25: memref<32x128xf32, #tpu.memory_space<vmem>>, %arg26: memref<32x128xf32, #tpu.memory_space<vmem>>) attributes {dimension_semantics = [#tpu.dimension_semantics<arbitrary>], iteration_bounds = array<i64: 3>, scalar_prefetch = 2 : i64, scratch_operands = 5 : i64, tpu.core_type = #tpu.core_type<tc>, window_params = [{pipeline_mode = #tpu.pipeline_mode<synchronous>, transform_indices = @transform_0, window_bounds = array<i64: 32, 128>}, {pipeline_mode = #tpu.pipeline_mode<synchronous>, transform_indices = @transform_1, window_bounds = array<i64: 128, 128>}, {pipeline_mode = #tpu.pipeline_mode<synchronous>, transform_indices = @transform_2, window_bounds = array<i64: 1, 128>}, {pipeline_mode = #tpu.pipeline_mode<synchronous>, transform_indices = @transform_3, window_bounds = array<i64: 128, 384>}, {transform_indices = @transform_4, window_bounds = array<i64: 32, 1>}, {transform_indices = @transform_5, window_bounds = array<i64: 32, 1>}, {transform_indices = @transform_6, window_bounds = array<i64: 2, 2>}, {transform_indices = @transform_7, window_bounds = array<i64: 1, 2>}, {transform_indices = @transform_8, window_bounds = array<i64: 3, 2>}, {transform_indices = @transform_9, window_bounds = array<i64: 3, 2>}, {pipeline_mode = #tpu.pipeline_mode<synchronous>, transform_indices = @transform_10, window_bounds = array<i64: 1, 128>}, {pipeline_mode = #tpu.pipeline_mode<synchronous>, transform_indices = @transform_11, window_bounds = array<i64: 1, 128>}, {pipeline_mode = #tpu.pipeline_mode<synchronous>, transform_indices = @transform_12, window_bounds = array<i64: 128, 128>}, {pipeline_mode = #tpu.pipeline_mode<synchronous>, transform_indices = @transform_13, window_bounds = array<i64: 1, 128>}, {pipeline_mode = #tpu.pipeline_mode<synchronous>, transform_indices = @transform_14, window_bounds = array<i64: 128, 128>}, {pipeline_mode = #tpu.pipeline_mode<synchronous>, transform_indices = @transform_15, window_bounds = array<i64: 1, 128>}, {pipeline_mode = #tpu.pipeline_mode<synchronous>, transform_indices = @transform_16, window_bounds = array<i64: 128, 128>}, {pipeline_mode = #tpu.pipeline_mode<synchronous>, transform_indices = @transform_17, window_bounds = array<i64: 1, 128>}, {pipeline_mode = #tpu.pipeline_mode<synchronous>, transform_indices = @transform_18, window_bounds = array<i64: 32, 128>}]} {
    %c32_i32 = arith.constant 32 : i32
    %0 = arith.muli %arg0, %c32_i32 : i32
    %c0_i32 = arith.constant 0 : i32
    %1 = arith.cmpi eq, %arg0, %c0_i32 : i32
    %2 = arith.extui %1 : i1 to i32
    %c0_i32_0 = arith.constant 0 : i32
    %3 = arith.cmpi ne, %2, %c0_i32_0 : i32
    scf.if %3 {
      %c0_71 = arith.constant 0 : index
      %c0_72 = arith.constant 0 : index
      %128 = vector.load %arg3[%c0_71, %c0_72] : memref<32x128xf32, #tpu.memory_space<vmem>>, vector<32x128xf32>
      %c0_73 = arith.constant 0 : index
      %c0_74 = arith.constant 0 : index
      %129 = vector.load %arg4[%c0_73, %c0_74] : memref<128x128xf32, #tpu.memory_space<vmem>>, vector<128x128xf32>
      %cst_75 = arith.constant dense<0.000000e+00> : vector<32x128xf32>
      %130 = tpu.matmul %128, %129, %cst_75 {dimension_numbers = #tpu.dot_dimension_numbers<[1], [0], [0], [1], [0, 0, 1, 1], [], []>} : vector<32x128xf32>, vector<128x128xf32>, vector<32x128xf32> -> vector<32x128xf32>
      %c0_76 = arith.constant 0 : index
      %c0_77 = arith.constant 0 : index
      %131 = vector.load %arg5[%c0_76, %c0_77] : memref<1x128xf32, #tpu.memory_space<vmem>>, vector<1x128xf32>
      %132 = vector.broadcast %131 : vector<1x128xf32> to vector<32x128xf32>
      %133 = arith.addf %130, %132 : vector<32x128xf32>
      %c0_78 = arith.constant 0 : index
      %c0_79 = arith.constant 0 : index
      %134 = vector.load %arg22[%c0_78, %c0_79] : memref<32x128xf32, #tpu.memory_space<vmem>>, vector<32x128xf32>
      tpu.vector_store %arg22[%c0_78, %c0_79], %133 {strides = array<i32>} : memref<32x128xf32, #tpu.memory_space<vmem>>, vector<32x128xf32>,
      %c0_80 = arith.constant 0 : index
      %c0_81 = arith.constant 0 : index
      %135 = vector.load %arg6[%c0_80, %c0_81] : memref<128x384xf32, #tpu.memory_space<vmem>>, vector<128x384xf32>
      %cst_82 = arith.constant dense<0.000000e+00> : vector<32x384xf32>
      %136 = tpu.matmul %133, %135, %cst_82 {dimension_numbers = #tpu.dot_dimension_numbers<[1], [0], [0], [1], [0, 0, 1, 1], [], []>} : vector<32x128xf32>, vector<128x384xf32>, vector<32x384xf32> -> vector<32x384xf32>
      %c0_83 = arith.constant 0 : index
      %c0_84 = arith.constant 0 : index
      %137 = vector.load %arg23[%c0_83, %c0_84] : memref<32x384xf32, #tpu.memory_space<vmem>>, vector<32x384xf32>
      tpu.vector_store %arg23[%c0_83, %c0_84], %136 {strides = array<i32>} : memref<32x384xf32, #tpu.memory_space<vmem>>, vector<32x384xf32>,
      %cst_85 = arith.constant 0.000000e+00 : f32
      %138 = vector.broadcast %cst_85 : f32 to vector<32x128xf32>
      %c0_86 = arith.constant 0 : index
      %c0_87 = arith.constant 0 : index
      %139 = vector.load %arg26[%c0_86, %c0_87] : memref<32x128xf32, #tpu.memory_space<vmem>>, vector<32x128xf32>
      tpu.vector_store %arg26[%c0_86, %c0_87], %138 {strides = array<i32>} : memref<32x128xf32, #tpu.memory_space<vmem>>, vector<32x128xf32>,
    } else {
    }
    %c0_i32_1 = arith.constant 0 : i32
    %c32_i32_2 = arith.constant 32 : i32
    %4 = arith.addi %c0_i32_1, %c32_i32_2 : i32
    %c1_i32 = arith.constant 1 : i32
    scf.for %arg27 = %c0_i32_1 to %4 step %c1_i32  : i32 {
      %128 = arith.addi %0, %arg27 : i32
      %129 = arith.index_cast %128 : i32 to index
      %130 = memref.load %arg1[%129] : memref<96xi32, #tpu.memory_space<smem>>
      %131 = arith.index_cast %130 : i32 to index
      %c0_71 = arith.constant 0 : index
      %132 = vector.load %arg23[%131, %c0_71] : memref<32x384xf32, #tpu.memory_space<vmem>>, vector<1x384xf32>
      %133 = arith.index_cast %arg27 : i32 to index
      %c0_72 = arith.constant 0 : index
      %134 = vector.load %arg24[%133, %c0_72] : memref<32x384xf32, #tpu.memory_space<vmem>>, vector<1x384xf32>
      tpu.vector_store %arg24[%133, %c0_72], %132 {strides = array<i32>} : memref<32x384xf32, #tpu.memory_space<vmem>>, vector<1x384xf32>,
    }
    %c32_i32_3 = arith.constant 32 : i32
    %c0 = arith.constant 0 : index
    %c0_4 = arith.constant 0 : index
    %5 = vector.load %arg7[%c0, %c0_4] : memref<32x1xf32, #tpu.memory_space<vmem>>, vector<32x1xf32>
    %c0_5 = arith.constant 0 : index
    %c0_6 = arith.constant 0 : index
    %6 = vector.load %arg8[%c0_5, %c0_6] : memref<32x1xf32, #tpu.memory_space<vmem>>, vector<32x1xf32>
    %c0_7 = arith.constant 0 : index
    %c0_8 = arith.constant 0 : index
    %7 = memref.load %arg9[%c0_7, %c0_8] : memref<2x2xf32, #tpu.memory_space<smem>>
    %8 = vector.broadcast %7 : f32 to vector<32x1xf32>
    %9 = arith.mulf %5, %8 : vector<32x1xf32>
    %c1 = arith.constant 1 : index
    %c0_9 = arith.constant 0 : index
    %10 = memref.load %arg9[%c1, %c0_9] : memref<2x2xf32, #tpu.memory_space<smem>>
    %11 = vector.broadcast %10 : f32 to vector<32x1xf32>
    %12 = arith.mulf %6, %11 : vector<32x1xf32>
    %13 = arith.addf %9, %12 : vector<32x1xf32>
    %c0_10 = arith.constant 0 : index
    %c0_11 = arith.constant 0 : index
    %14 = memref.load %arg10[%c0_10, %c0_11] : memref<1x2xf32, #tpu.memory_space<smem>>
    %15 = vector.broadcast %14 : f32 to vector<32x1xf32>
    %16 = arith.addf %13, %15 : vector<32x1xf32>
    %17 = math.tanh %16 : vector<32x1xf32>
    %c0_12 = arith.constant 0 : index
    %c1_13 = arith.constant 1 : index
    %18 = memref.load %arg9[%c0_12, %c1_13] : memref<2x2xf32, #tpu.memory_space<smem>>
    %19 = vector.broadcast %18 : f32 to vector<32x1xf32>
    %20 = arith.mulf %5, %19 : vector<32x1xf32>
    %c1_14 = arith.constant 1 : index
    %c1_15 = arith.constant 1 : index
    %21 = memref.load %arg9[%c1_14, %c1_15] : memref<2x2xf32, #tpu.memory_space<smem>>
    %22 = vector.broadcast %21 : f32 to vector<32x1xf32>
    %23 = arith.mulf %6, %22 : vector<32x1xf32>
    %24 = arith.addf %20, %23 : vector<32x1xf32>
    %c0_16 = arith.constant 0 : index
    %c1_17 = arith.constant 1 : index
    %25 = memref.load %arg10[%c0_16, %c1_17] : memref<1x2xf32, #tpu.memory_space<smem>>
    %26 = vector.broadcast %25 : f32 to vector<32x1xf32>
    %27 = arith.addf %24, %26 : vector<32x1xf32>
    %28 = math.tanh %27 : vector<32x1xf32>
    %cst = arith.constant 0.000000e+00 : f32
    %29 = vector.broadcast %cst : f32 to vector<32x128xf32>
    %cst_18 = arith.constant 0.000000e+00 : f32
    %30 = vector.broadcast %cst_18 : f32 to vector<32x1xf32>
    %c0_19 = arith.constant 0 : index
    %c0_20 = arith.constant 0 : index
    %31 = memref.load %arg11[%c0_19, %c0_20] : memref<3x2xf32, #tpu.memory_space<smem>>
    %32 = vector.broadcast %31 : f32 to vector<32x1xf32>
    %33 = arith.subf %17, %32 : vector<32x1xf32>
    %34 = arith.mulf %33, %33 : vector<32x1xf32>
    %c0_21 = arith.constant 0 : index
    %c0_22 = arith.constant 0 : index
    %35 = memref.load %arg12[%c0_21, %c0_22] : memref<3x2xf32, #tpu.memory_space<smem>>
    %c0_23 = arith.constant 0 : index
    %c0_24 = arith.constant 0 : index
    %36 = memref.load %arg12[%c0_23, %c0_24] : memref<3x2xf32, #tpu.memory_space<smem>>
    %37 = arith.mulf %35, %36 : f32
    %38 = vector.broadcast %37 : f32 to vector<32x1xf32>
    %39 = arith.mulf %34, %38 : vector<32x1xf32>
    %40 = arith.addf %30, %39 : vector<32x1xf32>
    %c0_25 = arith.constant 0 : index
    %c1_26 = arith.constant 1 : index
    %41 = memref.load %arg11[%c0_25, %c1_26] : memref<3x2xf32, #tpu.memory_space<smem>>
    %42 = vector.broadcast %41 : f32 to vector<32x1xf32>
    %43 = arith.subf %28, %42 : vector<32x1xf32>
    %44 = arith.mulf %43, %43 : vector<32x1xf32>
    %c0_27 = arith.constant 0 : index
    %c1_28 = arith.constant 1 : index
    %45 = memref.load %arg12[%c0_27, %c1_28] : memref<3x2xf32, #tpu.memory_space<smem>>
    %c0_29 = arith.constant 0 : index
    %c1_30 = arith.constant 1 : index
    %46 = memref.load %arg12[%c0_29, %c1_30] : memref<3x2xf32, #tpu.memory_space<smem>>
    %47 = arith.mulf %45, %46 : f32
    %48 = vector.broadcast %47 : f32 to vector<32x1xf32>
    %49 = arith.mulf %44, %48 : vector<32x1xf32>
    %50 = arith.addf %40, %49 : vector<32x1xf32>
    %cst_31 = arith.constant -5.000000e-01 : f32
    %51 = vector.broadcast %cst_31 : f32 to vector<32x1xf32>
    %52 = arith.mulf %51, %50 : vector<32x1xf32>
    %53 = math.exp %52 : vector<32x1xf32>
    %c0_32 = arith.constant 0 : index
    %c0_33 = arith.constant 0 : index
    %54 = vector.load %arg24[%c0_32, %c0_33] : memref<32x384xf32, #tpu.memory_space<vmem>>, vector<32x128xf32>
    %55 = vector.broadcast %53 : vector<32x1xf32> to vector<32x128xf32>
    %56 = arith.mulf %55, %54 : vector<32x128xf32>
    %57 = arith.addf %29, %56 : vector<32x128xf32>
    %cst_34 = arith.constant 0.000000e+00 : f32
    %58 = vector.broadcast %cst_34 : f32 to vector<32x1xf32>
    %c1_35 = arith.constant 1 : index
    %c0_36 = arith.constant 0 : index
    %59 = memref.load %arg11[%c1_35, %c0_36] : memref<3x2xf32, #tpu.memory_space<smem>>
    %60 = vector.broadcast %59 : f32 to vector<32x1xf32>
    %61 = arith.subf %17, %60 : vector<32x1xf32>
    %62 = arith.mulf %61, %61 : vector<32x1xf32>
    %c1_37 = arith.constant 1 : index
    %c0_38 = arith.constant 0 : index
    %63 = memref.load %arg12[%c1_37, %c0_38] : memref<3x2xf32, #tpu.memory_space<smem>>
    %c1_39 = arith.constant 1 : index
    %c0_40 = arith.constant 0 : index
    %64 = memref.load %arg12[%c1_39, %c0_40] : memref<3x2xf32, #tpu.memory_space<smem>>
    %65 = arith.mulf %63, %64 : f32
    %66 = vector.broadcast %65 : f32 to vector<32x1xf32>
    %67 = arith.mulf %62, %66 : vector<32x1xf32>
    %68 = arith.addf %58, %67 : vector<32x1xf32>
    %c1_41 = arith.constant 1 : index
    %c1_42 = arith.constant 1 : index
    %69 = memref.load %arg11[%c1_41, %c1_42] : memref<3x2xf32, #tpu.memory_space<smem>>
    %70 = vector.broadcast %69 : f32 to vector<32x1xf32>
    %71 = arith.subf %28, %70 : vector<32x1xf32>
    %72 = arith.mulf %71, %71 : vector<32x1xf32>
    %c1_43 = arith.constant 1 : index
    %c1_44 = arith.constant 1 : index
    %73 = memref.load %arg12[%c1_43, %c1_44] : memref<3x2xf32, #tpu.memory_space<smem>>
    %c1_45 = arith.constant 1 : index
    %c1_46 = arith.constant 1 : index
    %74 = memref.load %arg12[%c1_45, %c1_46] : memref<3x2xf32, #tpu.memory_space<smem>>
    %75 = arith.mulf %73, %74 : f32
    %76 = vector.broadcast %75 : f32 to vector<32x1xf32>
    %77 = arith.mulf %72, %76 : vector<32x1xf32>
    %78 = arith.addf %68, %77 : vector<32x1xf32>
    %cst_47 = arith.constant -5.000000e-01 : f32
    %79 = vector.broadcast %cst_47 : f32 to vector<32x1xf32>
    %80 = arith.mulf %79, %78 : vector<32x1xf32>
    %81 = math.exp %80 : vector<32x1xf32>
    %c0_48 = arith.constant 0 : index
    %c128 = arith.constant 128 : index
    %82 = vector.load %arg24[%c0_48, %c128] : memref<32x384xf32, #tpu.memory_space<vmem>>, vector<32x128xf32>
    %83 = vector.broadcast %81 : vector<32x1xf32> to vector<32x128xf32>
    %84 = arith.mulf %83, %82 : vector<32x128xf32>
    %85 = arith.addf %57, %84 : vector<32x128xf32>
    %cst_49 = arith.constant 0.000000e+00 : f32
    %86 = vector.broadcast %cst_49 : f32 to vector<32x1xf32>
    %c2 = arith.constant 2 : index
    %c0_50 = arith.constant 0 : index
    %87 = memref.load %arg11[%c2, %c0_50] : memref<3x2xf32, #tpu.memory_space<smem>>
    %88 = vector.broadcast %87 : f32 to vector<32x1xf32>
    %89 = arith.subf %17, %88 : vector<32x1xf32>
    %90 = arith.mulf %89, %89 : vector<32x1xf32>
    %c2_51 = arith.constant 2 : index
    %c0_52 = arith.constant 0 : index
    %91 = memref.load %arg12[%c2_51, %c0_52] : memref<3x2xf32, #tpu.memory_space<smem>>
    %c2_53 = arith.constant 2 : index
    %c0_54 = arith.constant 0 : index
    %92 = memref.load %arg12[%c2_53, %c0_54] : memref<3x2xf32, #tpu.memory_space<smem>>
    %93 = arith.mulf %91, %92 : f32
    %94 = vector.broadcast %93 : f32 to vector<32x1xf32>
    %95 = arith.mulf %90, %94 : vector<32x1xf32>
    %96 = arith.addf %86, %95 : vector<32x1xf32>
    %c2_55 = arith.constant 2 : index
    %c1_56 = arith.constant 1 : index
    %97 = memref.load %arg11[%c2_55, %c1_56] : memref<3x2xf32, #tpu.memory_space<smem>>
    %98 = vector.broadcast %97 : f32 to vector<32x1xf32>
    %99 = arith.subf %28, %98 : vector<32x1xf32>
    %100 = arith.mulf %99, %99 : vector<32x1xf32>
    %c2_57 = arith.constant 2 : index
    %c1_58 = arith.constant 1 : index
    %101 = memref.load %arg12[%c2_57, %c1_58] : memref<3x2xf32, #tpu.memory_space<smem>>
    %c2_59 = arith.constant 2 : index
    %c1_60 = arith.constant 1 : index
    %102 = memref.load %arg12[%c2_59, %c1_60] : memref<3x2xf32, #tpu.memory_space<smem>>
    %103 = arith.mulf %101, %102 : f32
    %104 = vector.broadcast %103 : f32 to vector<32x1xf32>
    %105 = arith.mulf %100, %104 : vector<32x1xf32>
    %106 = arith.addf %96, %105 : vector<32x1xf32>
    %cst_61 = arith.constant -5.000000e-01 : f32
    %107 = vector.broadcast %cst_61 : f32 to vector<32x1xf32>
    %108 = arith.mulf %107, %106 : vector<32x1xf32>
    %109 = math.exp %108 : vector<32x1xf32>
    %c0_62 = arith.constant 0 : index
    %c256 = arith.constant 256 : index
    %110 = vector.load %arg24[%c0_62, %c256] : memref<32x384xf32, #tpu.memory_space<vmem>>, vector<32x128xf32>
    %111 = vector.broadcast %109 : vector<32x1xf32> to vector<32x128xf32>
    %112 = arith.mulf %111, %110 : vector<32x128xf32>
    %113 = arith.addf %85, %112 : vector<32x128xf32>
    %114 = tpu.iota {dimensions = array<i32: 0>} : vector<32x1xi32>
    %115 = vector.broadcast %0 : i32 to vector<32x1xi32>
    %116 = arith.addi %114, %115 : vector<32x1xi32>
    %c80_i32 = arith.constant 80 : i32
    %117 = vector.broadcast %c80_i32 : i32 to vector<32x1xi32>
    %118 = arith.cmpi slt, %116, %117 : vector<32x1xi32>
    %cst_63 = arith.constant 0.000000e+00 : f32
    %119 = vector.shape_cast %118 : vector<32x1xi1> to vector<32x1xi1>
    %120 = vector.broadcast %119 : vector<32x1xi1> to vector<32x128xi1>
    %121 = vector.broadcast %cst_63 : f32 to vector<32x128xf32>
    %122 = arith.select %120, %113, %121 : vector<32x128xi1>, vector<32x128xf32>
    %c0_64 = arith.constant 0 : index
    %c0_65 = arith.constant 0 : index
    %123 = vector.load %arg25[%c0_64, %c0_65] : memref<32x128xf32, #tpu.memory_space<vmem>>, vector<32x128xf32>
    tpu.vector_store %arg25[%c0_64, %c0_65], %122 {strides = array<i32>} : memref<32x128xf32, #tpu.memory_space<vmem>>, vector<32x128xf32>,
    %c0_i32_66 = arith.constant 0 : i32
    %c32_i32_67 = arith.constant 32 : i32
    %124 = arith.addi %c0_i32_66, %c32_i32_67 : i32
    %c1_i32_68 = arith.constant 1 : i32
    scf.for %arg27 = %c0_i32_66 to %124 step %c1_i32_68  : i32 {
      %128 = arith.addi %0, %arg27 : i32
      %129 = arith.index_cast %128 : i32 to index
      %130 = memref.load %arg2[%129] : memref<96xi32, #tpu.memory_space<smem>>
      %131 = arith.index_cast %130 : i32 to index
      %c0_71 = arith.constant 0 : index
      %132 = vector.load %arg26[%131, %c0_71] : memref<32x128xf32, #tpu.memory_space<vmem>>, vector<1x128xf32>
      %133 = arith.index_cast %arg27 : i32 to index
      %c0_72 = arith.constant 0 : index
      %134 = vector.load %arg25[%133, %c0_72] : memref<32x128xf32, #tpu.memory_space<vmem>>, vector<1x128xf32>
      %135 = arith.addf %132, %134 : vector<1x128xf32>
      %136 = arith.index_cast %130 : i32 to index
      %c0_73 = arith.constant 0 : index
      %137 = vector.load %arg26[%136, %c0_73] : memref<32x128xf32, #tpu.memory_space<vmem>>, vector<1x128xf32>
      tpu.vector_store %arg26[%136, %c0_73], %135 {strides = array<i32>} : memref<32x128xf32, #tpu.memory_space<vmem>>, vector<1x128xf32>,
    }
    %c32_i32_69 = arith.constant 32 : i32
    %c2_i32 = arith.constant 2 : i32
    %125 = arith.cmpi eq, %arg0, %c2_i32 : i32
    %126 = arith.extui %125 : i1 to i32
    %c0_i32_70 = arith.constant 0 : i32
    %127 = arith.cmpi ne, %126, %c0_i32_70 : i32
    scf.if %127 {
      %c0_71 = arith.constant 0 : index
      %c0_72 = arith.constant 0 : index
      %128 = vector.load %arg26[%c0_71, %c0_72] : memref<32x128xf32, #tpu.memory_space<vmem>>, vector<32x128xf32>
      %c0_73 = arith.constant 0 : index
      %c0_74 = arith.constant 0 : index
      %129 = vector.load %arg13[%c0_73, %c0_74] : memref<1x128xf32, #tpu.memory_space<vmem>>, vector<1x128xf32>
      %130 = vector.broadcast %129 : vector<1x128xf32> to vector<32x128xf32>
      %131 = arith.mulf %128, %130 : vector<32x128xf32>
      %c0_75 = arith.constant 0 : index
      %c0_76 = arith.constant 0 : index
      %132 = vector.load %arg14[%c0_75, %c0_76] : memref<1x128xf32, #tpu.memory_space<vmem>>, vector<1x128xf32>
      %133 = vector.broadcast %132 : vector<1x128xf32> to vector<32x128xf32>
      %134 = arith.addf %131, %133 : vector<32x128xf32>
      %cst_77 = arith.constant 0.000000e+00 : f32
      %135 = vector.broadcast %cst_77 : f32 to vector<32x128xf32>
      %136 = arith.maximumf %134, %135 : vector<32x128xf32>
      %c0_78 = arith.constant 0 : index
      %c0_79 = arith.constant 0 : index
      %137 = vector.load %arg22[%c0_78, %c0_79] : memref<32x128xf32, #tpu.memory_space<vmem>>, vector<32x128xf32>
      %138 = arith.addf %137, %136 : vector<32x128xf32>
      %c0_80 = arith.constant 0 : index
      %c0_81 = arith.constant 0 : index
      %139 = vector.load %arg15[%c0_80, %c0_81] : memref<128x128xf32, #tpu.memory_space<vmem>>, vector<128x128xf32>
      %cst_82 = arith.constant dense<0.000000e+00> : vector<32x128xf32>
      %140 = tpu.matmul %138, %139, %cst_82 {dimension_numbers = #tpu.dot_dimension_numbers<[1], [0], [0], [1], [0, 0, 1, 1], [], []>} : vector<32x128xf32>, vector<128x128xf32>, vector<32x128xf32> -> vector<32x128xf32>
      %c0_83 = arith.constant 0 : index
      %c0_84 = arith.constant 0 : index
      %141 = vector.load %arg16[%c0_83, %c0_84] : memref<1x128xf32, #tpu.memory_space<vmem>>, vector<1x128xf32>
      %142 = vector.broadcast %141 : vector<1x128xf32> to vector<32x128xf32>
      %143 = arith.addf %140, %142 : vector<32x128xf32>
      %cst_85 = arith.constant 0.000000e+00 : f32
      %144 = vector.broadcast %cst_85 : f32 to vector<32x128xf32>
      %145 = arith.maximumf %143, %144 : vector<32x128xf32>
      %c0_86 = arith.constant 0 : index
      %c0_87 = arith.constant 0 : index
      %146 = vector.load %arg17[%c0_86, %c0_87] : memref<128x128xf32, #tpu.memory_space<vmem>>, vector<128x128xf32>
      %cst_88 = arith.constant dense<0.000000e+00> : vector<32x128xf32>
      %147 = tpu.matmul %145, %146, %cst_88 {dimension_numbers = #tpu.dot_dimension_numbers<[1], [0], [0], [1], [0, 0, 1, 1], [], []>} : vector<32x128xf32>, vector<128x128xf32>, vector<32x128xf32> -> vector<32x128xf32>
      %c0_89 = arith.constant 0 : index
      %c0_90 = arith.constant 0 : index
      %148 = vector.load %arg18[%c0_89, %c0_90] : memref<1x128xf32, #tpu.memory_space<vmem>>, vector<1x128xf32>
      %149 = vector.broadcast %148 : vector<1x128xf32> to vector<32x128xf32>
      %150 = arith.addf %147, %149 : vector<32x128xf32>
      %cst_91 = arith.constant 0.000000e+00 : f32
      %151 = vector.broadcast %cst_91 : f32 to vector<32x128xf32>
      %152 = arith.maximumf %150, %151 : vector<32x128xf32>
      %c0_92 = arith.constant 0 : index
      %c0_93 = arith.constant 0 : index
      %153 = vector.load %arg19[%c0_92, %c0_93] : memref<128x128xf32, #tpu.memory_space<vmem>>, vector<128x128xf32>
      %cst_94 = arith.constant dense<0.000000e+00> : vector<32x128xf32>
      %154 = tpu.matmul %152, %153, %cst_94 {dimension_numbers = #tpu.dot_dimension_numbers<[1], [0], [0], [1], [0, 0, 1, 1], [], []>} : vector<32x128xf32>, vector<128x128xf32>, vector<32x128xf32> -> vector<32x128xf32>
      %c0_95 = arith.constant 0 : index
      %c0_96 = arith.constant 0 : index
      %155 = vector.load %arg20[%c0_95, %c0_96] : memref<1x128xf32, #tpu.memory_space<vmem>>, vector<1x128xf32>
      %156 = vector.broadcast %155 : vector<1x128xf32> to vector<32x128xf32>
      %157 = arith.addf %154, %156 : vector<32x128xf32>
      %c0_97 = arith.constant 0 : index
      %c0_98 = arith.constant 0 : index
      %158 = vector.load %arg21[%c0_97, %c0_98] : memref<32x128xf32, #tpu.memory_space<vmem>>, vector<32x128xf32>
      tpu.vector_store %arg21[%c0_97, %c0_98], %157 {strides = array<i32>} : memref<32x128xf32, #tpu.memory_space<vmem>>, vector<32x128xf32>,
    } else {
    }
    return
  }
  func.func @transform_0(%arg0: i32, %arg1: memref<96xi32, #tpu.memory_space<smem>>, %arg2: memref<96xi32, #tpu.memory_space<smem>>) -> (i32, i32) {
    %c0_i32 = arith.constant 0 : i32
    %c0_i32_0 = arith.constant 0 : i32
    %c0_i32_1 = arith.constant 0 : i32
    return %c0_i32, %c0_i32_0 : i32, i32
  }
  func.func @transform_1(%arg0: i32, %arg1: memref<96xi32, #tpu.memory_space<smem>>, %arg2: memref<96xi32, #tpu.memory_space<smem>>) -> (i32, i32) {
    %c0_i32 = arith.constant 0 : i32
    %c0_i32_0 = arith.constant 0 : i32
    %c0_i32_1 = arith.constant 0 : i32
    return %c0_i32, %c0_i32_0 : i32, i32
  }
  func.func @transform_2(%arg0: i32, %arg1: memref<96xi32, #tpu.memory_space<smem>>, %arg2: memref<96xi32, #tpu.memory_space<smem>>) -> (i32, i32) {
    %c0_i32 = arith.constant 0 : i32
    %c0_i32_0 = arith.constant 0 : i32
    %c0_i32_1 = arith.constant 0 : i32
    return %c0_i32, %c0_i32_0 : i32, i32
  }
  func.func @transform_3(%arg0: i32, %arg1: memref<96xi32, #tpu.memory_space<smem>>, %arg2: memref<96xi32, #tpu.memory_space<smem>>) -> (i32, i32) {
    %c0_i32 = arith.constant 0 : i32
    %c0_i32_0 = arith.constant 0 : i32
    %c0_i32_1 = arith.constant 0 : i32
    return %c0_i32, %c0_i32_0 : i32, i32
  }
  func.func @transform_4(%arg0: i32, %arg1: memref<96xi32, #tpu.memory_space<smem>>, %arg2: memref<96xi32, #tpu.memory_space<smem>>) -> (i32, i32) {
    %c0_i32 = arith.constant 0 : i32
    %c0_i32_0 = arith.constant 0 : i32
    return %arg0, %c0_i32 : i32, i32
  }
  func.func @transform_5(%arg0: i32, %arg1: memref<96xi32, #tpu.memory_space<smem>>, %arg2: memref<96xi32, #tpu.memory_space<smem>>) -> (i32, i32) {
    %c0_i32 = arith.constant 0 : i32
    %c0_i32_0 = arith.constant 0 : i32
    return %arg0, %c0_i32 : i32, i32
  }
  func.func @transform_6(%arg0: i32, %arg1: memref<96xi32, #tpu.memory_space<smem>>, %arg2: memref<96xi32, #tpu.memory_space<smem>>) -> (i32, i32) {
    %c0_i32 = arith.constant 0 : i32
    %c0_i32_0 = arith.constant 0 : i32
    %c0_i32_1 = arith.constant 0 : i32
    return %c0_i32, %c0_i32_0 : i32, i32
  }
  func.func @transform_7(%arg0: i32, %arg1: memref<96xi32, #tpu.memory_space<smem>>, %arg2: memref<96xi32, #tpu.memory_space<smem>>) -> (i32, i32) {
    %c0_i32 = arith.constant 0 : i32
    %c0_i32_0 = arith.constant 0 : i32
    %c0_i32_1 = arith.constant 0 : i32
    return %c0_i32, %c0_i32_0 : i32, i32
  }
  func.func @transform_8(%arg0: i32, %arg1: memref<96xi32, #tpu.memory_space<smem>>, %arg2: memref<96xi32, #tpu.memory_space<smem>>) -> (i32, i32) {
    %c0_i32 = arith.constant 0 : i32
    %c0_i32_0 = arith.constant 0 : i32
    %c0_i32_1 = arith.constant 0 : i32
    return %c0_i32, %c0_i32_0 : i32, i32
  }
  func.func @transform_9(%arg0: i32, %arg1: memref<96xi32, #tpu.memory_space<smem>>, %arg2: memref<96xi32, #tpu.memory_space<smem>>) -> (i32, i32) {
    %c0_i32 = arith.constant 0 : i32
    %c0_i32_0 = arith.constant 0 : i32
    %c0_i32_1 = arith.constant 0 : i32
    return %c0_i32, %c0_i32_0 : i32, i32
  }
  func.func @transform_10(%arg0: i32, %arg1: memref<96xi32, #tpu.memory_space<smem>>, %arg2: memref<96xi32, #tpu.memory_space<smem>>) -> (i32, i32) {
    %c0_i32 = arith.constant 0 : i32
    %c0_i32_0 = arith.constant 0 : i32
    %c0_i32_1 = arith.constant 0 : i32
    return %c0_i32, %c0_i32_0 : i32, i32
  }
  func.func @transform_11(%arg0: i32, %arg1: memref<96xi32, #tpu.memory_space<smem>>, %arg2: memref<96xi32, #tpu.memory_space<smem>>) -> (i32, i32) {
    %c0_i32 = arith.constant 0 : i32
    %c0_i32_0 = arith.constant 0 : i32
    %c0_i32_1 = arith.constant 0 : i32
    return %c0_i32, %c0_i32_0 : i32, i32
  }
  func.func @transform_12(%arg0: i32, %arg1: memref<96xi32, #tpu.memory_space<smem>>, %arg2: memref<96xi32, #tpu.memory_space<smem>>) -> (i32, i32) {
    %c0_i32 = arith.constant 0 : i32
    %c0_i32_0 = arith.constant 0 : i32
    %c0_i32_1 = arith.constant 0 : i32
    return %c0_i32, %c0_i32_0 : i32, i32
  }
  func.func @transform_13(%arg0: i32, %arg1: memref<96xi32, #tpu.memory_space<smem>>, %arg2: memref<96xi32, #tpu.memory_space<smem>>) -> (i32, i32) {
    %c0_i32 = arith.constant 0 : i32
    %c0_i32_0 = arith.constant 0 : i32
    %c0_i32_1 = arith.constant 0 : i32
    return %c0_i32, %c0_i32_0 : i32, i32
  }
  func.func @transform_14(%arg0: i32, %arg1: memref<96xi32, #tpu.memory_space<smem>>, %arg2: memref<96xi32, #tpu.memory_space<smem>>) -> (i32, i32) {
    %c0_i32 = arith.constant 0 : i32
    %c0_i32_0 = arith.constant 0 : i32
    %c0_i32_1 = arith.constant 0 : i32
    return %c0_i32, %c0_i32_0 : i32, i32
  }
  func.func @transform_15(%arg0: i32, %arg1: memref<96xi32, #tpu.memory_space<smem>>, %arg2: memref<96xi32, #tpu.memory_space<smem>>) -> (i32, i32) {
    %c0_i32 = arith.constant 0 : i32
    %c0_i32_0 = arith.constant 0 : i32
    %c0_i32_1 = arith.constant 0 : i32
    return %c0_i32, %c0_i32_0 : i32, i32
  }
  func.func @transform_16(%arg0: i32, %arg1: memref<96xi32, #tpu.memory_space<smem>>, %arg2: memref<96xi32, #tpu.memory_space<smem>>) -> (i32, i32) {
    %c0_i32 = arith.constant 0 : i32
    %c0_i32_0 = arith.constant 0 : i32
    %c0_i32_1 = arith.constant 0 : i32
    return %c0_i32, %c0_i32_0 : i32, i32
  }
  func.func @transform_17(%arg0: i32, %arg1: memref<96xi32, #tpu.memory_space<smem>>, %arg2: memref<96xi32, #tpu.memory_space<smem>>) -> (i32, i32) {
    %c0_i32 = arith.constant 0 : i32
    %c0_i32_0 = arith.constant 0 : i32
    %c0_i32_1 = arith.constant 0 : i32
    return %c0_i32, %c0_i32_0 : i32, i32
  }
  func.func @transform_18(%arg0: i32, %arg1: memref<96xi32, #tpu.memory_space<smem>>, %arg2: memref<96xi32, #tpu.memory_space<smem>>) -> (i32, i32) {
    %c0_i32 = arith.constant 0 : i32
    %c0_i32_0 = arith.constant 0 : i32
    %c0_i32_1 = arith.constant 0 : i32
    return %c0_i32, %c0_i32_0 : i32, i32
  }
}

</mosaic_0001>

<llo_original>
// kernel: monet_forward_pallas.2
$region0: #{monet_forward_pallas.2}
  #allocation0 [shape = 'u32[]', space=smem, size = 0x4, offset = 0x4, fixed_abs, tag = 'smem constant byte address 0x4 - core index']
  #allocation1 [shape = 'u32[144,128]{1,0:T(1,128)}', space=vmem, size = 0x12000, scoped, tag = 'internal scratch']
  #allocation2 [shape = 'f32[32,128]{1,0:T(8,128)}', space=vmem, size = 0x4000, scoped, tag = 'scratch operand']
  #allocation3 [shape = 'f32[32,384]{1,0:T(8,128)}', space=vmem, size = 0xc000, scoped, tag = 'scratch operand']
  #allocation4 [shape = 'f32[32,384]{1,0:T(8,128)}', space=vmem, size = 0xc000, scoped, tag = 'scratch operand']
  #allocation5 [shape = 'f32[32,128]{1,0:T(8,128)}', space=vmem, size = 0x4000, scoped, tag = 'scratch operand']
  #allocation6 [shape = 'f32[32,128]{1,0:T(8,128)}', space=vmem, size = 0x4000, scoped, tag = 'scratch operand']
  #allocation7 [shape = 's32[1]{0}', space=sflag, size = 0x4, scoped, tag = 'scoped memory for monet_forward_pallas.2']
  #allocation8 [shape = 'u8[512]{0}', space=smem, size = 0x200, scoped, tag = 'prefetched SMEM operand 0']
  #allocation9 [shape = 'u8[512]{0}', space=smem, size = 0x200, scoped, tag = 'prefetched SMEM operand 1']
  %s0 = inlined_call_operand.vmem [shape: s32[96], index: 0, kind: input, shape index: {}]
  %s1 = inlined_call_operand.vmem [shape: s32[96], index: 1, kind: input, shape index: {}]
  %s2 = inlined_call_operand.vmem [shape: f32[32,128], index: 2, kind: input, shape index: {}]
  %s3 = inlined_call_operand.vmem [shape: f32[128,128], index: 3, kind: input, shape index: {}]
  %s4 = inlined_call_operand.vmem [shape: f32[1,128], index: 4, kind: input, shape index: {}]
  %s5 = inlined_call_operand.vmem [shape: f32[128,384], index: 5, kind: input, shape index: {}]
  %s6 = inlined_call_operand.vmem [shape: f32[96,1], index: 6, kind: input, shape index: {}]
  %s7 = inlined_call_operand.vmem [shape: f32[96,1], index: 7, kind: input, shape index: {}]
  %s8 = inlined_call_operand.vmem [shape: f32[2,2], index: 8, kind: input, shape index: {}]
  %s9 = inlined_call_operand.vmem [shape: f32[1,2], index: 9, kind: input, shape index: {}]
  %s10 = inlined_call_operand.vmem [shape: f32[3,2], index: 10, kind: input, shape index: {}]
  %s11 = inlined_call_operand.vmem [shape: f32[3,2], index: 11, kind: input, shape index: {}]
  %s12 = inlined_call_operand.vmem [shape: f32[1,128], index: 12, kind: input, shape index: {}]
  %s13 = inlined_call_operand.vmem [shape: f32[1,128], index: 13, kind: input, shape index: {}]
  %s14 = inlined_call_operand.vmem [shape: f32[32,128], index: 14, kind: output, shape index: {}]
  %s15 = sld [smem:[#allocation0]]
  $region119: #{monet_forward_pallas.2} parent=0
    _
  %s17 = ssub.s32 1, %s15
  %s18 = scalar_select 0, %s17, %s15
  %s19 = sshll.u32 %s0, 4
  %s20 = int_to_ptr.vmem [resolvable:$true] %s19
  %22 = dma.vmem_to_smem %s20, 16, [#allocation8], [#allocation7]
  %s23 = sshll.u32 %s1, 4
  %s24 = int_to_ptr.vmem [resolvable:$true] %s23
  %26 = dma.vmem_to_smem %s24, 16, [#allocation9], [#allocation7]
  %27 = dma.done [#allocation7], 32
  %28 = sfence
  $region1: #{monet_forward_pallas.2} parent=0
    #allocation10 [shape = 'u8[1024]{0}', space=smem, size = 0x400, scoped, tag = 'input window, operand 8, single buffered']
    #allocation11 [shape = 's32[2]{0}', space=sflag, size = 0x8, scoped, tag = 'scoped memory for monet_forward_pallas.2']
    #allocation12 [shape = 'u8[512]{0}', space=smem, size = 0x200, scoped, tag = 'input window, operand 9, single buffered']
    #allocation13 [shape = 's32[1]{0}', space=sflag, size = 0x4, scoped, tag = 'scoped memory for monet_forward_pallas.2']
    #allocation14 [shape = 'u8[2048]{0}', space=smem, size = 0x800, scoped, tag = 'input window, operand 10, single buffered']
    #allocation15 [shape = 'u8[2048]{0}', space=smem, size = 0x800, scoped, tag = 'input window, operand 11, single buffered']
    #allocation16 [shape = 's32[1]{0}', space=sflag, size = 0x4, scoped, tag = 'scoped memory for monet_forward_pallas.2']
    %29 = vsyncpa [#allocation11], 0
    %30 = vsyncpa [#allocation13], 0
    %31 = vsyncpa [#allocation16], 0
    loop: start=0, step=1, limit=5
    $region2: #{monet_forward_pallas.2} parent=1 // loop_pre_header
      _
    $region3: #{monet_forward_pallas.2} parent=1 // loop_header
      %s33 = sphi 0, %s37
      %p34 = scmp.ge.s32.totalorder %s33, 5
      %s41 = sphi 0, %s41
      %s43 = sphi 0, %s41
      %s44 = sphi 0, %s43
      %s58 = sphi 0, %s44
      %s62 = sphi 0, %s62
      %s64 = sphi 0, %s62
      %s65 = sphi 0, %s64
      %s79 = sphi 0, %s65
      %s83 = sphi 0, %s83
      %s85 = sphi 0, %s83
      %s86 = sphi 0, %s85
      %s100 = sphi 0, %s86
      %s104 = sphi 0, %s104
      %s106 = sphi 0, %s104
      %s107 = sphi 0, %s106
      %s121 = sphi 0, %s107
      %s127 = sphi 0, %s129
      %s130 = sphi 0, %s127
      %s131 = sphi 0, %s130
      %s147 = sphi 0, %s131
      %s153 = sphi 0, %s155
      %s156 = sphi 0, %s153
      %s157 = sphi 0, %s156
      %s173 = sphi 0, %s157
      %s177 = sphi 0, %s177
      %s179 = sphi 0, %s177
      %s180 = sphi 0, %s179
      %s194 = sphi 0, %s180
      %s198 = sphi 0, %s198
      %s200 = sphi 0, %s198
      %s201 = sphi 0, %s200
      %s215 = sphi 0, %s201
      %s219 = sphi 0, %s219
      %s221 = sphi 0, %s219
      %s222 = sphi 0, %s221
      %s236 = sphi 0, %s222
      %s240 = sphi 0, %s240
      %s242 = sphi 0, %s240
      %s243 = sphi 0, %s242
      %s257 = sphi 0, %s243
      %s261 = sphi 0, %s261
      %s263 = sphi 0, %s261
      %s264 = sphi 0, %s263
      %s278 = sphi 0, %s264
      %s282 = sphi 0, %s282
      %s284 = sphi 0, %s282
      %s285 = sphi 0, %s284
      %s299 = sphi 0, %s285
      %s303 = sphi 0, %s303
      %s305 = sphi 0, %s303
      %s306 = sphi 0, %s305
      %s320 = sphi 0, %s306
    $region4: #{monet_forward_pallas.2} parent=1 // loop_header_branch
      %36 = sbr.rel (%p34) target = $region8
    $region5: #{monet_forward_pallas.2} parent=1 // loop_body
      %s38 = ssub.s32 %s33, 1
      %s39 = ssub.s32 %s33, 2
      %s40 = sadd.s32 %s33, 1
      %s42 = sadd.s32 %s41, 1
      %p45 = scmp.eq.s32.totalorder %s33, 2
      %p46 = scmp.ne.s32.totalorder %s41, %s43
      %p47 = scmp.eq.s32.totalorder %s33, 0
      %p48 = por %p46, %p47
      %p49 = scmp.ne.s32.totalorder %s41, %s43
      %p50 = scmp.eq.s32.totalorder %s38, 2
      %p51 = por %p49, %p50
      %p52 = scmp.ne.s32.totalorder %s43, %s44
      %p53 = scmp.eq.s32.totalorder %s38, 0
      %p54 = por %p52, %p53
      %p55 = scmp.ne.s32.totalorder %s43, %s44
      %p56 = scmp.eq.s32.totalorder %s39, 2
      %p57 = por %p55, %p56
      %p59 = scmp.ne.s32.totalorder %s44, %s58
      %p60 = scmp.eq.s32.totalorder %s39, 0
      %p61 = por %p59, %p60
      %s63 = sadd.s32 %s62, 1
      %p66 = scmp.eq.s32.totalorder %s33, 2
      %p67 = scmp.ne.s32.totalorder %s62, %s64
      %p68 = scmp.eq.s32.totalorder %s33, 0
      %p69 = por %p67, %p68
      %p70 = scmp.ne.s32.totalorder %s62, %s64
      %p71 = scmp.eq.s32.totalorder %s38, 2
      %p72 = por %p70, %p71
      %p73 = scmp.ne.s32.totalorder %s64, %s65
      %p74 = scmp.eq.s32.totalorder %s38, 0
      %p75 = por %p73, %p74
      %p76 = scmp.ne.s32.totalorder %s64, %s65
      %p77 = scmp.eq.s32.totalorder %s39, 2
      %p78 = por %p76, %p77
      %p80 = scmp.ne.s32.totalorder %s65, %s79
      %p81 = scmp.eq.s32.totalorder %s39, 0
      %p82 = por %p80, %p81
      %s84 = sadd.s32 %s83, 1
      %p87 = scmp.eq.s32.totalorder %s33, 2
      %p88 = scmp.ne.s32.totalorder %s83, %s85
      %p89 = scmp.eq.s32.totalorder %s33, 0
      %p90 = por %p88, %p89
      %p91 = scmp.ne.s32.totalorder %s83, %s85
      %p92 = scmp.eq.s32.totalorder %s38, 2
      %p93 = por %p91, %p92
      %p94 = scmp.ne.s32.totalorder %s85, %s86
      %p95 = scmp.eq.s32.totalorder %s38, 0
      %p96 = por %p94, %p95
      %p97 = scmp.ne.s32.totalorder %s85, %s86
      %p98 = scmp.eq.s32.totalorder %s39, 2
      %p99 = por %p97, %p98
      %p101 = scmp.ne.s32.totalorder %s86, %s100
      %p102 = scmp.eq.s32.totalorder %s39, 0
      %p103 = por %p101, %p102
      %s105 = sadd.s32 %s104, 1
      %p108 = scmp.eq.s32.totalorder %s33, 2
      %p109 = scmp.ne.s32.totalorder %s104, %s106
      %p110 = scmp.eq.s32.totalorder %s33, 0
      %p111 = por %p109, %p110
      %p112 = scmp.ne.s32.totalorder %s104, %s106
      %p113 = scmp.eq.s32.totalorder %s38, 2
      %p114 = por %p112, %p113
      %p115 = scmp.ne.s32.totalorder %s106, %s107
      %p116 = scmp.eq.s32.totalorder %s38, 0
      %p117 = por %p115, %p116
      %p118 = scmp.ne.s32.totalorder %s106, %s107
      %p119 = scmp.eq.s32.totalorder %s39, 2
      %p120 = por %p118, %p119
      %p122 = scmp.ne.s32.totalorder %s107, %s121
      %p123 = scmp.eq.s32.totalorder %s39, 0
      %p124 = por %p122, %p123
      %s125 = ssub.s32 %s33, %s40
      %p126 = scmp.eq.s32.totalorder %s125, 0
      %s128 = sadd.s32 %s127, 1
      %s129 = scalar_select %p126, %s127, %s128
      %p132 = pneg %p126
      %p133 = scmp.eq.s32.totalorder %s33, 2
      %p134 = por %p132, %p133
      %p135 = scmp.ne.s32.totalorder %s127, %s130
      %p136 = scmp.eq.s32.totalorder %s33, 0
      %p137 = por %p135, %p136
      %p138 = scmp.ne.s32.totalorder %s127, %s130
      %p139 = scmp.eq.s32.totalorder %s38, 2
      %p140 = por %p138, %p139
      %p141 = scmp.ne.s32.totalorder %s130, %s131
      %p142 = scmp.eq.s32.totalorder %s38, 0
      %p143 = por %p141, %p142
      %p144 = scmp.ne.s32.totalorder %s130, %s131
      %p145 = scmp.eq.s32.totalorder %s39, 2
      %p146 = por %p144, %p145
      %p148 = scmp.ne.s32.totalorder %s131, %s147
      %p149 = scmp.eq.s32.totalorder %s39, 0
      %p150 = por %p148, %p149
      %s151 = ssub.s32 %s33, %s40
      %p152 = scmp.eq.s32.totalorder %s151, 0
      %s154 = sadd.s32 %s153, 1
      %s155 = scalar_select %p152, %s153, %s154
      %p158 = pneg %p152
      %p159 = scmp.eq.s32.totalorder %s33, 2
      %p160 = por %p158, %p159
      %p161 = scmp.ne.s32.totalorder %s153, %s156
      %p162 = scmp.eq.s32.totalorder %s33, 0
      %p163 = por %p161, %p162
      %p164 = scmp.ne.s32.totalorder %s153, %s156
      %p165 = scmp.eq.s32.totalorder %s38, 2
      %p166 = por %p164, %p165
      %p167 = scmp.ne.s32.totalorder %s156, %s157
      %p168 = scmp.eq.s32.totalorder %s38, 0
      %p169 = por %p167, %p168
      %p170 = scmp.ne.s32.totalorder %s156, %s157
      %p171 = scmp.eq.s32.totalorder %s39, 2
      %p172 = por %p170, %p171
      %p174 = scmp.ne.s32.totalorder %s157, %s173
      %p175 = scmp.eq.s32.totalorder %s39, 0
      %p176 = por %p174, %p175
      %s178 = sadd.s32 %s177, 1
      %p181 = scmp.eq.s32.totalorder %s33, 2
      %p182 = scmp.ne.s32.totalorder %s177, %s179
      %p183 = scmp.eq.s32.totalorder %s33, 0
      %p184 = por %p182, %p183
      %p185 = scmp.ne.s32.totalorder %s177, %s179
      %p186 = scmp.eq.s32.totalorder %s38, 2
      %p187 = por %p185, %p186
      %p188 = scmp.ne.s32.totalorder %s179, %s180
      %p189 = scmp.eq.s32.totalorder %s38, 0
      %p190 = por %p188, %p189
      %p191 = scmp.ne.s32.totalorder %s179, %s180
      %p192 = scmp.eq.s32.totalorder %s39, 2
      %p193 = por %p191, %p192
      %p195 = scmp.ne.s32.totalorder %s180, %s194
      %p196 = scmp.eq.s32.totalorder %s39, 0
      %p197 = por %p195, %p196
      %s199 = sadd.s32 %s198, 1
      %p202 = scmp.eq.s32.totalorder %s33, 2
      %p203 = scmp.ne.s32.totalorder %s198, %s200
      %p204 = scmp.eq.s32.totalorder %s33, 0
      %p205 = por %p203, %p204
      %p206 = scmp.ne.s32.totalorder %s198, %s200
      %p207 = scmp.eq.s32.totalorder %s38, 2
      %p208 = por %p206, %p207
      %p209 = scmp.ne.s32.totalorder %s200, %s201
      %p210 = scmp.eq.s32.totalorder %s38, 0
      %p211 = por %p209, %p210
      %p212 = scmp.ne.s32.totalorder %s200, %s201
      %p213 = scmp.eq.s32.totalorder %s39, 2
      %p214 = por %p212, %p213
      %p216 = scmp.ne.s32.totalorder %s201, %s215
      %p217 = scmp.eq.s32.totalorder %s39, 0
      %p218 = por %p216, %p217
      %s220 = sadd.s32 %s219, 1
      %p223 = scmp.eq.s32.totalorder %s33, 2
      %p224 = scmp.ne.s32.totalorder %s219, %s221
      %p225 = scmp.eq.s32.totalorder %s33, 0
      %p226 = por %p224, %p225
      %p227 = scmp.ne.s32.totalorder %s219, %s221
      %p228 = scmp.eq.s32.totalorder %s38, 2
      %p229 = por %p227, %p228
      %p230 = scmp.ne.s32.totalorder %s221, %s222
      %p231 = scmp.eq.s32.totalorder %s38, 0
      %p232 = por %p230, %p231
      %p233 = scmp.ne.s32.totalorder %s221, %s222
      %p234 = scmp.eq.s32.totalorder %s39, 2
      %p235 = por %p233, %p234
      %p237 = scmp.ne.s32.totalorder %s222, %s236
      %p238 = scmp.eq.s32.totalorder %s39, 0
      %p239 = por %p237, %p238
      %s241 = sadd.s32 %s240, 1
      %p244 = scmp.eq.s32.totalorder %s33, 2
      %p245 = scmp.ne.s32.totalorder %s240, %s242
      %p246 = scmp.eq.s32.totalorder %s33, 0
      %p247 = por %p245, %p246
      %p248 = scmp.ne.s32.totalorder %s240, %s242
      %p249 = scmp.eq.s32.totalorder %s38, 2
      %p250 = por %p248, %p249
      %p251 = scmp.ne.s32.totalorder %s242, %s243
      %p252 = scmp.eq.s32.totalorder %s38, 0
      %p253 = por %p251, %p252
      %p254 = scmp.ne.s32.totalorder %s242, %s243
      %p255 = scmp.eq.s32.totalorder %s39, 2
      %p256 = por %p254, %p255
      %p258 = scmp.ne.s32.totalorder %s243, %s257
      %p259 = scmp.eq.s32.totalorder %s39, 0
      %p260 = por %p258, %p259
      %s262 = sadd.s32 %s261, 1
      %p265 = scmp.eq.s32.totalorder %s33, 2
      %p266 = scmp.ne.s32.totalorder %s261, %s263
      %p267 = scmp.eq.s32.totalorder %s33, 0
      %p268 = por %p266, %p267
      %p269 = scmp.ne.s32.totalorder %s261, %s263
      %p270 = scmp.eq.s32.totalorder %s38, 2
      %p271 = por %p269, %p270
      %p272 = scmp.ne.s32.totalorder %s263, %s264
      %p273 = scmp.eq.s32.totalorder %s38, 0
      %p274 = por %p272, %p273
      %p275 = scmp.ne.s32.totalorder %s263, %s264
      %p276 = scmp.eq.s32.totalorder %s39, 2
      %p277 = por %p275, %p276
      %p279 = scmp.ne.s32.totalorder %s264, %s278
      %p280 = scmp.eq.s32.totalorder %s39, 0
      %p281 = por %p279, %p280
      %s283 = sadd.s32 %s282, 1
      %p286 = scmp.eq.s32.totalorder %s33, 2
      %p287 = scmp.ne.s32.totalorder %s282, %s284
      %p288 = scmp.eq.s32.totalorder %s33, 0
      %p289 = por %p287, %p288
      %p290 = scmp.ne.s32.totalorder %s282, %s284
      %p291 = scmp.eq.s32.totalorder %s38, 2
      %p292 = por %p290, %p291
      %p293 = scmp.ne.s32.totalorder %s284, %s285
      %p294 = scmp.eq.s32.totalorder %s38, 0
      %p295 = por %p293, %p294
      %p296 = scmp.ne.s32.totalorder %s284, %s285
      %p297 = scmp.eq.s32.totalorder %s39, 2
      %p298 = por %p296, %p297
      %p300 = scmp.ne.s32.totalorder %s285, %s299
      %p301 = scmp.eq.s32.totalorder %s39, 0
      %p302 = por %p300, %p301
      %s304 = sadd.s32 %s303, 1
      %p307 = scmp.eq.s32.totalorder %s33, 2
      %p308 = scmp.ne.s32.totalorder %s303, %s305
      %p309 = scmp.eq.s32.totalorder %s33, 0
      %p310 = por %p308, %p309
      %p311 = scmp.ne.s32.totalorder %s303, %s305
      %p312 = scmp.eq.s32.totalorder %s38, 2
      %p313 = por %p311, %p312
      %p314 = scmp.ne.s32.totalorder %s305, %s306
      %p315 = scmp.eq.s32.totalorder %s38, 0
      %p316 = por %p314, %p315
      %p317 = scmp.ne.s32.totalorder %s305, %s306
      %p318 = scmp.eq.s32.totalorder %s39, 2
      %p319 = por %p317, %p318
      %p321 = scmp.ne.s32.totalorder %s306, %s320
      %p322 = scmp.eq.s32.totalorder %s39, 0
      %p323 = por %p321, %p322
      %p324 = scmp.le.s32.totalorder 1, %s33
      %p325 = scmp.lt.s32.totalorder %s33, 4
      %p326 = pnand %p324, %p325
      %p327 = pneg %p326
      // Predicated region
      $region9: #{monet_forward_pallas.2} parent=5 // pred_check
        _
      $region10: #{monet_forward_pallas.2} parent=5 // pred_check_branch
        %329 = sbr.rel (%p326) target = $region12
      $region11: #{monet_forward_pallas.2} parent=5 // pred_region
        %s330 = ssub.s32 %s33, 1
        // Predicated region
        $region13: #{monet_forward_pallas.2} parent=11 // pred_check
          %p331 = pneg %p54
        $region14: #{monet_forward_pallas.2} parent=11 // pred_check_branch
          %333 = sbr.rel (%p331) target = $region16
        $region15: #{monet_forward_pallas.2} parent=11 // pred_region
          _
        $region16: #{monet_forward_pallas.2} parent=11 // pred_fallthru
          _
        // Predicated region
        $region17: #{monet_forward_pallas.2} parent=11 // pred_check
          %p334 = pneg %p75
        $region18: #{monet_forward_pallas.2} parent=11 // pred_check_branch
          %336 = sbr.rel (%p334) target = $region20
        $region19: #{monet_forward_pallas.2} parent=11 // pred_region
          _
        $region20: #{monet_forward_pallas.2} parent=11 // pred_fallthru
          _
        // Predicated region
        $region21: #{monet_forward_pallas.2} parent=11 // pred_check
          %p337 = pneg %p96
        $region22: #{monet_forward_pallas.2} parent=11 // pred_check_branch
          %339 = sbr.rel (%p337) target = $region24
        $region23: #{monet_forward_pallas.2} parent=11 // pred_region
          _
        $region24: #{monet_forward_pallas.2} parent=11 // pred_fallthru
          _
        // Predicated region
        $region25: #{monet_forward_pallas.2} parent=11 // pred_check
          %p340 = pneg %p117
        $region26: #{monet_forward_pallas.2} parent=11 // pred_check_branch
          %342 = sbr.rel (%p340) target = $region28
        $region27: #{monet_forward_pallas.2} parent=11 // pred_region
          _
        $region28: #{monet_forward_pallas.2} parent=11 // pred_fallthru
          _
        // Predicated region
        $region29: #{monet_forward_pallas.2} parent=11 // pred_check
          %p343 = pneg %p190
        $region30: #{monet_forward_pallas.2} parent=11 // pred_check_branch
          %345 = sbr.rel (%p343) target = $region32
        $region31: #{monet_forward_pallas.2} parent=11 // pred_region
          %s347 = ssub.s32 32, 32
          %348 = vsyncadd [#allocation11], %s347
          %s350 = sshll.u32 %s8, 4
          %s351 = int_to_ptr.vmem [resolvable:$true] %s350
          %353 = dma.vmem_to_smem %s351, 32, [#allocation10], [#allocation11]
        $region32: #{monet_forward_pallas.2} parent=11 // pred_fallthru
          _
        // Predicated region
        $region33: #{monet_forward_pallas.2} parent=11 // pred_check
          %p354 = pneg %p211
        $region34: #{monet_forward_pallas.2} parent=11 // pred_check_branch
          %356 = sbr.rel (%p354) target = $region36
        $region35: #{monet_forward_pallas.2} parent=11 // pred_region
          %s358 = ssub.s32 16, 16
          %359 = vsyncadd [#allocation13], %s358
          %s361 = sshll.u32 %s9, 4
          %s362 = int_to_ptr.vmem [resolvable:$true] %s361
          %364 = dma.vmem_to_smem %s362, 16, [#allocation12], [#allocation13]
        $region36: #{monet_forward_pallas.2} parent=11 // pred_fallthru
          _
        // Predicated region
        $region37: #{monet_forward_pallas.2} parent=11 // pred_check
          %p365 = pneg %p232
        $region38: #{monet_forward_pallas.2} parent=11 // pred_check_branch
          %367 = sbr.rel (%p365) target = $region40
        $region39: #{monet_forward_pallas.2} parent=11 // pred_region
          %s369 = ssub.s32 64, 64
          %370 = vsyncadd [#allocation13], %s369
          %s372 = sshll.u32 %s10, 4
          %s373 = int_to_ptr.vmem [resolvable:$true] %s372
          %375 = dma.vmem_to_smem %s373, 64, [#allocation14], [#allocation13]
        $region40: #{monet_forward_pallas.2} parent=11 // pred_fallthru
          _
        // Predicated region
        $region41: #{monet_forward_pallas.2} parent=11 // pred_check
          %p376 = pneg %p253
        $region42: #{monet_forward_pallas.2} parent=11 // pred_check_branch
          %378 = sbr.rel (%p376) target = $region44
        $region43: #{monet_forward_pallas.2} parent=11 // pred_region
          %s380 = ssub.s32 64, 64
          %381 = vsyncadd [#allocation16], %s380
          %s383 = sshll.u32 %s11, 4
          %s384 = int_to_ptr.vmem [resolvable:$true] %s383
          %386 = dma.vmem_to_smem %s384, 64, [#allocation15], [#allocation16]
        $region44: #{monet_forward_pallas.2} parent=11 // pred_fallthru
          _
        // Predicated region
        $region45: #{monet_forward_pallas.2} parent=11 // pred_check
          %p387 = pneg %p274
        $region46: #{monet_forward_pallas.2} parent=11 // pred_check_branch
          %389 = sbr.rel (%p387) target = $region48
        $region47: #{monet_forward_pallas.2} parent=11 // pred_region
          _
        $region48: #{monet_forward_pallas.2} parent=11 // pred_fallthru
          _
        // Predicated region
        $region49: #{monet_forward_pallas.2} parent=11 // pred_check
          %p390 = pneg %p295
        $region50: #{monet_forward_pallas.2} parent=11 // pred_check_branch
          %392 = sbr.rel (%p390) target = $region52
        $region51: #{monet_forward_pallas.2} parent=11 // pred_region
          _
        $region52: #{monet_forward_pallas.2} parent=11 // pred_fallthru
          _
      $region12: #{monet_forward_pallas.2} parent=5 // pred_fallthru
        _
      %p393 = scmp.lt.s32.totalorder %s33, 3
      // Predicated region
      $region53: #{monet_forward_pallas.2} parent=5 // pred_check
        %p394 = pneg %p393
      $region54: #{monet_forward_pallas.2} parent=5 // pred_check_branch
        %396 = sbr.rel (%p394) target = $region56
      $region55: #{monet_forward_pallas.2} parent=5 // pred_region
        // Predicated region
        $region57: #{monet_forward_pallas.2} parent=55 // pred_check
          %p397 = pneg %p137
        $region58: #{monet_forward_pallas.2} parent=55 // pred_check_branch
          %399 = sbr.rel (%p397) target = $region60
        $region59: #{monet_forward_pallas.2} parent=55 // pred_region
          %s400 = smul.u32 4, %s33
          %p401 = scmp.lt.s32.totalorder %s400, 11
          %s402 = scalar_select %p401, %s400, 11
          %s403 = smul.addr %s402, 8
          %s404 = scalar_lea.vmem %s6, %s403
          %s405 = smul.u32 4, %s33
        $region60: #{monet_forward_pallas.2} parent=55 // pred_fallthru
          _
        // Predicated region
        $region61: #{monet_forward_pallas.2} parent=55 // pred_check
          %p406 = pneg %p163
        $region62: #{monet_forward_pallas.2} parent=55 // pred_check_branch
          %408 = sbr.rel (%p406) target = $region64
        $region63: #{monet_forward_pallas.2} parent=55 // pred_region
          %s409 = smul.u32 4, %s33
          %p410 = scmp.lt.s32.totalorder %s409, 11
          %s411 = scalar_select %p410, %s409, 11
          %s412 = smul.addr %s411, 8
          %s413 = scalar_lea.vmem %s7, %s412
          %s414 = smul.u32 4, %s33
        $region64: #{monet_forward_pallas.2} parent=55 // pred_fallthru
          _
      $region56: #{monet_forward_pallas.2} parent=5 // pred_fallthru
        _
      %p415 = scmp.le.s32.totalorder 1, %s33
      %p416 = scmp.lt.s32.totalorder %s33, 4
      %p417 = pnand %p415, %p416
      %p418 = pneg %p417
      // Predicated region
      $region65: #{monet_forward_pallas.2} parent=5 // pred_check
        _
      $region66: #{monet_forward_pallas.2} parent=5 // pred_check_branch
        %420 = sbr.rel (%p417) target = $region68
      $region67: #{monet_forward_pallas.2} parent=5 // pred_region
        %s421 = ssub.s32 %s33, 1
        // Predicated region
        $region69: #{monet_forward_pallas.2} parent=67 // pred_check
          %p422 = pneg %p190
        $region70: #{monet_forward_pallas.2} parent=67 // pred_check_branch
          %424 = sbr.rel (%p422) target = $region72
        $region71: #{monet_forward_pallas.2} parent=67 // pred_region
          %425 = dma.done [#allocation11], 32
        $region72: #{monet_forward_pallas.2} parent=67 // pred_fallthru
          _
        // Predicated region
        $region73: #{monet_forward_pallas.2} parent=67 // pred_check
          %p426 = pneg %p211
        $region74: #{monet_forward_pallas.2} parent=67 // pred_check_branch
          %428 = sbr.rel (%p426) target = $region76
        $region75: #{monet_forward_pallas.2} parent=67 // pred_region
          %429 = dma.done [#allocation13], 16
        $region76: #{monet_forward_pallas.2} parent=67 // pred_fallthru
          _
        // Predicated region
        $region77: #{monet_forward_pallas.2} parent=67 // pred_check
          %p430 = pneg %p232
        $region78: #{monet_forward_pallas.2} parent=67 // pred_check_branch
          %432 = sbr.rel (%p430) target = $region80
        $region79: #{monet_forward_pallas.2} parent=67 // pred_region
          %433 = dma.done [#allocation13], 64
        $region80: #{monet_forward_pallas.2} parent=67 // pred_fallthru
          _
        // Predicated region
        $region81: #{monet_forward_pallas.2} parent=67 // pred_check
          %p434 = pneg %p253
        $region82: #{monet_forward_pallas.2} parent=67 // pred_check_branch
          %436 = sbr.rel (%p434) target = $region84
        $region83: #{monet_forward_pallas.2} parent=67 // pred_region
          %437 = dma.done [#allocation16], 64
        $region84: #{monet_forward_pallas.2} parent=67 // pred_fallthru
          _
        %438 = sfence
        %p439 = pneg %p54
        %p440 = pneg %p51
        %p441 = pneg %p75
        %p442 = pneg %p72
        %p443 = pneg %p96
        %p444 = pneg %p93
        %p445 = pneg %p117
        %p446 = pneg %p114
        %s447 = smul.u32 4, %s38
        %p448 = scmp.lt.s32.totalorder %s447, 11
        %s449 = scalar_select %p448, %s447, 11
        %s450 = smul.addr %s449, 8
        %s451 = scalar_lea.vmem %s6, %s450
        %p452 = pneg %p143
        %p453 = pneg %p140
        %s454 = smul.u32 4, %s38
        %p455 = scmp.lt.s32.totalorder %s454, 11
        %s456 = scalar_select %p455, %s454, 11
        %s457 = smul.addr %s456, 8
        %s458 = scalar_lea.vmem %s7, %s457
        %p459 = pneg %p169
        %p460 = pneg %p166
        %p461 = pneg %p190
        %p462 = pneg %p187
        %p463 = pneg %p211
        %p464 = pneg %p208
        %p465 = pneg %p232
        %p466 = pneg %p229
        %p467 = pneg %p253
        %p468 = pneg %p250
        %p469 = pneg %p274
        %p470 = pneg %p271
        %p471 = pneg %p295
        %p472 = pneg %p292
        %p473 = pneg %p316
        %p474 = pneg %p313
        %s475 = smul.u32 4, %s38
        %p476 = scmp.lt.s32.totalorder %s475, 11
        %s477 = scalar_select %p476, %s475, 11
        %s478 = smul.addr %s477, 8
        %s479 = scalar_lea.vmem %s6, %s478
        %s480 = smul.u32 4, %s38
        %s481 = smul.u32 4, %s38
        %p482 = scmp.lt.s32.totalorder %s481, 11
        %s483 = scalar_select %p482, %s481, 11
        %s484 = smul.addr %s483, 8
        %s485 = scalar_lea.vmem %s7, %s484
        %s486 = smul.u32 4, %s38
        %s487 = smul.u32 %s38, 32
        %p488 = scmp.eq.s32.totalorder %s38, 0
        // Predicated region
        $region85: #{monet_forward_pallas.2} parent=67 // pred_check
          %p489 = pneg %p488
        $region86: #{monet_forward_pallas.2} parent=67 // pred_check_branch
          %491 = sbr.rel (%p489) target = $region88
        $region87: #{monet_forward_pallas.2} parent=67 // pred_region
          %v492 = vld [vmem:[%s2] sm:$0xff]
          %v493 = vld [vmem:[%s2 + $0x8] sm:$0xff]
          %v494 = vld [vmem:[%s2 + $0x10] sm:$0xff]
          %v495 = vld [vmem:[%s2 + $0x18] sm:$0xff]
          %v496 = vld [vmem:[%s3] sm:$0xff]
          %v497 = vld [vmem:[%s3 + $0x8] sm:$0xff]
          %v498 = vld [vmem:[%s3 + $0x10] sm:$0xff]
          %v499 = vld [vmem:[%s3 + $0x18] sm:$0xff]
          %v500 = vld [vmem:[%s3 + $0x20] sm:$0xff]
          %v501 = vld [vmem:[%s3 + $0x28] sm:$0xff]
          %v502 = vld [vmem:[%s3 + $0x30] sm:$0xff]
          %v503 = vld [vmem:[%s3 + $0x38] sm:$0xff]
          %v504 = vld [vmem:[%s3 + $0x40] sm:$0xff]
          %v505 = vld [vmem:[%s3 + $0x48] sm:$0xff]
          %v506 = vld [vmem:[%s3 + $0x50] sm:$0xff]
          %v507 = vld [vmem:[%s3 + $0x58] sm:$0xff]
          %v508 = vld [vmem:[%s3 + $0x60] sm:$0xff]
          %v509 = vld [vmem:[%s3 + $0x68] sm:$0xff]
          %v510 = vld [vmem:[%s3 + $0x70] sm:$0xff]
          %v511 = vld [vmem:[%s3 + $0x78] sm:$0xff]
          %v512 = vld [vmem:[%s4] sm:$0x1]
          %v514 = vlaneseq
          %v515 = vshrl.u32 %v514, 7
          %v516 = vsub.s32 0, %v515
          %v517 = vrot.slane %v512, %v516
          %519 = vmatprep.subr.mxu0 0.0
          %520 = vmatpush1.msra.mxu0 %v511
          %521 = vmatprep.subr.mxu0 0.0
          %522 = vmatpush1.msra.mxu0 %v510
          %523 = vmatprep.subr.mxu0 0.0
          %524 = vmatpush1.msra.mxu0 %v509
          %525 = vmatprep.subr.mxu0 0.0
          %526 = vmatpush1.msra.mxu0 %v508
          %527 = vmatprep.subr.mxu0 0.0
          %528 = vmatpush1.msra.mxu0 %v507
          %529 = vmatprep.subr.mxu0 0.0
          %530 = vmatpush1.msra.mxu0 %v506
          %531 = vmatprep.subr.mxu0 0.0
          %532 = vmatpush1.msra.mxu0 %v505
          %533 = vmatprep.subr.mxu0 0.0
          %534 = vmatpush1.msra.mxu0 %v504
          %535 = vmatprep.subr.mxu0 0.0
          %536 = vmatpush1.msra.mxu0 %v503
          %537 = vmatprep.subr.mxu0 0.0
          %538 = vmatpush1.msra.mxu0 %v502
          %539 = vmatprep.subr.mxu0 0.0
          %540 = vmatpush1.msra.mxu0 %v501
          %541 = vmatprep.subr.mxu0 0.0
          %542 = vmatpush1.msra.mxu0 %v500
          %543 = vmatprep.subr.mxu0 0.0
          %544 = vmatpush1.msra.mxu0 %v499
          %545 = vmatprep.subr.mxu0 0.0
          %546 = vmatpush1.msra.mxu0 %v498
          %547 = vmatprep.subr.mxu0 0.0
          %548 = vmatpush1.msra.mxu0 %v497
          %549 = vmatprep.subr.mxu0 0.0
          %550 = vmatpush1.msra.mxu0 %v496
          %551 = vmatprep.subr.mxu0 0.0
          %552 = vmatpush2.msra.mxu0 0.0
          %553 = vmatprep.subr.mxu0 0.0
          %554 = vmatpush2.msra.mxu0 0.0
          %555 = vmatprep.subr.mxu0 0.0
          %556 = vmatpush2.msra.mxu0 0.0
          %557 = vmatprep.subr.mxu0 0.0
          %558 = vmatpush2.msra.mxu0 0.0
          %559 = vmatprep.subr.mxu0 0.0
          %560 = vmatpush2.msra.mxu0 0.0
          %561 = vmatprep.subr.mxu0 0.0
          %562 = vmatpush2.msra.mxu0 0.0
          %563 = vmatprep.subr.mxu0 0.0
          %564 = vmatpush2.msra.mxu0 0.0
          %565 = vmatprep.subr.mxu0 0.0
          %566 = vmatpush2.msra.mxu0 0.0
          %567 = vmatprep.subr.mxu0 0.0
          %568 = vmatpush2.msra.mxu0 0.0
          %569 = vmatprep.subr.mxu0 0.0
          %570 = vmatpush2.msra.mxu0 0.0
          %571 = vmatprep.subr.mxu0 0.0
          %572 = vmatpush2.msra.mxu0 0.0
          %573 = vmatprep.subr.mxu0 0.0
          %574 = vmatpush2.msra.mxu0 0.0
          %575 = vmatprep.subr.mxu0 0.0
          %576 = vmatpush2.msra.mxu0 0.0
          %577 = vmatprep.subr.mxu0 0.0
          %578 = vmatpush2.msra.mxu0 0.0
          %579 = vmatprep.subr.mxu0 0.0
          %580 = vmatpush2.msra.mxu0 0.0
          %581 = vmatprep.subr.mxu0 0.0
          %582 = vmatpush2.msra.mxu0 0.0
          %583 = vmatprep.mubr.f32.mxu0 0.0
          %584 = vmatmul.mubr.f32.gmra.mxu0 %v492
          %v585 = vpop.f32.mrf.mxu0
          %v586 = vadd.f32 %v517, %v585
          %v587 = vpop.f32.mrf.mxu0
          %588 = vmatprep.mubr.f32.mxu0 0.0
          %589 = vmatmul.mubr.f32.gmra.mxu0 %v493
          %v590 = vpop.f32.mrf.mxu0
          %v591 = vadd.f32 %v517, %v590
          %v592 = vpop.f32.mrf.mxu0
          %593 = vmatprep.mubr.f32.mxu0 0.0
          %594 = vmatmul.mubr.f32.gmra.mxu0 %v494
          %v595 = vpop.f32.mrf.mxu0
          %v596 = vadd.f32 %v517, %v595
          %v597 = vpop.f32.mrf.mxu0
          %598 = vmatprep.mubr.f32.mxu0 0.0
          %599 = vmatmul.mubr.f32.gmra.mxu0 %v495
          %v600 = vpop.f32.mrf.mxu0
          %v601 = vadd.f32 %v517, %v600
          %v602 = vpop.f32.mrf.mxu0
          %603 = vdwg.mxu0
          %604 = vst [vmem:[#allocation2] sm:$0xff] %v586
          %605 = vst [vmem:[#allocation2 + $0x8] sm:$0xff] %v591
          %606 = vst [vmem:[#allocation2 + $0x10] sm:$0xff] %v596
          %607 = vst [vmem:[#allocation2 + $0x18] sm:$0xff] %v601
          %v608 = vld [vmem:[%s5] sm:$0xff]
          %v609 = vld [vmem:[%s5 + $0x8] sm:$0xff]
          %v610 = vld [vmem:[%s5 + $0x10] sm:$0xff]
          %v611 = vld [vmem:[%s5 + $0x18] sm:$0xff]
          %v612 = vld [vmem:[%s5 + $0x20] sm:$0xff]
          %v613 = vld [vmem:[%s5 + $0x28] sm:$0xff]
          %v614 = vld [vmem:[%s5 + $0x30] sm:$0xff]
          %v615 = vld [vmem:[%s5 + $0x38] sm:$0xff]
          %v616 = vld [vmem:[%s5 + $0x40] sm:$0xff]
          %v617 = vld [vmem:[%s5 + $0x48] sm:$0xff]
          %v618 = vld [vmem:[%s5 + $0x50] sm:$0xff]
          %v619 = vld [vmem:[%s5 + $0x58] sm:$0xff]
          %v620 = vld [vmem:[%s5 + $0x60] sm:$0xff]
          %v621 = vld [vmem:[%s5 + $0x68] sm:$0xff]
          %v622 = vld [vmem:[%s5 + $0x70] sm:$0xff]
          %v623 = vld [vmem:[%s5 + $0x78] sm:$0xff]
          %v624 = vld [vmem:[%s5 + $0x80] sm:$0xff]
          %v625 = vld [vmem:[%s5 + $0x88] sm:$0xff]
          %v626 = vld [vmem:[%s5 + $0x90] sm:$0xff]
          %v627 = vld [vmem:[%s5 + $0x98] sm:$0xff]
          %v628 = vld [vmem:[%s5 + $0xa0] sm:$0xff]
          %v629 = vld [vmem:[%s5 + $0xa8] sm:$0xff]
          %v630 = vld [vmem:[%s5 + $0xb0] sm:$0xff]
          %v631 = vld [vmem:[%s5 + $0xb8] sm:$0xff]
          %v632 = vld [vmem:[%s5 + $0xc0] sm:$0xff]
          %v633 = vld [vmem:[%s5 + $0xc8] sm:$0xff]
          %v634 = vld [vmem:[%s5 + $0xd0] sm:$0xff]
          %v635 = vld [vmem:[%s5 + $0xd8] sm:$0xff]
          %v636 = vld [vmem:[%s5 + $0xe0] sm:$0xff]
          %v637 = vld [vmem:[%s5 + $0xe8] sm:$0xff]
          %v638 = vld [vmem:[%s5 + $0xf0] sm:$0xff]
          %v639 = vld [vmem:[%s5 + $0xf8] sm:$0xff]
          %v640 = vld [vmem:[%s5 + $0x100] sm:$0xff]
          %v641 = vld [vmem:[%s5 + $0x108] sm:$0xff]
          %v642 = vld [vmem:[%s5 + $0x110] sm:$0xff]
          %v643 = vld [vmem:[%s5 + $0x118] sm:$0xff]
          %v644 = vld [vmem:[%s5 + $0x120] sm:$0xff]
          %v645 = vld [vmem:[%s5 + $0x128] sm:$0xff]
          %v646 = vld [vmem:[%s5 + $0x130] sm:$0xff]
          %v647 = vld [vmem:[%s5 + $0x138] sm:$0xff]
          %v648 = vld [vmem:[%s5 + $0x140] sm:$0xff]
          %v649 = vld [vmem:[%s5 + $0x148] sm:$0xff]
          %v650 = vld [vmem:[%s5 + $0x150] sm:$0xff]
          %v651 = vld [vmem:[%s5 + $0x158] sm:$0xff]
          %v652 = vld [vmem:[%s5 + $0x160] sm:$0xff]
          %v653 = vld [vmem:[%s5 + $0x168] sm:$0xff]
          %v654 = vld [vmem:[%s5 + $0x170] sm:$0xff]
          %v655 = vld [vmem:[%s5 + $0x178] sm:$0xff]
          %656 = vmatprep.subr.mxu0 %v654
          %657 = vmatpush1.msra.mxu0 %v653
          %658 = vmatprep.subr.mxu0 %v651
          %659 = vmatpush1.msra.mxu0 %v650
          %660 = vmatprep.subr.mxu0 %v648
          %661 = vmatpush1.msra.mxu0 %v647
          %662 = vmatprep.subr.mxu0 %v645
          %663 = vmatpush1.msra.mxu0 %v644
          %664 = vmatprep.subr.mxu0 %v642
          %665 = vmatpush1.msra.mxu0 %v641
          %666 = vmatprep.subr.mxu0 %v639
          %667 = vmatpush1.msra.mxu0 %v638
          %668 = vmatprep.subr.mxu0 %v636
          %669 = vmatpush1.msra.mxu0 %v635
          %670 = vmatprep.subr.mxu0 %v633
          %671 = vmatpush1.msra.mxu0 %v632
          %672 = vmatprep.subr.mxu0 %v630
          %673 = vmatpush1.msra.mxu0 %v629
          %674 = vmatprep.subr.mxu0 %v627
          %675 = vmatpush1.msra.mxu0 %v626
          %676 = vmatprep.subr.mxu0 %v624
          %677 = vmatpush1.msra.mxu0 %v623
          %678 = vmatprep.subr.mxu0 %v621
          %679 = vmatpush1.msra.mxu0 %v620
          %680 = vmatprep.subr.mxu0 %v618
          %681 = vmatpush1.msra.mxu0 %v617
          %682 = vmatprep.subr.mxu0 %v615
          %683 = vmatpush1.msra.mxu0 %v614
          %684 = vmatprep.subr.mxu0 %v612
          %685 = vmatpush1.msra.mxu0 %v611
          %686 = vmatprep.subr.mxu0 %v609
          %687 = vmatpush1.msra.mxu0 %v608
          %688 = vmatprep.subr.mxu0 0.0
          %689 = vmatpush2.msra.mxu0 0.0
          %690 = vmatprep.subr.mxu0 0.0
          %691 = vmatpush2.msra.mxu0 0.0
          %692 = vmatprep.subr.mxu0 0.0
          %693 = vmatpush2.msra.mxu0 0.0
          %694 = vmatprep.subr.mxu0 0.0
          %695 = vmatpush2.msra.mxu0 0.0
          %696 = vmatprep.subr.mxu0 0.0
          %697 = vmatpush2.msra.mxu0 0.0
          %698 = vmatprep.subr.mxu0 0.0
          %699 = vmatpush2.msra.mxu0 0.0
          %700 = vmatprep.subr.mxu0 0.0
          %701 = vmatpush2.msra.mxu0 0.0
          %702 = vmatprep.subr.mxu0 0.0
          %703 = vmatpush2.msra.mxu0 0.0
          %704 = vmatprep.subr.mxu0 0.0
          %705 = vmatpush2.msra.mxu0 0.0
          %706 = vmatprep.subr.mxu0 0.0
          %707 = vmatpush2.msra.mxu0 0.0
          %708 = vmatprep.subr.mxu0 0.0
          %709 = vmatpush2.msra.mxu0 0.0
          %710 = vmatprep.subr.mxu0 0.0
          %711 = vmatpush2.msra.mxu0 0.0
          %712 = vmatprep.subr.mxu0 0.0
          %713 = vmatpush2.msra.mxu0 0.0
          %714 = vmatprep.subr.mxu0 0.0
          %715 = vmatpush2.msra.mxu0 0.0
          %716 = vmatprep.subr.mxu0 0.0
          %717 = vmatpush2.msra.mxu0 0.0
          %718 = vmatprep.subr.mxu0 0.0
          %719 = vmatpush2.msra.mxu0 0.0
          %720 = vmatprep.mubr.f32.mxu0 0.0
          %721 = vmatmul.mubr.f32.gmra.mxu0 %v586
          %v722 = vpop.f32.mrf.mxu0
          %v723 = vadd.f32 0.0, %v722
          %v724 = vpop.f32.mrf.mxu0
          %v725 = vadd.f32 0.0, %v724
          %726 = vmatprep.mubr.f32.mxu0 0.0
          %727 = vmatmul.mubr.f32.gmra.mxu0 %v591
          %v728 = vpop.f32.mrf.mxu0
          %v729 = vadd.f32 0.0, %v728
          %v730 = vpop.f32.mrf.mxu0
          %v731 = vadd.f32 0.0, %v730
          %732 = vmatprep.mubr.f32.mxu0 0.0
          %733 = vmatmul.mubr.f32.gmra.mxu0 %v596
          %v734 = vpop.f32.mrf.mxu0
          %v735 = vadd.f32 0.0, %v734
          %v736 = vpop.f32.mrf.mxu0
          %v737 = vadd.f32 0.0, %v736
          %738 = vmatprep.mubr.f32.mxu0 0.0
          %739 = vmatmul.mubr.f32.gmra.mxu0 %v601
          %v740 = vpop.f32.mrf.mxu0
          %v741 = vadd.f32 0.0, %v740
          %v742 = vpop.f32.mrf.mxu0
          %v743 = vadd.f32 0.0, %v742
          %744 = vdwg.mxu0
          %745 = vmatprep.subr.mxu0 0.0
          %746 = vmatpush1.msra.mxu0 %v655
          %747 = vmatprep.subr.mxu0 0.0
          %748 = vmatpush1.msra.mxu0 %v652
          %749 = vmatprep.subr.mxu0 0.0
          %750 = vmatpush1.msra.mxu0 %v649
          %751 = vmatprep.subr.mxu0 0.0
          %752 = vmatpush1.msra.mxu0 %v646
          %753 = vmatprep.subr.mxu0 0.0
          %754 = vmatpush1.msra.mxu0 %v643
          %755 = vmatprep.subr.mxu0 0.0
          %756 = vmatpush1.msra.mxu0 %v640
          %757 = vmatprep.subr.mxu0 0.0
          %758 = vmatpush1.msra.mxu0 %v637
          %759 = vmatprep.subr.mxu0 0.0
          %760 = vmatpush1.msra.mxu0 %v634
          %761 = vmatprep.subr.mxu0 0.0
          %762 = vmatpush1.msra.mxu0 %v631
          %763 = vmatprep.subr.mxu0 0.0
          %764 = vmatpush1.msra.mxu0 %v628
          %765 = vmatprep.subr.mxu0 0.0
          %766 = vmatpush1.msra.mxu0 %v625
          %767 = vmatprep.subr.mxu0 0.0
          %768 = vmatpush1.msra.mxu0 %v622
          %769 = vmatprep.subr.mxu0 0.0
          %770 = vmatpush1.msra.mxu0 %v619
          %771 = vmatprep.subr.mxu0 0.0
          %772 = vmatpush1.msra.mxu0 %v616
          %773 = vmatprep.subr.mxu0 0.0
          %774 = vmatpush1.msra.mxu0 %v613
          %775 = vmatprep.subr.mxu0 0.0
          %776 = vmatpush1.msra.mxu0 %v610
          %777 = vmatprep.subr.mxu0 0.0
          %778 = vmatpush2.msra.mxu0 0.0
          %779 = vmatprep.subr.mxu0 0.0
          %780 = vmatpush2.msra.mxu0 0.0
          %781 = vmatprep.subr.mxu0 0.0
          %782 = vmatpush2.msra.mxu0 0.0
          %783 = vmatprep.subr.mxu0 0.0
          %784 = vmatpush2.msra.mxu0 0.0
          %785 = vmatprep.subr.mxu0 0.0
          %786 = vmatpush2.msra.mxu0 0.0
          %787 = vmatprep.subr.mxu0 0.0
          %788 = vmatpush2.msra.mxu0 0.0
          %789 = vmatprep.subr.mxu0 0.0
          %790 = vmatpush2.msra.mxu0 0.0
          %791 = vmatprep.subr.mxu0 0.0
          %792 = vmatpush2.msra.mxu0 0.0
          %793 = vmatprep.subr.mxu0 0.0
          %794 = vmatpush2.msra.mxu0 0.0
          %795 = vmatprep.subr.mxu0 0.0
          %796 = vmatpush2.msra.mxu0 0.0
          %797 = vmatprep.subr.mxu0 0.0
          %798 = vmatpush2.msra.mxu0 0.0
          %799 = vmatprep.subr.mxu0 0.0
          %800 = vmatpush2.msra.mxu0 0.0
          %801 = vmatprep.subr.mxu0 0.0
          %802 = vmatpush2.msra.mxu0 0.0
          %803 = vmatprep.subr.mxu0 0.0
          %804 = vmatpush2.msra.mxu0 0.0
          %805 = vmatprep.subr.mxu0 0.0
          %806 = vmatpush2.msra.mxu0 0.0
          %807 = vmatprep.subr.mxu0 0.0
          %808 = vmatpush2.msra.mxu0 0.0
          %809 = vmatprep.mubr.f32.mxu0 0.0
          %810 = vmatmul.mubr.f32.gmra.mxu0 %v586
          %v811 = vpop.f32.mrf.mxu0
          %v812 = vadd.f32 0.0, %v811
          %v813 = vpop.f32.mrf.mxu0
          %814 = vmatprep.mubr.f32.mxu0 0.0
          %815 = vmatmul.mubr.f32.gmra.mxu0 %v591
          %v816 = vpop.f32.mrf.mxu0
          %v817 = vadd.f32 0.0, %v816
          %v818 = vpop.f32.mrf.mxu0
          %819 = vmatprep.mubr.f32.mxu0 0.0
          %820 = vmatmul.mubr.f32.gmra.mxu0 %v596
          %v821 = vpop.f32.mrf.mxu0
          %v822 = vadd.f32 0.0, %v821
          %v823 = vpop.f32.mrf.mxu0
          %824 = vmatprep.mubr.f32.mxu0 0.0
          %825 = vmatmul.mubr.f32.gmra.mxu0 %v601
          %v826 = vpop.f32.mrf.mxu0
          %v827 = vadd.f32 0.0, %v826
          %v828 = vpop.f32.mrf.mxu0
          %829 = vdwg.mxu0
          %830 = vst [vmem:[#allocation3] sm:$0xff] %v723
          %831 = vst [vmem:[#allocation3 + $0x8] sm:$0xff] %v725
          %832 = vst [vmem:[#allocation3 + $0x10] sm:$0xff] %v812
          %833 = vst [vmem:[#allocation3 + $0x18] sm:$0xff] %v729
          %834 = vst [vmem:[#allocation3 + $0x20] sm:$0xff] %v731
          %835 = vst [vmem:[#allocation3 + $0x28] sm:$0xff] %v817
          %836 = vst [vmem:[#allocation3 + $0x30] sm:$0xff] %v735
          %837 = vst [vmem:[#allocation3 + $0x38] sm:$0xff] %v737
          %838 = vst [vmem:[#allocation3 + $0x40] sm:$0xff] %v822
          %839 = vst [vmem:[#allocation3 + $0x48] sm:$0xff] %v741
          %840 = vst [vmem:[#allocation3 + $0x50] sm:$0xff] %v743
          %841 = vst [vmem:[#allocation3 + $0x58] sm:$0xff] %v827
          %842 = vst [vmem:[#allocation6] sm:$0xff] 0.0
          %843 = vst [vmem:[#allocation6 + $0x8] sm:$0xff] 0.0
          %844 = vst [vmem:[#allocation6 + $0x10] sm:$0xff] 0.0
          %845 = vst [vmem:[#allocation6 + $0x18] sm:$0xff] 0.0
        $region88: #{monet_forward_pallas.2} parent=67 // pred_fallthru
          _
        loop: start=0, step=1, limit=32
        $region89: #{monet_forward_pallas.2} parent=67 // loop_pre_header
          _
        $region90: #{monet_forward_pallas.2} parent=67 // loop_header
          %s847 = sphi 0, %s851
          %p848 = scmp.ge.s32.totalorder %s847, 32
        $region91: #{monet_forward_pallas.2} parent=67 // loop_header_branch
          %850 = sbr.rel (%p848) target = $region95
        $region92: #{monet_forward_pallas.2} parent=67 // loop_body
          %s852 = sadd.s32 %s487, %s847
          %s853 = sld [smem:[#allocation8 + %s852]]
          %s854 = sshra.s32 %s853, 3
          %s855 = sand.u32 %s853, 7
          %s856 = sshra.s32 %s853, 3
          %s857 = sand.u32 %s853, 7
          %s858 = smul.u32 %s854, 3
          %s859 = smul.u32 %s858, 8
          %s860 = sadd.s32 %s859, %s857
          %s861 = scalar_lea.vmem [#allocation3], %s860
          %v862 = vld [vmem:[%s861] ss:$8 sm:$0x7]
          %v863 = vlaneseq
          %vm864 = vcmp.ge.s32.totalorder %v863, 0
          %vm865 = vcmp.lt.s32.totalorder %v863, 384
          %vm866 = vmand %vm864, %vm865
          %s867 = sshra.s32 %s847, 3
          %s868 = sand.u32 %s847, 7
          %s869 = sshra.s32 %s847, 3
          %s870 = sand.u32 %s847, 7
          %s871 = smul.u32 %s867, 3
          %s872 = smul.u32 %s871, 8
          %s873 = sadd.s32 %s872, %s870
          %s874 = scalar_lea.vmem [#allocation4], %s873
          %875 = vst.msk [vmem:[%s874] ss:$8 sm:$0x7] %vm866, %v862
          %876 = vst.msk [vmem:[%s874] ss:$8 sm:$0x0] %vm866, %v862
        $region93: #{monet_forward_pallas.2} parent=67 // loop_footer
          %s851 = sadd.s32 1, %s847
        $region94: #{monet_forward_pallas.2} parent=67 // loop_footer_branch
          %846 = sbr.rel target = $region90
        $region95: #{monet_forward_pallas.2} parent=67 // loop_exit
          _
        %v877 = vld [vmem:[%s479] sm:$0xff]
        %v878 = vld [vmem:[%s479 + $0x8] sm:$0xff]
        %v879 = vld [vmem:[%s479 + $0x10] sm:$0xff]
        %v880 = vld [vmem:[%s479 + $0x18] sm:$0xff]
        %v881 = vld [vmem:[%s485] sm:$0xff]
        %v882 = vld [vmem:[%s485 + $0x8] sm:$0xff]
        %v883 = vld [vmem:[%s485 + $0x10] sm:$0xff]
        %v884 = vld [vmem:[%s485 + $0x18] sm:$0xff]
        %s885 = sld [smem:[#allocation10]]
        %v886 = vstv %s885
        %v887 = vmul.f32 %v877, %v886
        %v888 = vmul.f32 %v878, %v886
        %v889 = vmul.f32 %v879, %v886
        %v890 = vmul.f32 %v880, %v886
        %s891 = sld [smem:[#allocation10 + $0x80]]
        %v892 = vstv %s891
        %v893 = vmul.f32 %v881, %v892
        %v894 = vmul.f32 %v882, %v892
        %v895 = vmul.f32 %v883, %v892
        %v896 = vmul.f32 %v884, %v892
        %v897 = vadd.f32 %v887, %v893
        %v898 = vadd.f32 %v888, %v894
        %v899 = vadd.f32 %v889, %v895
        %v900 = vadd.f32 %v890, %v896
        %s901 = sld [smem:[#allocation12]]
        %v902 = vstv %s901
        %v903 = vadd.f32 %v897, %v902
        %v904 = vadd.f32 %v898, %v902
        %v905 = vadd.f32 %v899, %v902
        %v906 = vadd.f32 %v900, %v902
        %v907 = vtanh.pop %v903
        %v908 = vtanh.pop %v904
        %v909 = vtanh.pop %v905
        %v910 = vtanh.pop %v906
        %s911 = sld [smem:[#allocation10 + $0x1]]
        %v912 = vstv %s911
        %v913 = vmul.f32 %v877, %v912
        %v914 = vmul.f32 %v878, %v912
        %v915 = vmul.f32 %v879, %v912
        %v916 = vmul.f32 %v880, %v912
        %s917 = sld [smem:[#allocation10 + $0x81]]
        %v918 = vstv %s917
        %v919 = vmul.f32 %v881, %v918
        %v920 = vmul.f32 %v882, %v918
        %v921 = vmul.f32 %v883, %v918
        %v922 = vmul.f32 %v884, %v918
        %v923 = vadd.f32 %v913, %v919
        %v924 = vadd.f32 %v914, %v920
        %v925 = vadd.f32 %v915, %v921
        %v926 = vadd.f32 %v916, %v922
        %s927 = sld [smem:[#allocation12 + $0x1]]
        %v928 = vstv %s927
        %v929 = vadd.f32 %v923, %v928
        %v930 = vadd.f32 %v924, %v928
        %v931 = vadd.f32 %v925, %v928
        %v932 = vadd.f32 %v926, %v928
        %v933 = vtanh.pop %v929
        %v934 = vtanh.pop %v930
        %v935 = vtanh.pop %v931
        %v936 = vtanh.pop %v932
        %s937 = sld [smem:[#allocation14]]
        %v938 = vstv %s937
        %v939 = vsub.f32 %v907, %v938
        %v940 = vsub.f32 %v908, %v938
        %v941 = vsub.f32 %v909, %v938
        %v942 = vsub.f32 %v910, %v938
        %v943 = vmul.f32 %v939, %v939
        %v944 = vmul.f32 %v940, %v940
        %v945 = vmul.f32 %v941, %v941
        %v946 = vmul.f32 %v942, %v942
        %s947 = sld [smem:[#allocation15]]
        %s948 = smul.f32 %s947, %s947
        %v949 = vstv %s948
        %v950 = vmul.f32 %v943, %v949
        %v951 = vmul.f32 %v944, %v949
        %v952 = vmul.f32 %v945, %v949
        %v953 = vmul.f32 %v946, %v949
        %v954 = vadd.f32 %v950, 0.0
        %v955 = vadd.f32 %v951, 0.0
        %v956 = vadd.f32 %v952, 0.0
        %v957 = vadd.f32 %v953, 0.0
        %s958 = sld [smem:[#allocation14 + $0x1]]
        %v959 = vstv %s958
        %v960 = vsub.f32 %v933, %v959
        %v961 = vsub.f32 %v934, %v959
        %v962 = vsub.f32 %v935, %v959
        %v963 = vsub.f32 %v936, %v959
        %v964 = vmul.f32 %v960, %v960
        %v965 = vmul.f32 %v961, %v961
        %v966 = vmul.f32 %v962, %v962
        %v967 = vmul.f32 %v963, %v963
        %s968 = sld [smem:[#allocation15 + $0x1]]
        %s969 = smul.f32 %s968, %s968
        %v970 = vstv %s969
        %v971 = vmul.f32 %v964, %v970
        %v972 = vmul.f32 %v965, %v970
        %v973 = vmul.f32 %v966, %v970
        %v974 = vmul.f32 %v967, %v970
        %v975 = vadd.f32 %v954, %v971
        %v976 = vadd.f32 %v955, %v972
        %v977 = vadd.f32 %v956, %v973
        %v978 = vadd.f32 %v957, %v974
        %v979 = vmul.f32 %v975, -0.5
        %v980 = vmul.f32 %v976, -0.5
        %v981 = vmul.f32 %v977, -0.5
        %v982 = vmul.f32 %v978, -0.5
        %v983 = vmul.f32 %v979, 1.442695
        %v984 = vpow.pop %v983
        %v985 = vmul.f32 %v980, 1.442695
        %v986 = vpow.pop %v985
        %v987 = vmul.f32 %v981, 1.442695
        %v988 = vpow.pop %v987
        %v989 = vmul.f32 %v982, 1.442695
        %v990 = vpow.pop %v989
        %v991 = vld [vmem:[#allocation4] sm:$0xff]
        %v992 = vld [vmem:[#allocation4 + $0x18] sm:$0xff]
        %v993 = vld [vmem:[#allocation4 + $0x30] sm:$0xff]
        %v994 = vld [vmem:[#allocation4 + $0x48] sm:$0xff]
        %996 = vset.pattern.permute.xlu0 0
        %997 = vperm.xlu0 %996, %v984
        %v998 = vpop.permute.xlu0 %997
        %1001 = vset.pattern.permute.xlu0 0
        %1002 = vperm.xlu0 %1001, %v986
        %v1003 = vpop.permute.xlu0 %1002
        %1006 = vset.pattern.permute.xlu0 0
        %1007 = vperm.xlu0 %1006, %v988
        %v1008 = vpop.permute.xlu0 %1007
        %1011 = vset.pattern.permute.xlu0 0
        %1012 = vperm.xlu0 %1011, %v990
        %v1013 = vpop.permute.xlu0 %1012
        %v1015 = vmul.f32 %v998, %v991
        %v1016 = vmul.f32 %v1003, %v992
        %v1017 = vmul.f32 %v1008, %v993
        %v1018 = vmul.f32 %v1013, %v994
        %v1019 = vadd.f32 %v1015, 0.0
        %v1020 = vadd.f32 %v1016, 0.0
        %v1021 = vadd.f32 %v1017, 0.0
        %v1022 = vadd.f32 %v1018, 0.0
        %s1023 = sld [smem:[#allocation14 + $0x80]]
        %v1024 = vstv %s1023
        %v1025 = vsub.f32 %v907, %v1024
        %v1026 = vsub.f32 %v908, %v1024
        %v1027 = vsub.f32 %v909, %v1024
        %v1028 = vsub.f32 %v910, %v1024
        %v1029 = vmul.f32 %v1025, %v1025
        %v1030 = vmul.f32 %v1026, %v1026
        %v1031 = vmul.f32 %v1027, %v1027
        %v1032 = vmul.f32 %v1028, %v1028
        %s1033 = sld [smem:[#allocation15 + $0x80]]
        %s1034 = smul.f32 %s1033, %s1033
        %v1035 = vstv %s1034
        %v1036 = vmul.f32 %v1029, %v1035
        %v1037 = vmul.f32 %v1030, %v1035
        %v1038 = vmul.f32 %v1031, %v1035
        %v1039 = vmul.f32 %v1032, %v1035
        %v1040 = vadd.f32 %v1036, 0.0
        %v1041 = vadd.f32 %v1037, 0.0
        %v1042 = vadd.f32 %v1038, 0.0
        %v1043 = vadd.f32 %v1039, 0.0
        %s1044 = sld [smem:[#allocation14 + $0x81]]
        %v1045 = vstv %s1044
        %v1046 = vsub.f32 %v933, %v1045
        %v1047 = vsub.f32 %v934, %v1045
        %v1048 = vsub.f32 %v935, %v1045
        %v1049 = vsub.f32 %v936, %v1045
        %v1050 = vmul.f32 %v1046, %v1046
        %v1051 = vmul.f32 %v1047, %v1047
        %v1052 = vmul.f32 %v1048, %v1048
        %v1053 = vmul.f32 %v1049, %v1049
        %s1054 = sld [smem:[#allocation15 + $0x81]]
        %s1055 = smul.f32 %s1054, %s1054
        %v1056 = vstv %s1055
        %v1057 = vmul.f32 %v1050, %v1056
        %v1058 = vmul.f32 %v1051, %v1056
        %v1059 = vmul.f32 %v1052, %v1056
        %v1060 = vmul.f32 %v1053, %v1056
        %v1061 = vadd.f32 %v1040, %v1057
        %v1062 = vadd.f32 %v1041, %v1058
        %v1063 = vadd.f32 %v1042, %v1059
        %v1064 = vadd.f32 %v1043, %v1060
        %v1065 = vmul.f32 %v1061, -0.5
        %v1066 = vmul.f32 %v1062, -0.5
        %v1067 = vmul.f32 %v1063, -0.5
        %v1068 = vmul.f32 %v1064, -0.5
        %v1069 = vmul.f32 %v1065, 1.442695
        %v1070 = vpow.pop %v1069
        %v1071 = vmul.f32 %v1066, 1.442695
        %v1072 = vpow.pop %v1071
        %v1073 = vmul.f32 %v1067, 1.442695
        %v1074 = vpow.pop %v1073
        %v1075 = vmul.f32 %v1068, 1.442695
        %v1076 = vpow.pop %v1075
        %v1077 = vld [vmem:[#allocation4 + $0x8] sm:$0xff]
        %v1078 = vld [vmem:[#allocation4 + $0x20] sm:$0xff]
        %v1079 = vld [vmem:[#allocation4 + $0x38] sm:$0xff]
        %v1080 = vld [vmem:[#allocation4 + $0x50] sm:$0xff]
        %1082 = vset.pattern.permute.xlu0 0
        %1083 = vperm.xlu0 %1082, %v1070
        %v1084 = vpop.permute.xlu0 %1083
        %1087 = vset.pattern.permute.xlu0 0
        %1088 = vperm.xlu0 %1087, %v1072
        %v1089 = vpop.permute.xlu0 %1088
        %1092 = vset.pattern.permute.xlu0 0
        %1093 = vperm.xlu0 %1092, %v1074
        %v1094 = vpop.permute.xlu0 %1093
        %1097 = vset.pattern.permute.xlu0 0
        %1098 = vperm.xlu0 %1097, %v1076
        %v1099 = vpop.permute.xlu0 %1098
        %v1101 = vmul.f32 %v1084, %v1077
        %v1102 = vmul.f32 %v1089, %v1078
        %v1103 = vmul.f32 %v1094, %v1079
        %v1104 = vmul.f32 %v1099, %v1080
        %v1105 = vadd.f32 %v1019, %v1101
        %v1106 = vadd.f32 %v1020, %v1102
        %v1107 = vadd.f32 %v1021, %v1103
        %v1108 = vadd.f32 %v1022, %v1104
        %s1109 = sld [smem:[#allocation14 + $0x100]]
        %v1110 = vstv %s1109
        %v1111 = vsub.f32 %v907, %v1110
        %v1112 = vsub.f32 %v908, %v1110
        %v1113 = vsub.f32 %v909, %v1110
        %v1114 = vsub.f32 %v910, %v1110
        %v1115 = vmul.f32 %v1111, %v1111
        %v1116 = vmul.f32 %v1112, %v1112
        %v1117 = vmul.f32 %v1113, %v1113
        %v1118 = vmul.f32 %v1114, %v1114
        %s1119 = sld [smem:[#allocation15 + $0x100]]
        %s1120 = smul.f32 %s1119, %s1119
        %v1121 = vstv %s1120
        %v1122 = vmul.f32 %v1115, %v1121
        %v1123 = vmul.f32 %v1116, %v1121
        %v1124 = vmul.f32 %v1117, %v1121
        %v1125 = vmul.f32 %v1118, %v1121
        %v1126 = vadd.f32 %v1122, 0.0
        %v1127 = vadd.f32 %v1123, 0.0
        %v1128 = vadd.f32 %v1124, 0.0
        %v1129 = vadd.f32 %v1125, 0.0
        %s1130 = sld [smem:[#allocation14 + $0x101]]
        %v1131 = vstv %s1130
        %v1132 = vsub.f32 %v933, %v1131
        %v1133 = vsub.f32 %v934, %v1131
        %v1134 = vsub.f32 %v935, %v1131
        %v1135 = vsub.f32 %v936, %v1131
        %v1136 = vmul.f32 %v1132, %v1132
        %v1137 = vmul.f32 %v1133, %v1133
        %v1138 = vmul.f32 %v1134, %v1134
        %v1139 = vmul.f32 %v1135, %v1135
        %s1140 = sld [smem:[#allocation15 + $0x101]]
        %s1141 = smul.f32 %s1140, %s1140
        %v1142 = vstv %s1141
        %v1143 = vmul.f32 %v1136, %v1142
        %v1144 = vmul.f32 %v1137, %v1142
        %v1145 = vmul.f32 %v1138, %v1142
        %v1146 = vmul.f32 %v1139, %v1142
        %v1147 = vadd.f32 %v1126, %v1143
        %v1148 = vadd.f32 %v1127, %v1144
        %v1149 = vadd.f32 %v1128, %v1145
        %v1150 = vadd.f32 %v1129, %v1146
        %v1151 = vmul.f32 %v1147, -0.5
        %v1152 = vmul.f32 %v1148, -0.5
        %v1153 = vmul.f32 %v1149, -0.5
        %v1154 = vmul.f32 %v1150, -0.5
        %v1155 = vmul.f32 %v1151, 1.442695
        %v1156 = vpow.pop %v1155
        %v1157 = vmul.f32 %v1152, 1.442695
        %v1158 = vpow.pop %v1157
        %v1159 = vmul.f32 %v1153, 1.442695
        %v1160 = vpow.pop %v1159
        %v1161 = vmul.f32 %v1154, 1.442695
        %v1162 = vpow.pop %v1161
        %v1163 = vld [vmem:[#allocation4 + $0x10] sm:$0xff]
        %v1164 = vld [vmem:[#allocation4 + $0x28] sm:$0xff]
        %v1165 = vld [vmem:[#allocation4 + $0x40] sm:$0xff]
        %v1166 = vld [vmem:[#allocation4 + $0x58] sm:$0xff]
        %1168 = vset.pattern.permute.xlu0 0
        %1169 = vperm.xlu0 %1168, %v1156
        %v1170 = vpop.permute.xlu0 %1169
        %1173 = vset.pattern.permute.xlu0 0
        %1174 = vperm.xlu0 %1173, %v1158
        %v1175 = vpop.permute.xlu0 %1174
        %1178 = vset.pattern.permute.xlu0 0
        %1179 = vperm.xlu0 %1178, %v1160
        %v1180 = vpop.permute.xlu0 %1179
        %1183 = vset.pattern.permute.xlu0 0
        %1184 = vperm.xlu0 %1183, %v1162
        %v1185 = vpop.permute.xlu0 %1184
        %v1187 = vmul.f32 %v1170, %v1163
        %v1188 = vmul.f32 %v1175, %v1164
        %v1189 = vmul.f32 %v1180, %v1165
        %v1190 = vmul.f32 %v1185, %v1166
        %v1191 = vadd.f32 %v1105, %v1187
        %v1192 = vadd.f32 %v1106, %v1188
        %v1193 = vadd.f32 %v1107, %v1189
        %v1194 = vadd.f32 %v1108, %v1190
        %v1195 = vlaneseq
        %v1196 = vshrl.u32 %v1195, 7
        %v1197 = vadd.s32 %v1196, 8
        %v1198 = vadd.s32 %v1196, 16
        %v1199 = vadd.s32 %v1196, 24
        %v1200 = vstv %s487
        %v1201 = vadd.s32 %v1196, %v1200
        %v1202 = vadd.s32 %v1197, %v1200
        %v1203 = vadd.s32 %v1198, %v1200
        %v1204 = vadd.s32 %v1199, %v1200
        %vm1205 = vcmp.lt.s32.totalorder %v1201, 80
        %vm1206 = vcmp.lt.s32.totalorder %v1202, 80
        %vm1207 = vcmp.lt.s32.totalorder %v1203, 80
        %vm1208 = vcmp.lt.s32.totalorder %v1204, 80
        %v1209 = vsel %vm1205, 1, 0
        %v1210 = vsel %vm1206, 1, 0
        %v1211 = vsel %vm1207, 1, 0
        %v1212 = vsel %vm1208, 1, 0
        %vm1213 = vcmp.eq.s32.totalorder %v1209, 1
        %vm1214 = vcmp.eq.s32.totalorder %v1210, 1
        %vm1215 = vcmp.eq.s32.totalorder %v1211, 1
        %vm1216 = vcmp.eq.s32.totalorder %v1212, 1
        %v1217 = vsel %vm1213, %v1191, 0.0
        %v1218 = vsel %vm1214, %v1192, 0.0
        %v1219 = vsel %vm1215, %v1193, 0.0
        %v1220 = vsel %vm1216, %v1194, 0.0
        %1221 = vst [vmem:[#allocation5] sm:$0xff] %v1217
        %1222 = vst [vmem:[#allocation5 + $0x8] sm:$0xff] %v1218
        %1223 = vst [vmem:[#allocation5 + $0x10] sm:$0xff] %v1219
        %1224 = vst [vmem:[#allocation5 + $0x18] sm:$0xff] %v1220
        loop: start=0, step=1, limit=32
        $region96: #{monet_forward_pallas.2} parent=67 // loop_pre_header
          _
        $region97: #{monet_forward_pallas.2} parent=67 // loop_header
          %s1226 = sphi 0, %s1230
          %p1227 = scmp.ge.s32.totalorder %s1226, 32
        $region98: #{monet_forward_pallas.2} parent=67 // loop_header_branch
          %1229 = sbr.rel (%p1227) target = $region102
        $region99: #{monet_forward_pallas.2} parent=67 // loop_body
          %s1231 = sadd.s32 %s487, %s1226
          %s1232 = sld [smem:[#allocation9 + %s1231]]
          %s1233 = scalar_lea.vmem [#allocation6], %s1232
          %v1234 = vld [vmem:[%s1233] sm:$0x1]
          %s1235 = scalar_lea.vmem [#allocation5], %s1226
          %v1236 = vld [vmem:[%s1235] sm:$0x1]
          %v1237 = vadd.f32 %v1234, %v1236
          %1238 = vst [vmem:[%s1233] sm:$0x1] %v1237
        $region100: #{monet_forward_pallas.2} parent=67 // loop_footer
          %s1230 = sadd.s32 1, %s1226
        $region101: #{monet_forward_pallas.2} parent=67 // loop_footer_branch
          %1225 = sbr.rel target = $region97
        $region102: #{monet_forward_pallas.2} parent=67 // loop_exit
          _
        %p1239 = scmp.eq.s32.totalorder %s38, 2
        // Predicated region
        $region103: #{monet_forward_pallas.2} parent=67 // pred_check
          %p1240 = pneg %p1239
        $region104: #{monet_forward_pallas.2} parent=67 // pred_check_branch
          %1242 = sbr.rel (%p1240) target = $region106
        $region105: #{monet_forward_pallas.2} parent=67 // pred_region
          %v1243 = vld [vmem:[#allocation6] sm:$0xff]
          %v1244 = vld [vmem:[#allocation6 + $0x8] sm:$0xff]
          %v1245 = vld [vmem:[#allocation6 + $0x10] sm:$0xff]
          %v1246 = vld [vmem:[#allocation6 + $0x18] sm:$0xff]
          %v1247 = vld [vmem:[%s12] sm:$0x1]
          %v1249 = vlaneseq
          %v1250 = vshrl.u32 %v1249, 7
          %v1251 = vsub.s32 0, %v1250
          %v1252 = vrot.slane %v1247, %v1251
          %v1254 = vmul.f32 %v1243, %v1252
          %v1255 = vmul.f32 %v1244, %v1252
          %v1256 = vmul.f32 %v1245, %v1252
          %v1257 = vmul.f32 %v1246, %v1252
          %v1258 = vld [vmem:[%s13] sm:$0x1]
          %v1260 = vlaneseq
          %v1261 = vshrl.u32 %v1260, 7
          %v1262 = vsub.s32 0, %v1261
          %v1263 = vrot.slane %v1258, %v1262
          %v1265 = vadd.f32 %v1254, %v1263
          %v1266 = vadd.f32 %v1255, %v1263
          %v1267 = vadd.f32 %v1256, %v1263
          %v1268 = vadd.f32 %v1257, %v1263
          %v1269 = vmax.f32 %v1265, 0.0
          %v1270 = vmax.f32 %v1266, 0.0
          %v1271 = vmax.f32 %v1267, 0.0
          %v1272 = vmax.f32 %v1268, 0.0
          %v1273 = vld [vmem:[#allocation2] sm:$0xff]
          %v1274 = vld [vmem:[#allocation2 + $0x8] sm:$0xff]
          %v1275 = vld [vmem:[#allocation2 + $0x10] sm:$0xff]
          %v1276 = vld [vmem:[#allocation2 + $0x18] sm:$0xff]
          %v1277 = vadd.f32 %v1273, %v1269
          %v1278 = vadd.f32 %v1274, %v1270
          %v1279 = vadd.f32 %v1275, %v1271
          %v1280 = vadd.f32 %v1276, %v1272
          %1281 = vst [vmem:[%s14] sm:$0xff] %v1277
          %1282 = vst [vmem:[%s14 + $0x8] sm:$0xff] %v1278
          %1283 = vst [vmem:[%s14 + $0x10] sm:$0xff] %v1279
          %1284 = vst [vmem:[%s14 + $0x18] sm:$0xff] %v1280
        $region106: #{monet_forward_pallas.2} parent=67 // pred_fallthru
          _
        // Predicated region
        $region107: #{monet_forward_pallas.2} parent=67 // pred_check
          %p1285 = pneg %p313
        $region108: #{monet_forward_pallas.2} parent=67 // pred_check_branch
          %1287 = sbr.rel (%p1285) target = $region110
        $region109: #{monet_forward_pallas.2} parent=67 // pred_region
          _
        $region110: #{monet_forward_pallas.2} parent=67 // pred_fallthru
          _
        // Predicated region
        $region111: #{monet_forward_pallas.2} parent=67 // pred_check
          %p1288 = pneg %p313
        $region112: #{monet_forward_pallas.2} parent=67 // pred_check_branch
          %1290 = sbr.rel (%p1288) target = $region114
        $region113: #{monet_forward_pallas.2} parent=67 // pred_region
          _
        $region114: #{monet_forward_pallas.2} parent=67 // pred_fallthru
          _
      $region68: #{monet_forward_pallas.2} parent=5 // pred_fallthru
        _
      %p1291 = scmp.le.s32.totalorder 2, %s33
      // Predicated region
      $region115: #{monet_forward_pallas.2} parent=5 // pred_check
        %p1292 = pneg %p1291
      $region116: #{monet_forward_pallas.2} parent=5 // pred_check_branch
        %1294 = sbr.rel (%p1292) target = $region118
      $region117: #{monet_forward_pallas.2} parent=5 // pred_region
        %s1295 = ssub.s32 %s33, 2
      $region118: #{monet_forward_pallas.2} parent=5 // pred_fallthru
        _
    $region6: #{monet_forward_pallas.2} parent=1 // loop_footer
      %s37 = sadd.s32 1, %s33
    $region7: #{monet_forward_pallas.2} parent=1 // loop_footer_branch
      %32 = sbr.rel target = $region3
    $region8: #{monet_forward_pallas.2} parent=1 // loop_exit
      _
    %1296 = vsyncpa [#allocation11], 1
    %s1297 = scalar_lea.sflag [#allocation11], 1
    %1298 = vsyncpa %s1297, 1
    %1299 = vsyncpa [#allocation13], 1
    %1300 = vsyncpa [#allocation16], 1

// kernel: monet_forward_pallas.3
$region0: #{monet_forward_pallas.3}
  #allocation0 [shape = 'u32[]', space=smem, size = 0x4, offset = 0x4, fixed_abs, tag = 'smem constant byte address 0x4 - core index']
  #allocation1 [shape = 'u32[144,128]{1,0:T(1,128)}', space=vmem, size = 0x12000, scoped, tag = 'internal scratch']
  #allocation2 [shape = 'f32[32,128]{1,0:T(8,128)}', space=vmem, size = 0x4000, scoped, tag = 'scratch operand']
  #allocation3 [shape = 'f32[32,384]{1,0:T(8,128)}', space=vmem, size = 0xc000, scoped, tag = 'scratch operand']
  #allocation4 [shape = 'f32[32,384]{1,0:T(8,128)}', space=vmem, size = 0xc000, scoped, tag = 'scratch operand']
  #allocation5 [shape = 'f32[32,128]{1,0:T(8,128)}', space=vmem, size = 0x4000, scoped, tag = 'scratch operand']
  #allocation6 [shape = 'f32[32,128]{1,0:T(8,128)}', space=vmem, size = 0x4000, scoped, tag = 'scratch operand']
  #allocation7 [shape = 's32[1]{0}', space=sflag, size = 0x4, scoped, tag = 'scoped memory for monet_forward_pallas.3']
  #allocation8 [shape = 'u8[512]{0}', space=smem, size = 0x200, scoped, tag = 'prefetched SMEM operand 0']
  #allocation9 [shape = 'u8[512]{0}', space=smem, size = 0x200, scoped, tag = 'prefetched SMEM operand 1']
  %s0 = inlined_call_operand.vmem [shape: s32[96], index: 0, kind: input, shape index: {}]
  %s1 = inlined_call_operand.vmem [shape: s32[96], index: 1, kind: input, shape index: {}]
  %s2 = inlined_call_operand.vmem [shape: f32[32,128], index: 2, kind: input, shape index: {}]
  %s3 = inlined_call_operand.vmem [shape: f32[128,128], index: 3, kind: input, shape index: {}]
  %s4 = inlined_call_operand.vmem [shape: f32[1,128], index: 4, kind: input, shape index: {}]
  %s5 = inlined_call_operand.vmem [shape: f32[128,384], index: 5, kind: input, shape index: {}]
  %s6 = inlined_call_operand.vmem [shape: f32[96,1], index: 6, kind: input, shape index: {}]
  %s7 = inlined_call_operand.vmem [shape: f32[96,1], index: 7, kind: input, shape index: {}]
  %s8 = inlined_call_operand.vmem [shape: f32[2,2], index: 8, kind: input, shape index: {}]
  %s9 = inlined_call_operand.vmem [shape: f32[1,2], index: 9, kind: input, shape index: {}]
  %s10 = inlined_call_operand.vmem [shape: f32[3,2], index: 10, kind: input, shape index: {}]
  %s11 = inlined_call_operand.vmem [shape: f32[3,2], index: 11, kind: input, shape index: {}]
  %s12 = inlined_call_operand.vmem [shape: f32[1,128], index: 12, kind: input, shape index: {}]
  %s13 = inlined_call_operand.vmem [shape: f32[1,128], index: 13, kind: input, shape index: {}]
  %s14 = inlined_call_operand.vmem [shape: f32[128,128], index: 14, kind: input, shape index: {}]
  %s15 = inlined_call_operand.vmem [shape: f32[1,128], index: 15, kind: input, shape index: {}]
  %s16 = inlined_call_operand.vmem [shape: f32[128,128], index: 16, kind: input, shape index: {}]
  %s17 = inlined_call_operand.vmem [shape: f32[1,128], index: 17, kind: input, shape index: {}]
  %s18 = inlined_call_operand.vmem [shape: f32[128,128], index: 18, kind: input, shape index: {}]
  %s19 = inlined_call_operand.vmem [shape: f32[1,128], index: 19, kind: input, shape index: {}]
  %s20 = inlined_call_operand.vmem [shape: f32[32,128], index: 20, kind: output, shape index: {}]
  %s21 = sld [smem:[#allocation0]]
  $region143: #{monet_forward_pallas.3} parent=0
    _
  %s23 = ssub.s32 1, %s21
  %s24 = scalar_select 0, %s23, %s21
  %s25 = sshll.u32 %s0, 4
  %s26 = int_to_ptr.vmem [resolvable:$true] %s25
  %28 = dma.vmem_to_smem %s26, 16, [#allocation8], [#allocation7]
  %s29 = sshll.u32 %s1, 4
  %s30 = int_to_ptr.vmem [resolvable:$true] %s29
  %32 = dma.vmem_to_smem %s30, 16, [#allocation9], [#allocation7]
  %33 = dma.done [#allocation7], 32
  %34 = sfence
  $region1: #{monet_forward_pallas.3} parent=0
    #allocation10 [shape = 'u8[1024]{0}', space=smem, size = 0x400, scoped, tag = 'input window, operand 8, single buffered']
    #allocation11 [shape = 's32[2]{0}', space=sflag, size = 0x8, scoped, tag = 'scoped memory for monet_forward_pallas.3']
    #allocation12 [shape = 'u8[512]{0}', space=smem, size = 0x200, scoped, tag = 'input window, operand 9, single buffered']
    #allocation13 [shape = 's32[1]{0}', space=sflag, size = 0x4, scoped, tag = 'scoped memory for monet_forward_pallas.3']
    #allocation14 [shape = 'u8[2048]{0}', space=smem, size = 0x800, scoped, tag = 'input window, operand 10, single buffered']
    #allocation15 [shape = 'u8[2048]{0}', space=smem, size = 0x800, scoped, tag = 'input window, operand 11, single buffered']
    #allocation16 [shape = 's32[1]{0}', space=sflag, size = 0x4, scoped, tag = 'scoped memory for monet_forward_pallas.3']
    %35 = vsyncpa [#allocation11], 0
    %36 = vsyncpa [#allocation13], 0
    %37 = vsyncpa [#allocation16], 0
    loop: start=0, step=1, limit=5
    $region2: #{monet_forward_pallas.3} parent=1 // loop_pre_header
      _
    $region3: #{monet_forward_pallas.3} parent=1 // loop_header
      %s39 = sphi 0, %s43
      %p40 = scmp.ge.s32.totalorder %s39, 5
      %s47 = sphi 0, %s47
      %s49 = sphi 0, %s47
      %s50 = sphi 0, %s49
      %s64 = sphi 0, %s50
      %s68 = sphi 0, %s68
      %s70 = sphi 0, %s68
      %s71 = sphi 0, %s70
      %s85 = sphi 0, %s71
      %s89 = sphi 0, %s89
      %s91 = sphi 0, %s89
      %s92 = sphi 0, %s91
      %s106 = sphi 0, %s92
      %s110 = sphi 0, %s110
      %s112 = sphi 0, %s110
      %s113 = sphi 0, %s112
      %s127 = sphi 0, %s113
      %s133 = sphi 0, %s135
      %s136 = sphi 0, %s133
      %s137 = sphi 0, %s136
      %s153 = sphi 0, %s137
      %s159 = sphi 0, %s161
      %s162 = sphi 0, %s159
      %s163 = sphi 0, %s162
      %s179 = sphi 0, %s163
      %s183 = sphi 0, %s183
      %s185 = sphi 0, %s183
      %s186 = sphi 0, %s185
      %s200 = sphi 0, %s186
      %s204 = sphi 0, %s204
      %s206 = sphi 0, %s204
      %s207 = sphi 0, %s206
      %s221 = sphi 0, %s207
      %s225 = sphi 0, %s225
      %s227 = sphi 0, %s225
      %s228 = sphi 0, %s227
      %s242 = sphi 0, %s228
      %s246 = sphi 0, %s246
      %s248 = sphi 0, %s246
      %s249 = sphi 0, %s248
      %s263 = sphi 0, %s249
      %s267 = sphi 0, %s267
      %s269 = sphi 0, %s267
      %s270 = sphi 0, %s269
      %s284 = sphi 0, %s270
      %s288 = sphi 0, %s288
      %s290 = sphi 0, %s288
      %s291 = sphi 0, %s290
      %s305 = sphi 0, %s291
      %s309 = sphi 0, %s309
      %s311 = sphi 0, %s309
      %s312 = sphi 0, %s311
      %s326 = sphi 0, %s312
      %s330 = sphi 0, %s330
      %s332 = sphi 0, %s330
      %s333 = sphi 0, %s332
      %s347 = sphi 0, %s333
      %s351 = sphi 0, %s351
      %s353 = sphi 0, %s351
      %s354 = sphi 0, %s353
      %s368 = sphi 0, %s354
      %s372 = sphi 0, %s372
      %s374 = sphi 0, %s372
      %s375 = sphi 0, %s374
      %s389 = sphi 0, %s375
      %s393 = sphi 0, %s393
      %s395 = sphi 0, %s393
      %s396 = sphi 0, %s395
      %s410 = sphi 0, %s396
      %s414 = sphi 0, %s414
      %s416 = sphi 0, %s414
      %s417 = sphi 0, %s416
      %s431 = sphi 0, %s417
      %s435 = sphi 0, %s435
      %s437 = sphi 0, %s435
      %s438 = sphi 0, %s437
      %s452 = sphi 0, %s438
    $region4: #{monet_forward_pallas.3} parent=1 // loop_header_branch
      %42 = sbr.rel (%p40) target = $region8
    $region5: #{monet_forward_pallas.3} parent=1 // loop_body
      %s44 = ssub.s32 %s39, 1
      %s45 = ssub.s32 %s39, 2
      %s46 = sadd.s32 %s39, 1
      %s48 = sadd.s32 %s47, 1
      %p51 = scmp.eq.s32.totalorder %s39, 2
      %p52 = scmp.ne.s32.totalorder %s47, %s49
      %p53 = scmp.eq.s32.totalorder %s39, 0
      %p54 = por %p52, %p53
      %p55 = scmp.ne.s32.totalorder %s47, %s49
      %p56 = scmp.eq.s32.totalorder %s44, 2
      %p57 = por %p55, %p56
      %p58 = scmp.ne.s32.totalorder %s49, %s50
      %p59 = scmp.eq.s32.totalorder %s44, 0
      %p60 = por %p58, %p59
      %p61 = scmp.ne.s32.totalorder %s49, %s50
      %p62 = scmp.eq.s32.totalorder %s45, 2
      %p63 = por %p61, %p62
      %p65 = scmp.ne.s32.totalorder %s50, %s64
      %p66 = scmp.eq.s32.totalorder %s45, 0
      %p67 = por %p65, %p66
      %s69 = sadd.s32 %s68, 1
      %p72 = scmp.eq.s32.totalorder %s39, 2
      %p73 = scmp.ne.s32.totalorder %s68, %s70
      %p74 = scmp.eq.s32.totalorder %s39, 0
      %p75 = por %p73, %p74
      %p76 = scmp.ne.s32.totalorder %s68, %s70
      %p77 = scmp.eq.s32.totalorder %s44, 2
      %p78 = por %p76, %p77
      %p79 = scmp.ne.s32.totalorder %s70, %s71
      %p80 = scmp.eq.s32.totalorder %s44, 0
      %p81 = por %p79, %p80
      %p82 = scmp.ne.s32.totalorder %s70, %s71
      %p83 = scmp.eq.s32.totalorder %s45, 2
      %p84 = por %p82, %p83
      %p86 = scmp.ne.s32.totalorder %s71, %s85
      %p87 = scmp.eq.s32.totalorder %s45, 0
      %p88 = por %p86, %p87
      %s90 = sadd.s32 %s89, 1
      %p93 = scmp.eq.s32.totalorder %s39, 2
      %p94 = scmp.ne.s32.totalorder %s89, %s91
      %p95 = scmp.eq.s32.totalorder %s39, 0
      %p96 = por %p94, %p95
      %p97 = scmp.ne.s32.totalorder %s89, %s91
      %p98 = scmp.eq.s32.totalorder %s44, 2
      %p99 = por %p97, %p98
      %p100 = scmp.ne.s32.totalorder %s91, %s92
      %p101 = scmp.eq.s32.totalorder %s44, 0
      %p102 = por %p100, %p101
      %p103 = scmp.ne.s32.totalorder %s91, %s92
      %p104 = scmp.eq.s32.totalorder %s45, 2
      %p105 = por %p103, %p104
      %p107 = scmp.ne.s32.totalorder %s92, %s106
      %p108 = scmp.eq.s32.totalorder %s45, 0
      %p109 = por %p107, %p108
      %s111 = sadd.s32 %s110, 1
      %p114 = scmp.eq.s32.totalorder %s39, 2
      %p115 = scmp.ne.s32.totalorder %s110, %s112
      %p116 = scmp.eq.s32.totalorder %s39, 0
      %p117 = por %p115, %p116
      %p118 = scmp.ne.s32.totalorder %s110, %s112
      %p119 = scmp.eq.s32.totalorder %s44, 2
      %p120 = por %p118, %p119
      %p121 = scmp.ne.s32.totalorder %s112, %s113
      %p122 = scmp.eq.s32.totalorder %s44, 0
      %p123 = por %p121, %p122
      %p124 = scmp.ne.s32.totalorder %s112, %s113
      %p125 = scmp.eq.s32.totalorder %s45, 2
      %p126 = por %p124, %p125
      %p128 = scmp.ne.s32.totalorder %s113, %s127
      %p129 = scmp.eq.s32.totalorder %s45, 0
      %p130 = por %p128, %p129
      %s131 = ssub.s32 %s39, %s46
      %p132 = scmp.eq.s32.totalorder %s131, 0
      %s134 = sadd.s32 %s133, 1
      %s135 = scalar_select %p132, %s133, %s134
      %p138 = pneg %p132
      %p139 = scmp.eq.s32.totalorder %s39, 2
      %p140 = por %p138, %p139
      %p141 = scmp.ne.s32.totalorder %s133, %s136
      %p142 = scmp.eq.s32.totalorder %s39, 0
      %p143 = por %p141, %p142
      %p144 = scmp.ne.s32.totalorder %s133, %s136
      %p145 = scmp.eq.s32.totalorder %s44, 2
      %p146 = por %p144, %p145
      %p147 = scmp.ne.s32.totalorder %s136, %s137
      %p148 = scmp.eq.s32.totalorder %s44, 0
      %p149 = por %p147, %p148
      %p150 = scmp.ne.s32.totalorder %s136, %s137
      %p151 = scmp.eq.s32.totalorder %s45, 2
      %p152 = por %p150, %p151
      %p154 = scmp.ne.s32.totalorder %s137, %s153
      %p155 = scmp.eq.s32.totalorder %s45, 0
      %p156 = por %p154, %p155
      %s157 = ssub.s32 %s39, %s46
      %p158 = scmp.eq.s32.totalorder %s157, 0
      %s160 = sadd.s32 %s159, 1
      %s161 = scalar_select %p158, %s159, %s160
      %p164 = pneg %p158
      %p165 = scmp.eq.s32.totalorder %s39, 2
      %p166 = por %p164, %p165
      %p167 = scmp.ne.s32.totalorder %s159, %s162
      %p168 = scmp.eq.s32.totalorder %s39, 0
      %p169 = por %p167, %p168
      %p170 = scmp.ne.s32.totalorder %s159, %s162
      %p171 = scmp.eq.s32.totalorder %s44, 2
      %p172 = por %p170, %p171
      %p173 = scmp.ne.s32.totalorder %s162, %s163
      %p174 = scmp.eq.s32.totalorder %s44, 0
      %p175 = por %p173, %p174
      %p176 = scmp.ne.s32.totalorder %s162, %s163
      %p177 = scmp.eq.s32.totalorder %s45, 2
      %p178 = por %p176, %p177
      %p180 = scmp.ne.s32.totalorder %s163, %s179
      %p181 = scmp.eq.s32.totalorder %s45, 0
      %p182 = por %p180, %p181
      %s184 = sadd.s32 %s183, 1
      %p187 = scmp.eq.s32.totalorder %s39, 2
      %p188 = scmp.ne.s32.totalorder %s183, %s185
      %p189 = scmp.eq.s32.totalorder %s39, 0
      %p190 = por %p188, %p189
      %p191 = scmp.ne.s32.totalorder %s183, %s185
      %p192 = scmp.eq.s32.totalorder %s44, 2
      %p193 = por %p191, %p192
      %p194 = scmp.ne.s32.totalorder %s185, %s186
      %p195 = scmp.eq.s32.totalorder %s44, 0
      %p196 = por %p194, %p195
      %p197 = scmp.ne.s32.totalorder %s185, %s186
      %p198 = scmp.eq.s32.totalorder %s45, 2
      %p199 = por %p197, %p198
      %p201 = scmp.ne.s32.totalorder %s186, %s200
      %p202 = scmp.eq.s32.totalorder %s45, 0
      %p203 = por %p201, %p202
      %s205 = sadd.s32 %s204, 1
      %p208 = scmp.eq.s32.totalorder %s39, 2
      %p209 = scmp.ne.s32.totalorder %s204, %s206
      %p210 = scmp.eq.s32.totalorder %s39, 0
      %p211 = por %p209, %p210
      %p212 = scmp.ne.s32.totalorder %s204, %s206
      %p213 = scmp.eq.s32.totalorder %s44, 2
      %p214 = por %p212, %p213
      %p215 = scmp.ne.s32.totalorder %s206, %s207
      %p216 = scmp.eq.s32.totalorder %s44, 0
      %p217 = por %p215, %p216
      %p218 = scmp.ne.s32.totalorder %s206, %s207
      %p219 = scmp.eq.s32.totalorder %s45, 2
      %p220 = por %p218, %p219
      %p222 = scmp.ne.s32.totalorder %s207, %s221
      %p223 = scmp.eq.s32.totalorder %s45, 0
      %p224 = por %p222, %p223
      %s226 = sadd.s32 %s225, 1
      %p229 = scmp.eq.s32.totalorder %s39, 2
      %p230 = scmp.ne.s32.totalorder %s225, %s227
      %p231 = scmp.eq.s32.totalorder %s39, 0
      %p232 = por %p230, %p231
      %p233 = scmp.ne.s32.totalorder %s225, %s227
      %p234 = scmp.eq.s32.totalorder %s44, 2
      %p235 = por %p233, %p234
      %p236 = scmp.ne.s32.totalorder %s227, %s228
      %p237 = scmp.eq.s32.totalorder %s44, 0
      %p238 = por %p236, %p237
      %p239 = scmp.ne.s32.totalorder %s227, %s228
      %p240 = scmp.eq.s32.totalorder %s45, 2
      %p241 = por %p239, %p240
      %p243 = scmp.ne.s32.totalorder %s228, %s242
      %p244 = scmp.eq.s32.totalorder %s45, 0
      %p245 = por %p243, %p244
      %s247 = sadd.s32 %s246, 1
      %p250 = scmp.eq.s32.totalorder %s39, 2
      %p251 = scmp.ne.s32.totalorder %s246, %s248
      %p252 = scmp.eq.s32.totalorder %s39, 0
      %p253 = por %p251, %p252
      %p254 = scmp.ne.s32.totalorder %s246, %s248
      %p255 = scmp.eq.s32.totalorder %s44, 2
      %p256 = por %p254, %p255
      %p257 = scmp.ne.s32.totalorder %s248, %s249
      %p258 = scmp.eq.s32.totalorder %s44, 0
      %p259 = por %p257, %p258
      %p260 = scmp.ne.s32.totalorder %s248, %s249
      %p261 = scmp.eq.s32.totalorder %s45, 2
      %p262 = por %p260, %p261
      %p264 = scmp.ne.s32.totalorder %s249, %s263
      %p265 = scmp.eq.s32.totalorder %s45, 0
      %p266 = por %p264, %p265
      %s268 = sadd.s32 %s267, 1
      %p271 = scmp.eq.s32.totalorder %s39, 2
      %p272 = scmp.ne.s32.totalorder %s267, %s269
      %p273 = scmp.eq.s32.totalorder %s39, 0
      %p274 = por %p272, %p273
      %p275 = scmp.ne.s32.totalorder %s267, %s269
      %p276 = scmp.eq.s32.totalorder %s44, 2
      %p277 = por %p275, %p276
      %p278 = scmp.ne.s32.totalorder %s269, %s270
      %p279 = scmp.eq.s32.totalorder %s44, 0
      %p280 = por %p278, %p279
      %p281 = scmp.ne.s32.totalorder %s269, %s270
      %p282 = scmp.eq.s32.totalorder %s45, 2
      %p283 = por %p281, %p282
      %p285 = scmp.ne.s32.totalorder %s270, %s284
      %p286 = scmp.eq.s32.totalorder %s45, 0
      %p287 = por %p285, %p286
      %s289 = sadd.s32 %s288, 1
      %p292 = scmp.eq.s32.totalorder %s39, 2
      %p293 = scmp.ne.s32.totalorder %s288, %s290
      %p294 = scmp.eq.s32.totalorder %s39, 0
      %p295 = por %p293, %p294
      %p296 = scmp.ne.s32.totalorder %s288, %s290
      %p297 = scmp.eq.s32.totalorder %s44, 2
      %p298 = por %p296, %p297
      %p299 = scmp.ne.s32.totalorder %s290, %s291
      %p300 = scmp.eq.s32.totalorder %s44, 0
      %p301 = por %p299, %p300
      %p302 = scmp.ne.s32.totalorder %s290, %s291
      %p303 = scmp.eq.s32.totalorder %s45, 2
      %p304 = por %p302, %p303
      %p306 = scmp.ne.s32.totalorder %s291, %s305
      %p307 = scmp.eq.s32.totalorder %s45, 0
      %p308 = por %p306, %p307
      %s310 = sadd.s32 %s309, 1
      %p313 = scmp.eq.s32.totalorder %s39, 2
      %p314 = scmp.ne.s32.totalorder %s309, %s311
      %p315 = scmp.eq.s32.totalorder %s39, 0
      %p316 = por %p314, %p315
      %p317 = scmp.ne.s32.totalorder %s309, %s311
      %p318 = scmp.eq.s32.totalorder %s44, 2
      %p319 = por %p317, %p318
      %p320 = scmp.ne.s32.totalorder %s311, %s312
      %p321 = scmp.eq.s32.totalorder %s44, 0
      %p322 = por %p320, %p321
      %p323 = scmp.ne.s32.totalorder %s311, %s312
      %p324 = scmp.eq.s32.totalorder %s45, 2
      %p325 = por %p323, %p324
      %p327 = scmp.ne.s32.totalorder %s312, %s326
      %p328 = scmp.eq.s32.totalorder %s45, 0
      %p329 = por %p327, %p328
      %s331 = sadd.s32 %s330, 1
      %p334 = scmp.eq.s32.totalorder %s39, 2
      %p335 = scmp.ne.s32.totalorder %s330, %s332
      %p336 = scmp.eq.s32.totalorder %s39, 0
      %p337 = por %p335, %p336
      %p338 = scmp.ne.s32.totalorder %s330, %s332
      %p339 = scmp.eq.s32.totalorder %s44, 2
      %p340 = por %p338, %p339
      %p341 = scmp.ne.s32.totalorder %s332, %s333
      %p342 = scmp.eq.s32.totalorder %s44, 0
      %p343 = por %p341, %p342
      %p344 = scmp.ne.s32.totalorder %s332, %s333
      %p345 = scmp.eq.s32.totalorder %s45, 2
      %p346 = por %p344, %p345
      %p348 = scmp.ne.s32.totalorder %s333, %s347
      %p349 = scmp.eq.s32.totalorder %s45, 0
      %p350 = por %p348, %p349
      %s352 = sadd.s32 %s351, 1
      %p355 = scmp.eq.s32.totalorder %s39, 2
      %p356 = scmp.ne.s32.totalorder %s351, %s353
      %p357 = scmp.eq.s32.totalorder %s39, 0
      %p358 = por %p356, %p357
      %p359 = scmp.ne.s32.totalorder %s351, %s353
      %p360 = scmp.eq.s32.totalorder %s44, 2
      %p361 = por %p359, %p360
      %p362 = scmp.ne.s32.totalorder %s353, %s354
      %p363 = scmp.eq.s32.totalorder %s44, 0
      %p364 = por %p362, %p363
      %p365 = scmp.ne.s32.totalorder %s353, %s354
      %p366 = scmp.eq.s32.totalorder %s45, 2
      %p367 = por %p365, %p366
      %p369 = scmp.ne.s32.totalorder %s354, %s368
      %p370 = scmp.eq.s32.totalorder %s45, 0
      %p371 = por %p369, %p370
      %s373 = sadd.s32 %s372, 1
      %p376 = scmp.eq.s32.totalorder %s39, 2
      %p377 = scmp.ne.s32.totalorder %s372, %s374
      %p378 = scmp.eq.s32.totalorder %s39, 0
      %p379 = por %p377, %p378
      %p380 = scmp.ne.s32.totalorder %s372, %s374
      %p381 = scmp.eq.s32.totalorder %s44, 2
      %p382 = por %p380, %p381
      %p383 = scmp.ne.s32.totalorder %s374, %s375
      %p384 = scmp.eq.s32.totalorder %s44, 0
      %p385 = por %p383, %p384
      %p386 = scmp.ne.s32.totalorder %s374, %s375
      %p387 = scmp.eq.s32.totalorder %s45, 2
      %p388 = por %p386, %p387
      %p390 = scmp.ne.s32.totalorder %s375, %s389
      %p391 = scmp.eq.s32.totalorder %s45, 0
      %p392 = por %p390, %p391
      %s394 = sadd.s32 %s393, 1
      %p397 = scmp.eq.s32.totalorder %s39, 2
      %p398 = scmp.ne.s32.totalorder %s393, %s395
      %p399 = scmp.eq.s32.totalorder %s39, 0
      %p400 = por %p398, %p399
      %p401 = scmp.ne.s32.totalorder %s393, %s395
      %p402 = scmp.eq.s32.totalorder %s44, 2
      %p403 = por %p401, %p402
      %p404 = scmp.ne.s32.totalorder %s395, %s396
      %p405 = scmp.eq.s32.totalorder %s44, 0
      %p406 = por %p404, %p405
      %p407 = scmp.ne.s32.totalorder %s395, %s396
      %p408 = scmp.eq.s32.totalorder %s45, 2
      %p409 = por %p407, %p408
      %p411 = scmp.ne.s32.totalorder %s396, %s410
      %p412 = scmp.eq.s32.totalorder %s45, 0
      %p413 = por %p411, %p412
      %s415 = sadd.s32 %s414, 1
      %p418 = scmp.eq.s32.totalorder %s39, 2
      %p419 = scmp.ne.s32.totalorder %s414, %s416
      %p420 = scmp.eq.s32.totalorder %s39, 0
      %p421 = por %p419, %p420
      %p422 = scmp.ne.s32.totalorder %s414, %s416
      %p423 = scmp.eq.s32.totalorder %s44, 2
      %p424 = por %p422, %p423
      %p425 = scmp.ne.s32.totalorder %s416, %s417
      %p426 = scmp.eq.s32.totalorder %s44, 0
      %p427 = por %p425, %p426
      %p428 = scmp.ne.s32.totalorder %s416, %s417
      %p429 = scmp.eq.s32.totalorder %s45, 2
      %p430 = por %p428, %p429
      %p432 = scmp.ne.s32.totalorder %s417, %s431
      %p433 = scmp.eq.s32.totalorder %s45, 0
      %p434 = por %p432, %p433
      %s436 = sadd.s32 %s435, 1
      %p439 = scmp.eq.s32.totalorder %s39, 2
      %p440 = scmp.ne.s32.totalorder %s435, %s437
      %p441 = scmp.eq.s32.totalorder %s39, 0
      %p442 = por %p440, %p441
      %p443 = scmp.ne.s32.totalorder %s435, %s437
      %p444 = scmp.eq.s32.totalorder %s44, 2
      %p445 = por %p443, %p444
      %p446 = scmp.ne.s32.totalorder %s437, %s438
      %p447 = scmp.eq.s32.totalorder %s44, 0
      %p448 = por %p446, %p447
      %p449 = scmp.ne.s32.totalorder %s437, %s438
      %p450 = scmp.eq.s32.totalorder %s45, 2
      %p451 = por %p449, %p450
      %p453 = scmp.ne.s32.totalorder %s438, %s452
      %p454 = scmp.eq.s32.totalorder %s45, 0
      %p455 = por %p453, %p454
      %p456 = scmp.le.s32.totalorder 1, %s39
      %p457 = scmp.lt.s32.totalorder %s39, 4
      %p458 = pnand %p456, %p457
      %p459 = pneg %p458
      // Predicated region
      $region9: #{monet_forward_pallas.3} parent=5 // pred_check
        _
      $region10: #{monet_forward_pallas.3} parent=5 // pred_check_branch
        %461 = sbr.rel (%p458) target = $region12
      $region11: #{monet_forward_pallas.3} parent=5 // pred_region
        %s462 = ssub.s32 %s39, 1
        // Predicated region
        $region13: #{monet_forward_pallas.3} parent=11 // pred_check
          %p463 = pneg %p60
        $region14: #{monet_forward_pallas.3} parent=11 // pred_check_branch
          %465 = sbr.rel (%p463) target = $region16
        $region15: #{monet_forward_pallas.3} parent=11 // pred_region
          _
        $region16: #{monet_forward_pallas.3} parent=11 // pred_fallthru
          _
        // Predicated region
        $region17: #{monet_forward_pallas.3} parent=11 // pred_check
          %p466 = pneg %p81
        $region18: #{monet_forward_pallas.3} parent=11 // pred_check_branch
          %468 = sbr.rel (%p466) target = $region20
        $region19: #{monet_forward_pallas.3} parent=11 // pred_region
          _
        $region20: #{monet_forward_pallas.3} parent=11 // pred_fallthru
          _
        // Predicated region
        $region21: #{monet_forward_pallas.3} parent=11 // pred_check
          %p469 = pneg %p102
        $region22: #{monet_forward_pallas.3} parent=11 // pred_check_branch
          %471 = sbr.rel (%p469) target = $region24
        $region23: #{monet_forward_pallas.3} parent=11 // pred_region
          _
        $region24: #{monet_forward_pallas.3} parent=11 // pred_fallthru
          _
        // Predicated region
        $region25: #{monet_forward_pallas.3} parent=11 // pred_check
          %p472 = pneg %p123
        $region26: #{monet_forward_pallas.3} parent=11 // pred_check_branch
          %474 = sbr.rel (%p472) target = $region28
        $region27: #{monet_forward_pallas.3} parent=11 // pred_region
          _
        $region28: #{monet_forward_pallas.3} parent=11 // pred_fallthru
          _
        // Predicated region
        $region29: #{monet_forward_pallas.3} parent=11 // pred_check
          %p475 = pneg %p196
        $region30: #{monet_forward_pallas.3} parent=11 // pred_check_branch
          %477 = sbr.rel (%p475) target = $region32
        $region31: #{monet_forward_pallas.3} parent=11 // pred_region
          %s479 = ssub.s32 32, 32
          %480 = vsyncadd [#allocation11], %s479
          %s482 = sshll.u32 %s8, 4
          %s483 = int_to_ptr.vmem [resolvable:$true] %s482
          %485 = dma.vmem_to_smem %s483, 32, [#allocation10], [#allocation11]
        $region32: #{monet_forward_pallas.3} parent=11 // pred_fallthru
          _
        // Predicated region
        $region33: #{monet_forward_pallas.3} parent=11 // pred_check
          %p486 = pneg %p217
        $region34: #{monet_forward_pallas.3} parent=11 // pred_check_branch
          %488 = sbr.rel (%p486) target = $region36
        $region35: #{monet_forward_pallas.3} parent=11 // pred_region
          %s490 = ssub.s32 16, 16
          %491 = vsyncadd [#allocation13], %s490
          %s493 = sshll.u32 %s9, 4
          %s494 = int_to_ptr.vmem [resolvable:$true] %s493
          %496 = dma.vmem_to_smem %s494, 16, [#allocation12], [#allocation13]
        $region36: #{monet_forward_pallas.3} parent=11 // pred_fallthru
          _
        // Predicated region
        $region37: #{monet_forward_pallas.3} parent=11 // pred_check
          %p497 = pneg %p238
        $region38: #{monet_forward_pallas.3} parent=11 // pred_check_branch
          %499 = sbr.rel (%p497) target = $region40
        $region39: #{monet_forward_pallas.3} parent=11 // pred_region
          %s501 = ssub.s32 64, 64
          %502 = vsyncadd [#allocation13], %s501
          %s504 = sshll.u32 %s10, 4
          %s505 = int_to_ptr.vmem [resolvable:$true] %s504
          %507 = dma.vmem_to_smem %s505, 64, [#allocation14], [#allocation13]
        $region40: #{monet_forward_pallas.3} parent=11 // pred_fallthru
          _
        // Predicated region
        $region41: #{monet_forward_pallas.3} parent=11 // pred_check
          %p508 = pneg %p259
        $region42: #{monet_forward_pallas.3} parent=11 // pred_check_branch
          %510 = sbr.rel (%p508) target = $region44
        $region43: #{monet_forward_pallas.3} parent=11 // pred_region
          %s512 = ssub.s32 64, 64
          %513 = vsyncadd [#allocation16], %s512
          %s515 = sshll.u32 %s11, 4
          %s516 = int_to_ptr.vmem [resolvable:$true] %s515
          %518 = dma.vmem_to_smem %s516, 64, [#allocation15], [#allocation16]
        $region44: #{monet_forward_pallas.3} parent=11 // pred_fallthru
          _
        // Predicated region
        $region45: #{monet_forward_pallas.3} parent=11 // pred_check
          %p519 = pneg %p280
        $region46: #{monet_forward_pallas.3} parent=11 // pred_check_branch
          %521 = sbr.rel (%p519) target = $region48
        $region47: #{monet_forward_pallas.3} parent=11 // pred_region
          _
        $region48: #{monet_forward_pallas.3} parent=11 // pred_fallthru
          _
        // Predicated region
        $region49: #{monet_forward_pallas.3} parent=11 // pred_check
          %p522 = pneg %p301
        $region50: #{monet_forward_pallas.3} parent=11 // pred_check_branch
          %524 = sbr.rel (%p522) target = $region52
        $region51: #{monet_forward_pallas.3} parent=11 // pred_region
          _
        $region52: #{monet_forward_pallas.3} parent=11 // pred_fallthru
          _
        // Predicated region
        $region53: #{monet_forward_pallas.3} parent=11 // pred_check
          %p525 = pneg %p322
        $region54: #{monet_forward_pallas.3} parent=11 // pred_check_branch
          %527 = sbr.rel (%p525) target = $region56
        $region55: #{monet_forward_pallas.3} parent=11 // pred_region
          _
        $region56: #{monet_forward_pallas.3} parent=11 // pred_fallthru
          _
        // Predicated region
        $region57: #{monet_forward_pallas.3} parent=11 // pred_check
          %p528 = pneg %p343
        $region58: #{monet_forward_pallas.3} parent=11 // pred_check_branch
          %530 = sbr.rel (%p528) target = $region60
        $region59: #{monet_forward_pallas.3} parent=11 // pred_region
          _
        $region60: #{monet_forward_pallas.3} parent=11 // pred_fallthru
          _
        // Predicated region
        $region61: #{monet_forward_pallas.3} parent=11 // pred_check
          %p531 = pneg %p364
        $region62: #{monet_forward_pallas.3} parent=11 // pred_check_branch
          %533 = sbr.rel (%p531) target = $region64
        $region63: #{monet_forward_pallas.3} parent=11 // pred_region
          _
        $region64: #{monet_forward_pallas.3} parent=11 // pred_fallthru
          _
        // Predicated region
        $region65: #{monet_forward_pallas.3} parent=11 // pred_check
          %p534 = pneg %p385
        $region66: #{monet_forward_pallas.3} parent=11 // pred_check_branch
          %536 = sbr.rel (%p534) target = $region68
        $region67: #{monet_forward_pallas.3} parent=11 // pred_region
          _
        $region68: #{monet_forward_pallas.3} parent=11 // pred_fallthru
          _
        // Predicated region
        $region69: #{monet_forward_pallas.3} parent=11 // pred_check
          %p537 = pneg %p406
        $region70: #{monet_forward_pallas.3} parent=11 // pred_check_branch
          %539 = sbr.rel (%p537) target = $region72
        $region71: #{monet_forward_pallas.3} parent=11 // pred_region
          _
        $region72: #{monet_forward_pallas.3} parent=11 // pred_fallthru
          _
        // Predicated region
        $region73: #{monet_forward_pallas.3} parent=11 // pred_check
          %p540 = pneg %p427
        $region74: #{monet_forward_pallas.3} parent=11 // pred_check_branch
          %542 = sbr.rel (%p540) target = $region76
        $region75: #{monet_forward_pallas.3} parent=11 // pred_region
          _
        $region76: #{monet_forward_pallas.3} parent=11 // pred_fallthru
          _
      $region12: #{monet_forward_pallas.3} parent=5 // pred_fallthru
        _
      %p543 = scmp.lt.s32.totalorder %s39, 3
      // Predicated region
      $region77: #{monet_forward_pallas.3} parent=5 // pred_check
        %p544 = pneg %p543
      $region78: #{monet_forward_pallas.3} parent=5 // pred_check_branch
        %546 = sbr.rel (%p544) target = $region80
      $region79: #{monet_forward_pallas.3} parent=5 // pred_region
        // Predicated region
        $region81: #{monet_forward_pallas.3} parent=79 // pred_check
          %p547 = pneg %p143
        $region82: #{monet_forward_pallas.3} parent=79 // pred_check_branch
          %549 = sbr.rel (%p547) target = $region84
        $region83: #{monet_forward_pallas.3} parent=79 // pred_region
          %s550 = smul.u32 4, %s39
          %p551 = scmp.lt.s32.totalorder %s550, 11
          %s552 = scalar_select %p551, %s550, 11
          %s553 = smul.addr %s552, 8
          %s554 = scalar_lea.vmem %s6, %s553
          %s555 = smul.u32 4, %s39
        $region84: #{monet_forward_pallas.3} parent=79 // pred_fallthru
          _
        // Predicated region
        $region85: #{monet_forward_pallas.3} parent=79 // pred_check
          %p556 = pneg %p169
        $region86: #{monet_forward_pallas.3} parent=79 // pred_check_branch
          %558 = sbr.rel (%p556) target = $region88
        $region87: #{monet_forward_pallas.3} parent=79 // pred_region
          %s559 = smul.u32 4, %s39
          %p560 = scmp.lt.s32.totalorder %s559, 11
          %s561 = scalar_select %p560, %s559, 11
          %s562 = smul.addr %s561, 8
          %s563 = scalar_lea.vmem %s7, %s562
          %s564 = smul.u32 4, %s39
        $region88: #{monet_forward_pallas.3} parent=79 // pred_fallthru
          _
      $region80: #{monet_forward_pallas.3} parent=5 // pred_fallthru
        _
      %p565 = scmp.le.s32.totalorder 1, %s39
      %p566 = scmp.lt.s32.totalorder %s39, 4
      %p567 = pnand %p565, %p566
      %p568 = pneg %p567
      // Predicated region
      $region89: #{monet_forward_pallas.3} parent=5 // pred_check
        _
      $region90: #{monet_forward_pallas.3} parent=5 // pred_check_branch
        %570 = sbr.rel (%p567) target = $region92
      $region91: #{monet_forward_pallas.3} parent=5 // pred_region
        %s571 = ssub.s32 %s39, 1
        // Predicated region
        $region93: #{monet_forward_pallas.3} parent=91 // pred_check
          %p572 = pneg %p196
        $region94: #{monet_forward_pallas.3} parent=91 // pred_check_branch
          %574 = sbr.rel (%p572) target = $region96
        $region95: #{monet_forward_pallas.3} parent=91 // pred_region
          %575 = dma.done [#allocation11], 32
        $region96: #{monet_forward_pallas.3} parent=91 // pred_fallthru
          _
        // Predicated region
        $region97: #{monet_forward_pallas.3} parent=91 // pred_check
          %p576 = pneg %p217
        $region98: #{monet_forward_pallas.3} parent=91 // pred_check_branch
          %578 = sbr.rel (%p576) target = $region100
        $region99: #{monet_forward_pallas.3} parent=91 // pred_region
          %579 = dma.done [#allocation13], 16
        $region100: #{monet_forward_pallas.3} parent=91 // pred_fallthru
          _
        // Predicated region
        $region101: #{monet_forward_pallas.3} parent=91 // pred_check
          %p580 = pneg %p238
        $region102: #{monet_forward_pallas.3} parent=91 // pred_check_branch
          %582 = sbr.rel (%p580) target = $region104
        $region103: #{monet_forward_pallas.3} parent=91 // pred_region
          %583 = dma.done [#allocation13], 64
        $region104: #{monet_forward_pallas.3} parent=91 // pred_fallthru
          _
        // Predicated region
        $region105: #{monet_forward_pallas.3} parent=91 // pred_check
          %p584 = pneg %p259
        $region106: #{monet_forward_pallas.3} parent=91 // pred_check_branch
          %586 = sbr.rel (%p584) target = $region108
        $region107: #{monet_forward_pallas.3} parent=91 // pred_region
          %587 = dma.done [#allocation16], 64
        $region108: #{monet_forward_pallas.3} parent=91 // pred_fallthru
          _
        %588 = sfence
        %p589 = pneg %p60
        %p590 = pneg %p57
        %p591 = pneg %p81
        %p592 = pneg %p78
        %p593 = pneg %p102
        %p594 = pneg %p99
        %p595 = pneg %p123
        %p596 = pneg %p120
        %s597 = smul.u32 4, %s44
        %p598 = scmp.lt.s32.totalorder %s597, 11
        %s599 = scalar_select %p598, %s597, 11
        %s600 = smul.addr %s599, 8
        %s601 = scalar_lea.vmem %s6, %s600
        %p602 = pneg %p149
        %p603 = pneg %p146
        %s604 = smul.u32 4, %s44
        %p605 = scmp.lt.s32.totalorder %s604, 11
        %s606 = scalar_select %p605, %s604, 11
        %s607 = smul.addr %s606, 8
        %s608 = scalar_lea.vmem %s7, %s607
        %p609 = pneg %p175
        %p610 = pneg %p172
        %p611 = pneg %p196
        %p612 = pneg %p193
        %p613 = pneg %p217
        %p614 = pneg %p214
        %p615 = pneg %p238
        %p616 = pneg %p235
        %p617 = pneg %p259
        %p618 = pneg %p256
        %p619 = pneg %p280
        %p620 = pneg %p277
        %p621 = pneg %p301
        %p622 = pneg %p298
        %p623 = pneg %p322
        %p624 = pneg %p319
        %p625 = pneg %p343
        %p626 = pneg %p340
        %p627 = pneg %p364
        %p628 = pneg %p361
        %p629 = pneg %p385
        %p630 = pneg %p382
        %p631 = pneg %p406
        %p632 = pneg %p403
        %p633 = pneg %p427
        %p634 = pneg %p424
        %p635 = pneg %p448
        %p636 = pneg %p445
        %s637 = smul.u32 4, %s44
        %p638 = scmp.lt.s32.totalorder %s637, 11
        %s639 = scalar_select %p638, %s637, 11
        %s640 = smul.addr %s639, 8
        %s641 = scalar_lea.vmem %s6, %s640
        %s642 = smul.u32 4, %s44
        %s643 = smul.u32 4, %s44
        %p644 = scmp.lt.s32.totalorder %s643, 11
        %s645 = scalar_select %p644, %s643, 11
        %s646 = smul.addr %s645, 8
        %s647 = scalar_lea.vmem %s7, %s646
        %s648 = smul.u32 4, %s44
        %s649 = smul.u32 %s44, 32
        %p650 = scmp.eq.s32.totalorder %s44, 0
        // Predicated region
        $region109: #{monet_forward_pallas.3} parent=91 // pred_check
          %p651 = pneg %p650
        $region110: #{monet_forward_pallas.3} parent=91 // pred_check_branch
          %653 = sbr.rel (%p651) target = $region112
        $region111: #{monet_forward_pallas.3} parent=91 // pred_region
          %v654 = vld [vmem:[%s2] sm:$0xff]
          %v655 = vld [vmem:[%s2 + $0x8] sm:$0xff]
          %v656 = vld [vmem:[%s2 + $0x10] sm:$0xff]
          %v657 = vld [vmem:[%s2 + $0x18] sm:$0xff]
          %v658 = vld [vmem:[%s3] sm:$0xff]
          %v659 = vld [vmem:[%s3 + $0x8] sm:$0xff]
          %v660 = vld [vmem:[%s3 + $0x10] sm:$0xff]
          %v661 = vld [vmem:[%s3 + $0x18] sm:$0xff]
          %v662 = vld [vmem:[%s3 + $0x20] sm:$0xff]
          %v663 = vld [vmem:[%s3 + $0x28] sm:$0xff]
          %v664 = vld [vmem:[%s3 + $0x30] sm:$0xff]
          %v665 = vld [vmem:[%s3 + $0x38] sm:$0xff]
          %v666 = vld [vmem:[%s3 + $0x40] sm:$0xff]
          %v667 = vld [vmem:[%s3 + $0x48] sm:$0xff]
          %v668 = vld [vmem:[%s3 + $0x50] sm:$0xff]
          %v669 = vld [vmem:[%s3 + $0x58] sm:$0xff]
          %v670 = vld [vmem:[%s3 + $0x60] sm:$0xff]
          %v671 = vld [vmem:[%s3 + $0x68] sm:$0xff]
          %v672 = vld [vmem:[%s3 + $0x70] sm:$0xff]
          %v673 = vld [vmem:[%s3 + $0x78] sm:$0xff]
          %v674 = vld [vmem:[%s4] sm:$0x1]
          %v676 = vlaneseq
          %v677 = vshrl.u32 %v676, 7
          %v678 = vsub.s32 0, %v677
          %v679 = vrot.slane %v674, %v678
          %681 = vmatprep.subr.mxu0 0.0
          %682 = vmatpush1.msra.mxu0 %v673
          %683 = vmatprep.subr.mxu0 0.0
          %684 = vmatpush1.msra.mxu0 %v672
          %685 = vmatprep.subr.mxu0 0.0
          %686 = vmatpush1.msra.mxu0 %v671
          %687 = vmatprep.subr.mxu0 0.0
          %688 = vmatpush1.msra.mxu0 %v670
          %689 = vmatprep.subr.mxu0 0.0
          %690 = vmatpush1.msra.mxu0 %v669
          %691 = vmatprep.subr.mxu0 0.0
          %692 = vmatpush1.msra.mxu0 %v668
          %693 = vmatprep.subr.mxu0 0.0
          %694 = vmatpush1.msra.mxu0 %v667
          %695 = vmatprep.subr.mxu0 0.0
          %696 = vmatpush1.msra.mxu0 %v666
          %697 = vmatprep.subr.mxu0 0.0
          %698 = vmatpush1.msra.mxu0 %v665
          %699 = vmatprep.subr.mxu0 0.0
          %700 = vmatpush1.msra.mxu0 %v664
          %701 = vmatprep.subr.mxu0 0.0
          %702 = vmatpush1.msra.mxu0 %v663
          %703 = vmatprep.subr.mxu0 0.0
          %704 = vmatpush1.msra.mxu0 %v662
          %705 = vmatprep.subr.mxu0 0.0
          %706 = vmatpush1.msra.mxu0 %v661
          %707 = vmatprep.subr.mxu0 0.0
          %708 = vmatpush1.msra.mxu0 %v660
          %709 = vmatprep.subr.mxu0 0.0
          %710 = vmatpush1.msra.mxu0 %v659
          %711 = vmatprep.subr.mxu0 0.0
          %712 = vmatpush1.msra.mxu0 %v658
          %713 = vmatprep.subr.mxu0 0.0
          %714 = vmatpush2.msra.mxu0 0.0
          %715 = vmatprep.subr.mxu0 0.0
          %716 = vmatpush2.msra.mxu0 0.0
          %717 = vmatprep.subr.mxu0 0.0
          %718 = vmatpush2.msra.mxu0 0.0
          %719 = vmatprep.subr.mxu0 0.0
          %720 = vmatpush2.msra.mxu0 0.0
          %721 = vmatprep.subr.mxu0 0.0
          %722 = vmatpush2.msra.mxu0 0.0
          %723 = vmatprep.subr.mxu0 0.0
          %724 = vmatpush2.msra.mxu0 0.0
          %725 = vmatprep.subr.mxu0 0.0
          %726 = vmatpush2.msra.mxu0 0.0
          %727 = vmatprep.subr.mxu0 0.0
          %728 = vmatpush2.msra.mxu0 0.0
          %729 = vmatprep.subr.mxu0 0.0
          %730 = vmatpush2.msra.mxu0 0.0
          %731 = vmatprep.subr.mxu0 0.0
          %732 = vmatpush2.msra.mxu0 0.0
          %733 = vmatprep.subr.mxu0 0.0
          %734 = vmatpush2.msra.mxu0 0.0
          %735 = vmatprep.subr.mxu0 0.0
          %736 = vmatpush2.msra.mxu0 0.0
          %737 = vmatprep.subr.mxu0 0.0
          %738 = vmatpush2.msra.mxu0 0.0
          %739 = vmatprep.subr.mxu0 0.0
          %740 = vmatpush2.msra.mxu0 0.0
          %741 = vmatprep.subr.mxu0 0.0
          %742 = vmatpush2.msra.mxu0 0.0
          %743 = vmatprep.subr.mxu0 0.0
          %744 = vmatpush2.msra.mxu0 0.0
          %745 = vmatprep.mubr.f32.mxu0 0.0
          %746 = vmatmul.mubr.f32.gmra.mxu0 %v654
          %v747 = vpop.f32.mrf.mxu0
          %v748 = vadd.f32 %v679, %v747
          %v749 = vpop.f32.mrf.mxu0
          %750 = vmatprep.mubr.f32.mxu0 0.0
          %751 = vmatmul.mubr.f32.gmra.mxu0 %v655
          %v752 = vpop.f32.mrf.mxu0
          %v753 = vadd.f32 %v679, %v752
          %v754 = vpop.f32.mrf.mxu0
          %755 = vmatprep.mubr.f32.mxu0 0.0
          %756 = vmatmul.mubr.f32.gmra.mxu0 %v656
          %v757 = vpop.f32.mrf.mxu0
          %v758 = vadd.f32 %v679, %v757
          %v759 = vpop.f32.mrf.mxu0
          %760 = vmatprep.mubr.f32.mxu0 0.0
          %761 = vmatmul.mubr.f32.gmra.mxu0 %v657
          %v762 = vpop.f32.mrf.mxu0
          %v763 = vadd.f32 %v679, %v762
          %v764 = vpop.f32.mrf.mxu0
          %765 = vdwg.mxu0
          %766 = vst [vmem:[#allocation2] sm:$0xff] %v748
          %767 = vst [vmem:[#allocation2 + $0x8] sm:$0xff] %v753
          %768 = vst [vmem:[#allocation2 + $0x10] sm:$0xff] %v758
          %769 = vst [vmem:[#allocation2 + $0x18] sm:$0xff] %v763
          %v770 = vld [vmem:[%s5] sm:$0xff]
          %v771 = vld [vmem:[%s5 + $0x8] sm:$0xff]
          %v772 = vld [vmem:[%s5 + $0x10] sm:$0xff]
          %v773 = vld [vmem:[%s5 + $0x18] sm:$0xff]
          %v774 = vld [vmem:[%s5 + $0x20] sm:$0xff]
          %v775 = vld [vmem:[%s5 + $0x28] sm:$0xff]
          %v776 = vld [vmem:[%s5 + $0x30] sm:$0xff]
          %v777 = vld [vmem:[%s5 + $0x38] sm:$0xff]
          %v778 = vld [vmem:[%s5 + $0x40] sm:$0xff]
          %v779 = vld [vmem:[%s5 + $0x48] sm:$0xff]
          %v780 = vld [vmem:[%s5 + $0x50] sm:$0xff]
          %v781 = vld [vmem:[%s5 + $0x58] sm:$0xff]
          %v782 = vld [vmem:[%s5 + $0x60] sm:$0xff]
          %v783 = vld [vmem:[%s5 + $0x68] sm:$0xff]
          %v784 = vld [vmem:[%s5 + $0x70] sm:$0xff]
          %v785 = vld [vmem:[%s5 + $0x78] sm:$0xff]
          %v786 = vld [vmem:[%s5 + $0x80] sm:$0xff]
          %v787 = vld [vmem:[%s5 + $0x88] sm:$0xff]
          %v788 = vld [vmem:[%s5 + $0x90] sm:$0xff]
          %v789 = vld [vmem:[%s5 + $0x98] sm:$0xff]
          %v790 = vld [vmem:[%s5 + $0xa0] sm:$0xff]
          %v791 = vld [vmem:[%s5 + $0xa8] sm:$0xff]
          %v792 = vld [vmem:[%s5 + $0xb0] sm:$0xff]
          %v793 = vld [vmem:[%s5 + $0xb8] sm:$0xff]
          %v794 = vld [vmem:[%s5 + $0xc0] sm:$0xff]
          %v795 = vld [vmem:[%s5 + $0xc8] sm:$0xff]
          %v796 = vld [vmem:[%s5 + $0xd0] sm:$0xff]
          %v797 = vld [vmem:[%s5 + $0xd8] sm:$0xff]
          %v798 = vld [vmem:[%s5 + $0xe0] sm:$0xff]
          %v799 = vld [vmem:[%s5 + $0xe8] sm:$0xff]
          %v800 = vld [vmem:[%s5 + $0xf0] sm:$0xff]
          %v801 = vld [vmem:[%s5 + $0xf8] sm:$0xff]
          %v802 = vld [vmem:[%s5 + $0x100] sm:$0xff]
          %v803 = vld [vmem:[%s5 + $0x108] sm:$0xff]
          %v804 = vld [vmem:[%s5 + $0x110] sm:$0xff]
          %v805 = vld [vmem:[%s5 + $0x118] sm:$0xff]
          %v806 = vld [vmem:[%s5 + $0x120] sm:$0xff]
          %v807 = vld [vmem:[%s5 + $0x128] sm:$0xff]
          %v808 = vld [vmem:[%s5 + $0x130] sm:$0xff]
          %v809 = vld [vmem:[%s5 + $0x138] sm:$0xff]
          %v810 = vld [vmem:[%s5 + $0x140] sm:$0xff]
          %v811 = vld [vmem:[%s5 + $0x148] sm:$0xff]
          %v812 = vld [vmem:[%s5 + $0x150] sm:$0xff]
          %v813 = vld [vmem:[%s5 + $0x158] sm:$0xff]
          %v814 = vld [vmem:[%s5 + $0x160] sm:$0xff]
          %v815 = vld [vmem:[%s5 + $0x168] sm:$0xff]
          %v816 = vld [vmem:[%s5 + $0x170] sm:$0xff]
          %v817 = vld [vmem:[%s5 + $0x178] sm:$0xff]
          %818 = vmatprep.subr.mxu0 %v816
          %819 = vmatpush1.msra.mxu0 %v815
          %820 = vmatprep.subr.mxu0 %v813
          %821 = vmatpush1.msra.mxu0 %v812
          %822 = vmatprep.subr.mxu0 %v810
          %823 = vmatpush1.msra.mxu0 %v809
          %824 = vmatprep.subr.mxu0 %v807
          %825 = vmatpush1.msra.mxu0 %v806
          %826 = vmatprep.subr.mxu0 %v804
          %827 = vmatpush1.msra.mxu0 %v803
          %828 = vmatprep.subr.mxu0 %v801
          %829 = vmatpush1.msra.mxu0 %v800
          %830 = vmatprep.subr.mxu0 %v798
          %831 = vmatpush1.msra.mxu0 %v797
          %832 = vmatprep.subr.mxu0 %v795
          %833 = vmatpush1.msra.mxu0 %v794
          %834 = vmatprep.subr.mxu0 %v792
          %835 = vmatpush1.msra.mxu0 %v791
          %836 = vmatprep.subr.mxu0 %v789
          %837 = vmatpush1.msra.mxu0 %v788
          %838 = vmatprep.subr.mxu0 %v786
          %839 = vmatpush1.msra.mxu0 %v785
          %840 = vmatprep.subr.mxu0 %v783
          %841 = vmatpush1.msra.mxu0 %v782
          %842 = vmatprep.subr.mxu0 %v780
          %843 = vmatpush1.msra.mxu0 %v779
          %844 = vmatprep.subr.mxu0 %v777
          %845 = vmatpush1.msra.mxu0 %v776
          %846 = vmatprep.subr.mxu0 %v774
          %847 = vmatpush1.msra.mxu0 %v773
          %848 = vmatprep.subr.mxu0 %v771
          %849 = vmatpush1.msra.mxu0 %v770
          %850 = vmatprep.subr.mxu0 0.0
          %851 = vmatpush2.msra.mxu0 0.0
          %852 = vmatprep.subr.mxu0 0.0
          %853 = vmatpush2.msra.mxu0 0.0
          %854 = vmatprep.subr.mxu0 0.0
          %855 = vmatpush2.msra.mxu0 0.0
          %856 = vmatprep.subr.mxu0 0.0
          %857 = vmatpush2.msra.mxu0 0.0
          %858 = vmatprep.subr.mxu0 0.0
          %859 = vmatpush2.msra.mxu0 0.0
          %860 = vmatprep.subr.mxu0 0.0
          %861 = vmatpush2.msra.mxu0 0.0
          %862 = vmatprep.subr.mxu0 0.0
          %863 = vmatpush2.msra.mxu0 0.0
          %864 = vmatprep.subr.mxu0 0.0
          %865 = vmatpush2.msra.mxu0 0.0
          %866 = vmatprep.subr.mxu0 0.0
          %867 = vmatpush2.msra.mxu0 0.0
          %868 = vmatprep.subr.mxu0 0.0
          %869 = vmatpush2.msra.mxu0 0.0
          %870 = vmatprep.subr.mxu0 0.0
          %871 = vmatpush2.msra.mxu0 0.0
          %872 = vmatprep.subr.mxu0 0.0
          %873 = vmatpush2.msra.mxu0 0.0
          %874 = vmatprep.subr.mxu0 0.0
          %875 = vmatpush2.msra.mxu0 0.0
          %876 = vmatprep.subr.mxu0 0.0
          %877 = vmatpush2.msra.mxu0 0.0
          %878 = vmatprep.subr.mxu0 0.0
          %879 = vmatpush2.msra.mxu0 0.0
          %880 = vmatprep.subr.mxu0 0.0
          %881 = vmatpush2.msra.mxu0 0.0
          %882 = vmatprep.mubr.f32.mxu0 0.0
          %883 = vmatmul.mubr.f32.gmra.mxu0 %v748
          %v884 = vpop.f32.mrf.mxu0
          %v885 = vadd.f32 0.0, %v884
          %v886 = vpop.f32.mrf.mxu0
          %v887 = vadd.f32 0.0, %v886
          %888 = vmatprep.mubr.f32.mxu0 0.0
          %889 = vmatmul.mubr.f32.gmra.mxu0 %v753
          %v890 = vpop.f32.mrf.mxu0
          %v891 = vadd.f32 0.0, %v890
          %v892 = vpop.f32.mrf.mxu0
          %v893 = vadd.f32 0.0, %v892
          %894 = vmatprep.mubr.f32.mxu0 0.0
          %895 = vmatmul.mubr.f32.gmra.mxu0 %v758
          %v896 = vpop.f32.mrf.mxu0
          %v897 = vadd.f32 0.0, %v896
          %v898 = vpop.f32.mrf.mxu0
          %v899 = vadd.f32 0.0, %v898
          %900 = vmatprep.mubr.f32.mxu0 0.0
          %901 = vmatmul.mubr.f32.gmra.mxu0 %v763
          %v902 = vpop.f32.mrf.mxu0
          %v903 = vadd.f32 0.0, %v902
          %v904 = vpop.f32.mrf.mxu0
          %v905 = vadd.f32 0.0, %v904
          %906 = vdwg.mxu0
          %907 = vmatprep.subr.mxu0 0.0
          %908 = vmatpush1.msra.mxu0 %v817
          %909 = vmatprep.subr.mxu0 0.0
          %910 = vmatpush1.msra.mxu0 %v814
          %911 = vmatprep.subr.mxu0 0.0
          %912 = vmatpush1.msra.mxu0 %v811
          %913 = vmatprep.subr.mxu0 0.0
          %914 = vmatpush1.msra.mxu0 %v808
          %915 = vmatprep.subr.mxu0 0.0
          %916 = vmatpush1.msra.mxu0 %v805
          %917 = vmatprep.subr.mxu0 0.0
          %918 = vmatpush1.msra.mxu0 %v802
          %919 = vmatprep.subr.mxu0 0.0
          %920 = vmatpush1.msra.mxu0 %v799
          %921 = vmatprep.subr.mxu0 0.0
          %922 = vmatpush1.msra.mxu0 %v796
          %923 = vmatprep.subr.mxu0 0.0
          %924 = vmatpush1.msra.mxu0 %v793
          %925 = vmatprep.subr.mxu0 0.0
          %926 = vmatpush1.msra.mxu0 %v790
          %927 = vmatprep.subr.mxu0 0.0
          %928 = vmatpush1.msra.mxu0 %v787
          %929 = vmatprep.subr.mxu0 0.0
          %930 = vmatpush1.msra.mxu0 %v784
          %931 = vmatprep.subr.mxu0 0.0
          %932 = vmatpush1.msra.mxu0 %v781
          %933 = vmatprep.subr.mxu0 0.0
          %934 = vmatpush1.msra.mxu0 %v778
          %935 = vmatprep.subr.mxu0 0.0
          %936 = vmatpush1.msra.mxu0 %v775
          %937 = vmatprep.subr.mxu0 0.0
          %938 = vmatpush1.msra.mxu0 %v772
          %939 = vmatprep.subr.mxu0 0.0
          %940 = vmatpush2.msra.mxu0 0.0
          %941 = vmatprep.subr.mxu0 0.0
          %942 = vmatpush2.msra.mxu0 0.0
          %943 = vmatprep.subr.mxu0 0.0
          %944 = vmatpush2.msra.mxu0 0.0
          %945 = vmatprep.subr.mxu0 0.0
          %946 = vmatpush2.msra.mxu0 0.0
          %947 = vmatprep.subr.mxu0 0.0
          %948 = vmatpush2.msra.mxu0 0.0
          %949 = vmatprep.subr.mxu0 0.0
          %950 = vmatpush2.msra.mxu0 0.0
          %951 = vmatprep.subr.mxu0 0.0
          %952 = vmatpush2.msra.mxu0 0.0
          %953 = vmatprep.subr.mxu0 0.0
          %954 = vmatpush2.msra.mxu0 0.0
          %955 = vmatprep.subr.mxu0 0.0
          %956 = vmatpush2.msra.mxu0 0.0
          %957 = vmatprep.subr.mxu0 0.0
          %958 = vmatpush2.msra.mxu0 0.0
          %959 = vmatprep.subr.mxu0 0.0
          %960 = vmatpush2.msra.mxu0 0.0
          %961 = vmatprep.subr.mxu0 0.0
          %962 = vmatpush2.msra.mxu0 0.0
          %963 = vmatprep.subr.mxu0 0.0
          %964 = vmatpush2.msra.mxu0 0.0
          %965 = vmatprep.subr.mxu0 0.0
          %966 = vmatpush2.msra.mxu0 0.0
          %967 = vmatprep.subr.mxu0 0.0
          %968 = vmatpush2.msra.mxu0 0.0
          %969 = vmatprep.subr.mxu0 0.0
          %970 = vmatpush2.msra.mxu0 0.0
          %971 = vmatprep.mubr.f32.mxu0 0.0
          %972 = vmatmul.mubr.f32.gmra.mxu0 %v748
          %v973 = vpop.f32.mrf.mxu0
          %v974 = vadd.f32 0.0, %v973
          %v975 = vpop.f32.mrf.mxu0
          %976 = vmatprep.mubr.f32.mxu0 0.0
          %977 = vmatmul.mubr.f32.gmra.mxu0 %v753
          %v978 = vpop.f32.mrf.mxu0
          %v979 = vadd.f32 0.0, %v978
          %v980 = vpop.f32.mrf.mxu0
          %981 = vmatprep.mubr.f32.mxu0 0.0
          %982 = vmatmul.mubr.f32.gmra.mxu0 %v758
          %v983 = vpop.f32.mrf.mxu0
          %v984 = vadd.f32 0.0, %v983
          %v985 = vpop.f32.mrf.mxu0
          %986 = vmatprep.mubr.f32.mxu0 0.0
          %987 = vmatmul.mubr.f32.gmra.mxu0 %v763
          %v988 = vpop.f32.mrf.mxu0
          %v989 = vadd.f32 0.0, %v988
          %v990 = vpop.f32.mrf.mxu0
          %991 = vdwg.mxu0
          %992 = vst [vmem:[#allocation3] sm:$0xff] %v885
          %993 = vst [vmem:[#allocation3 + $0x8] sm:$0xff] %v887
          %994 = vst [vmem:[#allocation3 + $0x10] sm:$0xff] %v974
          %995 = vst [vmem:[#allocation3 + $0x18] sm:$0xff] %v891
          %996 = vst [vmem:[#allocation3 + $0x20] sm:$0xff] %v893
          %997 = vst [vmem:[#allocation3 + $0x28] sm:$0xff] %v979
          %998 = vst [vmem:[#allocation3 + $0x30] sm:$0xff] %v897
          %999 = vst [vmem:[#allocation3 + $0x38] sm:$0xff] %v899
          %1000 = vst [vmem:[#allocation3 + $0x40] sm:$0xff] %v984
          %1001 = vst [vmem:[#allocation3 + $0x48] sm:$0xff] %v903
          %1002 = vst [vmem:[#allocation3 + $0x50] sm:$0xff] %v905
          %1003 = vst [vmem:[#allocation3 + $0x58] sm:$0xff] %v989
          %1004 = vst [vmem:[#allocation6] sm:$0xff] 0.0
          %1005 = vst [vmem:[#allocation6 + $0x8] sm:$0xff] 0.0
          %1006 = vst [vmem:[#allocation6 + $0x10] sm:$0xff] 0.0
          %1007 = vst [vmem:[#allocation6 + $0x18] sm:$0xff] 0.0
        $region112: #{monet_forward_pallas.3} parent=91 // pred_fallthru
          _
        loop: start=0, step=1, limit=32
        $region113: #{monet_forward_pallas.3} parent=91 // loop_pre_header
          _
        $region114: #{monet_forward_pallas.3} parent=91 // loop_header
          %s1009 = sphi 0, %s1013
          %p1010 = scmp.ge.s32.totalorder %s1009, 32
        $region115: #{monet_forward_pallas.3} parent=91 // loop_header_branch
          %1012 = sbr.rel (%p1010) target = $region119
        $region116: #{monet_forward_pallas.3} parent=91 // loop_body
          %s1014 = sadd.s32 %s649, %s1009
          %s1015 = sld [smem:[#allocation8 + %s1014]]
          %s1016 = sshra.s32 %s1015, 3
          %s1017 = sand.u32 %s1015, 7
          %s1018 = sshra.s32 %s1015, 3
          %s1019 = sand.u32 %s1015, 7
          %s1020 = smul.u32 %s1016, 3
          %s1021 = smul.u32 %s1020, 8
          %s1022 = sadd.s32 %s1021, %s1019
          %s1023 = scalar_lea.vmem [#allocation3], %s1022
          %v1024 = vld [vmem:[%s1023] ss:$8 sm:$0x7]
          %v1025 = vlaneseq
          %vm1026 = vcmp.ge.s32.totalorder %v1025, 0
          %vm1027 = vcmp.lt.s32.totalorder %v1025, 384
          %vm1028 = vmand %vm1026, %vm1027
          %s1029 = sshra.s32 %s1009, 3
          %s1030 = sand.u32 %s1009, 7
          %s1031 = sshra.s32 %s1009, 3
          %s1032 = sand.u32 %s1009, 7
          %s1033 = smul.u32 %s1029, 3
          %s1034 = smul.u32 %s1033, 8
          %s1035 = sadd.s32 %s1034, %s1032
          %s1036 = scalar_lea.vmem [#allocation4], %s1035
          %1037 = vst.msk [vmem:[%s1036] ss:$8 sm:$0x7] %vm1028, %v1024
          %1038 = vst.msk [vmem:[%s1036] ss:$8 sm:$0x0] %vm1028, %v1024
        $region117: #{monet_forward_pallas.3} parent=91 // loop_footer
          %s1013 = sadd.s32 1, %s1009
        $region118: #{monet_forward_pallas.3} parent=91 // loop_footer_branch
          %1008 = sbr.rel target = $region114
        $region119: #{monet_forward_pallas.3} parent=91 // loop_exit
          _
        %v1039 = vld [vmem:[%s641] sm:$0xff]
        %v1040 = vld [vmem:[%s641 + $0x8] sm:$0xff]
        %v1041 = vld [vmem:[%s641 + $0x10] sm:$0xff]
        %v1042 = vld [vmem:[%s641 + $0x18] sm:$0xff]
        %v1043 = vld [vmem:[%s647] sm:$0xff]
        %v1044 = vld [vmem:[%s647 + $0x8] sm:$0xff]
        %v1045 = vld [vmem:[%s647 + $0x10] sm:$0xff]
        %v1046 = vld [vmem:[%s647 + $0x18] sm:$0xff]
        %s1047 = sld [smem:[#allocation10]]
        %v1048 = vstv %s1047
        %v1049 = vmul.f32 %v1039, %v1048
        %v1050 = vmul.f32 %v1040, %v1048
        %v1051 = vmul.f32 %v1041, %v1048
        %v1052 = vmul.f32 %v1042, %v1048
        %s1053 = sld [smem:[#allocation10 + $0x80]]
        %v1054 = vstv %s1053
        %v1055 = vmul.f32 %v1043, %v1054
        %v1056 = vmul.f32 %v1044, %v1054
        %v1057 = vmul.f32 %v1045, %v1054
        %v1058 = vmul.f32 %v1046, %v1054
        %v1059 = vadd.f32 %v1049, %v1055
        %v1060 = vadd.f32 %v1050, %v1056
        %v1061 = vadd.f32 %v1051, %v1057
        %v1062 = vadd.f32 %v1052, %v1058
        %s1063 = sld [smem:[#allocation12]]
        %v1064 = vstv %s1063
        %v1065 = vadd.f32 %v1059, %v1064
        %v1066 = vadd.f32 %v1060, %v1064
        %v1067 = vadd.f32 %v1061, %v1064
        %v1068 = vadd.f32 %v1062, %v1064
        %v1069 = vtanh.pop %v1065
        %v1070 = vtanh.pop %v1066
        %v1071 = vtanh.pop %v1067
        %v1072 = vtanh.pop %v1068
        %s1073 = sld [smem:[#allocation10 + $0x1]]
        %v1074 = vstv %s1073
        %v1075 = vmul.f32 %v1039, %v1074
        %v1076 = vmul.f32 %v1040, %v1074
        %v1077 = vmul.f32 %v1041, %v1074
        %v1078 = vmul.f32 %v1042, %v1074
        %s1079 = sld [smem:[#allocation10 + $0x81]]
        %v1080 = vstv %s1079
        %v1081 = vmul.f32 %v1043, %v1080
        %v1082 = vmul.f32 %v1044, %v1080
        %v1083 = vmul.f32 %v1045, %v1080
        %v1084 = vmul.f32 %v1046, %v1080
        %v1085 = vadd.f32 %v1075, %v1081
        %v1086 = vadd.f32 %v1076, %v1082
        %v1087 = vadd.f32 %v1077, %v1083
        %v1088 = vadd.f32 %v1078, %v1084
        %s1089 = sld [smem:[#allocation12 + $0x1]]
        %v1090 = vstv %s1089
        %v1091 = vadd.f32 %v1085, %v1090
        %v1092 = vadd.f32 %v1086, %v1090
        %v1093 = vadd.f32 %v1087, %v1090
        %v1094 = vadd.f32 %v1088, %v1090
        %v1095 = vtanh.pop %v1091
        %v1096 = vtanh.pop %v1092
        %v1097 = vtanh.pop %v1093
        %v1098 = vtanh.pop %v1094
        %s1099 = sld [smem:[#allocation14]]
        %v1100 = vstv %s1099
        %v1101 = vsub.f32 %v1069, %v1100
        %v1102 = vsub.f32 %v1070, %v1100
        %v1103 = vsub.f32 %v1071, %v1100
        %v1104 = vsub.f32 %v1072, %v1100
        %v1105 = vmul.f32 %v1101, %v1101
        %v1106 = vmul.f32 %v1102, %v1102
        %v1107 = vmul.f32 %v1103, %v1103
        %v1108 = vmul.f32 %v1104, %v1104
        %s1109 = sld [smem:[#allocation15]]
        %s1110 = smul.f32 %s1109, %s1109
        %v1111 = vstv %s1110
        %v1112 = vmul.f32 %v1105, %v1111
        %v1113 = vmul.f32 %v1106, %v1111
        %v1114 = vmul.f32 %v1107, %v1111
        %v1115 = vmul.f32 %v1108, %v1111
        %v1116 = vadd.f32 %v1112, 0.0
        %v1117 = vadd.f32 %v1113, 0.0
        %v1118 = vadd.f32 %v1114, 0.0
        %v1119 = vadd.f32 %v1115, 0.0
        %s1120 = sld [smem:[#allocation14 + $0x1]]
        %v1121 = vstv %s1120
        %v1122 = vsub.f32 %v1095, %v1121
        %v1123 = vsub.f32 %v1096, %v1121
        %v1124 = vsub.f32 %v1097, %v1121
        %v1125 = vsub.f32 %v1098, %v1121
        %v1126 = vmul.f32 %v1122, %v1122
        %v1127 = vmul.f32 %v1123, %v1123
        %v1128 = vmul.f32 %v1124, %v1124
        %v1129 = vmul.f32 %v1125, %v1125
        %s1130 = sld [smem:[#allocation15 + $0x1]]
        %s1131 = smul.f32 %s1130, %s1130
        %v1132 = vstv %s1131
        %v1133 = vmul.f32 %v1126, %v1132
        %v1134 = vmul.f32 %v1127, %v1132
        %v1135 = vmul.f32 %v1128, %v1132
        %v1136 = vmul.f32 %v1129, %v1132
        %v1137 = vadd.f32 %v1116, %v1133
        %v1138 = vadd.f32 %v1117, %v1134
        %v1139 = vadd.f32 %v1118, %v1135
        %v1140 = vadd.f32 %v1119, %v1136
        %v1141 = vmul.f32 %v1137, -0.5
        %v1142 = vmul.f32 %v1138, -0.5
        %v1143 = vmul.f32 %v1139, -0.5
        %v1144 = vmul.f32 %v1140, -0.5
        %v1145 = vmul.f32 %v1141, 1.442695
        %v1146 = vpow.pop %v1145
        %v1147 = vmul.f32 %v1142, 1.442695
        %v1148 = vpow.pop %v1147
        %v1149 = vmul.f32 %v1143, 1.442695
        %v1150 = vpow.pop %v1149
        %v1151 = vmul.f32 %v1144, 1.442695
        %v1152 = vpow.pop %v1151
        %v1153 = vld [vmem:[#allocation4] sm:$0xff]
        %v1154 = vld [vmem:[#allocation4 + $0x18] sm:$0xff]
        %v1155 = vld [vmem:[#allocation4 + $0x30] sm:$0xff]
        %v1156 = vld [vmem:[#allocation4 + $0x48] sm:$0xff]
        %1158 = vset.pattern.permute.xlu0 0
        %1159 = vperm.xlu0 %1158, %v1146
        %v1160 = vpop.permute.xlu0 %1159
        %1163 = vset.pattern.permute.xlu0 0
        %1164 = vperm.xlu0 %1163, %v1148
        %v1165 = vpop.permute.xlu0 %1164
        %1168 = vset.pattern.permute.xlu0 0
        %1169 = vperm.xlu0 %1168, %v1150
        %v1170 = vpop.permute.xlu0 %1169
        %1173 = vset.pattern.permute.xlu0 0
        %1174 = vperm.xlu0 %1173, %v1152
        %v1175 = vpop.permute.xlu0 %1174
        %v1177 = vmul.f32 %v1160, %v1153
        %v1178 = vmul.f32 %v1165, %v1154
        %v1179 = vmul.f32 %v1170, %v1155
        %v1180 = vmul.f32 %v1175, %v1156
        %v1181 = vadd.f32 %v1177, 0.0
        %v1182 = vadd.f32 %v1178, 0.0
        %v1183 = vadd.f32 %v1179, 0.0
        %v1184 = vadd.f32 %v1180, 0.0
        %s1185 = sld [smem:[#allocation14 + $0x80]]
        %v1186 = vstv %s1185
        %v1187 = vsub.f32 %v1069, %v1186
        %v1188 = vsub.f32 %v1070, %v1186
        %v1189 = vsub.f32 %v1071, %v1186
        %v1190 = vsub.f32 %v1072, %v1186
        %v1191 = vmul.f32 %v1187, %v1187
        %v1192 = vmul.f32 %v1188, %v1188
        %v1193 = vmul.f32 %v1189, %v1189
        %v1194 = vmul.f32 %v1190, %v1190
        %s1195 = sld [smem:[#allocation15 + $0x80]]
        %s1196 = smul.f32 %s1195, %s1195
        %v1197 = vstv %s1196
        %v1198 = vmul.f32 %v1191, %v1197
        %v1199 = vmul.f32 %v1192, %v1197
        %v1200 = vmul.f32 %v1193, %v1197
        %v1201 = vmul.f32 %v1194, %v1197
        %v1202 = vadd.f32 %v1198, 0.0
        %v1203 = vadd.f32 %v1199, 0.0
        %v1204 = vadd.f32 %v1200, 0.0
        %v1205 = vadd.f32 %v1201, 0.0
        %s1206 = sld [smem:[#allocation14 + $0x81]]
        %v1207 = vstv %s1206
        %v1208 = vsub.f32 %v1095, %v1207
        %v1209 = vsub.f32 %v1096, %v1207
        %v1210 = vsub.f32 %v1097, %v1207
        %v1211 = vsub.f32 %v1098, %v1207
        %v1212 = vmul.f32 %v1208, %v1208
        %v1213 = vmul.f32 %v1209, %v1209
        %v1214 = vmul.f32 %v1210, %v1210
        %v1215 = vmul.f32 %v1211, %v1211
        %s1216 = sld [smem:[#allocation15 + $0x81]]
        %s1217 = smul.f32 %s1216, %s1216
        %v1218 = vstv %s1217
        %v1219 = vmul.f32 %v1212, %v1218
        %v1220 = vmul.f32 %v1213, %v1218
        %v1221 = vmul.f32 %v1214, %v1218
        %v1222 = vmul.f32 %v1215, %v1218
        %v1223 = vadd.f32 %v1202, %v1219
        %v1224 = vadd.f32 %v1203, %v1220
        %v1225 = vadd.f32 %v1204, %v1221
        %v1226 = vadd.f32 %v1205, %v1222
        %v1227 = vmul.f32 %v1223, -0.5
        %v1228 = vmul.f32 %v1224, -0.5
        %v1229 = vmul.f32 %v1225, -0.5
        %v1230 = vmul.f32 %v1226, -0.5
        %v1231 = vmul.f32 %v1227, 1.442695
        %v1232 = vpow.pop %v1231
        %v1233 = vmul.f32 %v1228, 1.442695
        %v1234 = vpow.pop %v1233
        %v1235 = vmul.f32 %v1229, 1.442695
        %v1236 = vpow.pop %v1235
        %v1237 = vmul.f32 %v1230, 1.442695
        %v1238 = vpow.pop %v1237
        %v1239 = vld [vmem:[#allocation4 + $0x8] sm:$0xff]
        %v1240 = vld [vmem:[#allocation4 + $0x20] sm:$0xff]
        %v1241 = vld [vmem:[#allocation4 + $0x38] sm:$0xff]
        %v1242 = vld [vmem:[#allocation4 + $0x50] sm:$0xff]
        %1244 = vset.pattern.permute.xlu0 0
        %1245 = vperm.xlu0 %1244, %v1232
        %v1246 = vpop.permute.xlu0 %1245
        %1249 = vset.pattern.permute.xlu0 0
        %1250 = vperm.xlu0 %1249, %v1234
        %v1251 = vpop.permute.xlu0 %1250
        %1254 = vset.pattern.permute.xlu0 0
        %1255 = vperm.xlu0 %1254, %v1236
        %v1256 = vpop.permute.xlu0 %1255
        %1259 = vset.pattern.permute.xlu0 0
        %1260 = vperm.xlu0 %1259, %v1238
        %v1261 = vpop.permute.xlu0 %1260
        %v1263 = vmul.f32 %v1246, %v1239
        %v1264 = vmul.f32 %v1251, %v1240
        %v1265 = vmul.f32 %v1256, %v1241
        %v1266 = vmul.f32 %v1261, %v1242
        %v1267 = vadd.f32 %v1181, %v1263
        %v1268 = vadd.f32 %v1182, %v1264
        %v1269 = vadd.f32 %v1183, %v1265
        %v1270 = vadd.f32 %v1184, %v1266
        %s1271 = sld [smem:[#allocation14 + $0x100]]
        %v1272 = vstv %s1271
        %v1273 = vsub.f32 %v1069, %v1272
        %v1274 = vsub.f32 %v1070, %v1272
        %v1275 = vsub.f32 %v1071, %v1272
        %v1276 = vsub.f32 %v1072, %v1272
        %v1277 = vmul.f32 %v1273, %v1273
        %v1278 = vmul.f32 %v1274, %v1274
        %v1279 = vmul.f32 %v1275, %v1275
        %v1280 = vmul.f32 %v1276, %v1276
        %s1281 = sld [smem:[#allocation15 + $0x100]]
        %s1282 = smul.f32 %s1281, %s1281
        %v1283 = vstv %s1282
        %v1284 = vmul.f32 %v1277, %v1283
        %v1285 = vmul.f32 %v1278, %v1283
        %v1286 = vmul.f32 %v1279, %v1283
        %v1287 = vmul.f32 %v1280, %v1283
        %v1288 = vadd.f32 %v1284, 0.0
        %v1289 = vadd.f32 %v1285, 0.0
        %v1290 = vadd.f32 %v1286, 0.0
        %v1291 = vadd.f32 %v1287, 0.0
        %s1292 = sld [smem:[#allocation14 + $0x101]]
        %v1293 = vstv %s1292
        %v1294 = vsub.f32 %v1095, %v1293
        %v1295 = vsub.f32 %v1096, %v1293
        %v1296 = vsub.f32 %v1097, %v1293
        %v1297 = vsub.f32 %v1098, %v1293
        %v1298 = vmul.f32 %v1294, %v1294
        %v1299 = vmul.f32 %v1295, %v1295
        %v1300 = vmul.f32 %v1296, %v1296
        %v1301 = vmul.f32 %v1297, %v1297
        %s1302 = sld [smem:[#allocation15 + $0x101]]
        %s1303 = smul.f32 %s1302, %s1302
        %v1304 = vstv %s1303
        %v1305 = vmul.f32 %v1298, %v1304
        %v1306 = vmul.f32 %v1299, %v1304
        %v1307 = vmul.f32 %v1300, %v1304
        %v1308 = vmul.f32 %v1301, %v1304
        %v1309 = vadd.f32 %v1288, %v1305
        %v1310 = vadd.f32 %v1289, %v1306
        %v1311 = vadd.f32 %v1290, %v1307
        %v1312 = vadd.f32 %v1291, %v1308
        %v1313 = vmul.f32 %v1309, -0.5
        %v1314 = vmul.f32 %v1310, -0.5
        %v1315 = vmul.f32 %v1311, -0.5
        %v1316 = vmul.f32 %v1312, -0.5
        %v1317 = vmul.f32 %v1313, 1.442695
        %v1318 = vpow.pop %v1317
        %v1319 = vmul.f32 %v1314, 1.442695
        %v1320 = vpow.pop %v1319
        %v1321 = vmul.f32 %v1315, 1.442695
        %v1322 = vpow.pop %v1321
        %v1323 = vmul.f32 %v1316, 1.442695
        %v1324 = vpow.pop %v1323
        %v1325 = vld [vmem:[#allocation4 + $0x10] sm:$0xff]
        %v1326 = vld [vmem:[#allocation4 + $0x28] sm:$0xff]
        %v1327 = vld [vmem:[#allocation4 + $0x40] sm:$0xff]
        %v1328 = vld [vmem:[#allocation4 + $0x58] sm:$0xff]
        %1330 = vset.pattern.permute.xlu0 0
        %1331 = vperm.xlu0 %1330, %v1318
        %v1332 = vpop.permute.xlu0 %1331
        %1335 = vset.pattern.permute.xlu0 0
        %1336 = vperm.xlu0 %1335, %v1320
        %v1337 = vpop.permute.xlu0 %1336
        %1340 = vset.pattern.permute.xlu0 0
        %1341 = vperm.xlu0 %1340, %v1322
        %v1342 = vpop.permute.xlu0 %1341
        %1345 = vset.pattern.permute.xlu0 0
        %1346 = vperm.xlu0 %1345, %v1324
        %v1347 = vpop.permute.xlu0 %1346
        %v1349 = vmul.f32 %v1332, %v1325
        %v1350 = vmul.f32 %v1337, %v1326
        %v1351 = vmul.f32 %v1342, %v1327
        %v1352 = vmul.f32 %v1347, %v1328
        %v1353 = vadd.f32 %v1267, %v1349
        %v1354 = vadd.f32 %v1268, %v1350
        %v1355 = vadd.f32 %v1269, %v1351
        %v1356 = vadd.f32 %v1270, %v1352
        %v1357 = vlaneseq
        %v1358 = vshrl.u32 %v1357, 7
        %v1359 = vadd.s32 %v1358, 8
        %v1360 = vadd.s32 %v1358, 16
        %v1361 = vadd.s32 %v1358, 24
        %v1362 = vstv %s649
        %v1363 = vadd.s32 %v1358, %v1362
        %v1364 = vadd.s32 %v1359, %v1362
        %v1365 = vadd.s32 %v1360, %v1362
        %v1366 = vadd.s32 %v1361, %v1362
        %vm1367 = vcmp.lt.s32.totalorder %v1363, 80
        %vm1368 = vcmp.lt.s32.totalorder %v1364, 80
        %vm1369 = vcmp.lt.s32.totalorder %v1365, 80
        %vm1370 = vcmp.lt.s32.totalorder %v1366, 80
        %v1371 = vsel %vm1367, 1, 0
        %v1372 = vsel %vm1368, 1, 0
        %v1373 = vsel %vm1369, 1, 0
        %v1374 = vsel %vm1370, 1, 0
        %vm1375 = vcmp.eq.s32.totalorder %v1371, 1
        %vm1376 = vcmp.eq.s32.totalorder %v1372, 1
        %vm1377 = vcmp.eq.s32.totalorder %v1373, 1
        %vm1378 = vcmp.eq.s32.totalorder %v1374, 1
        %v1379 = vsel %vm1375, %v1353, 0.0
        %v1380 = vsel %vm1376, %v1354, 0.0
        %v1381 = vsel %vm1377, %v1355, 0.0
        %v1382 = vsel %vm1378, %v1356, 0.0
        %1383 = vst [vmem:[#allocation5] sm:$0xff] %v1379
        %1384 = vst [vmem:[#allocation5 + $0x8] sm:$0xff] %v1380
        %1385 = vst [vmem:[#allocation5 + $0x10] sm:$0xff] %v1381
        %1386 = vst [vmem:[#allocation5 + $0x18] sm:$0xff] %v1382
        loop: start=0, step=1, limit=32
        $region120: #{monet_forward_pallas.3} parent=91 // loop_pre_header
          _
        $region121: #{monet_forward_pallas.3} parent=91 // loop_header
          %s1388 = sphi 0, %s1392
          %p1389 = scmp.ge.s32.totalorder %s1388, 32
        $region122: #{monet_forward_pallas.3} parent=91 // loop_header_branch
          %1391 = sbr.rel (%p1389) target = $region126
        $region123: #{monet_forward_pallas.3} parent=91 // loop_body
          %s1393 = sadd.s32 %s649, %s1388
          %s1394 = sld [smem:[#allocation9 + %s1393]]
          %s1395 = scalar_lea.vmem [#allocation6], %s1394
          %v1396 = vld [vmem:[%s1395] sm:$0x1]
          %s1397 = scalar_lea.vmem [#allocation5], %s1388
          %v1398 = vld [vmem:[%s1397] sm:$0x1]
          %v1399 = vadd.f32 %v1396, %v1398
          %1400 = vst [vmem:[%s1395] sm:$0x1] %v1399
        $region124: #{monet_forward_pallas.3} parent=91 // loop_footer
          %s1392 = sadd.s32 1, %s1388
        $region125: #{monet_forward_pallas.3} parent=91 // loop_footer_branch
          %1387 = sbr.rel target = $region121
        $region126: #{monet_forward_pallas.3} parent=91 // loop_exit
          _
        %p1401 = scmp.eq.s32.totalorder %s44, 2
        // Predicated region
        $region127: #{monet_forward_pallas.3} parent=91 // pred_check
          %p1402 = pneg %p1401
        $region128: #{monet_forward_pallas.3} parent=91 // pred_check_branch
          %1404 = sbr.rel (%p1402) target = $region130
        $region129: #{monet_forward_pallas.3} parent=91 // pred_region
          %v1405 = vld [vmem:[#allocation6] sm:$0xff]
          %v1406 = vld [vmem:[#allocation6 + $0x8] sm:$0xff]
          %v1407 = vld [vmem:[#allocation6 + $0x10] sm:$0xff]
          %v1408 = vld [vmem:[#allocation6 + $0x18] sm:$0xff]
          %v1409 = vld [vmem:[%s12] sm:$0x1]
          %v1411 = vlaneseq
          %v1412 = vshrl.u32 %v1411, 7
          %v1413 = vsub.s32 0, %v1412
          %v1414 = vrot.slane %v1409, %v1413
          %v1416 = vmul.f32 %v1405, %v1414
          %v1417 = vmul.f32 %v1406, %v1414
          %v1418 = vmul.f32 %v1407, %v1414
          %v1419 = vmul.f32 %v1408, %v1414
          %v1420 = vld [vmem:[%s13] sm:$0x1]
          %v1422 = vlaneseq
          %v1423 = vshrl.u32 %v1422, 7
          %v1424 = vsub.s32 0, %v1423
          %v1425 = vrot.slane %v1420, %v1424
          %v1427 = vadd.f32 %v1416, %v1425
          %v1428 = vadd.f32 %v1417, %v1425
          %v1429 = vadd.f32 %v1418, %v1425
          %v1430 = vadd.f32 %v1419, %v1425
          %v1431 = vmax.f32 %v1427, 0.0
          %v1432 = vmax.f32 %v1428, 0.0
          %v1433 = vmax.f32 %v1429, 0.0
          %v1434 = vmax.f32 %v1430, 0.0
          %v1435 = vld [vmem:[#allocation2] sm:$0xff]
          %v1436 = vld [vmem:[#allocation2 + $0x8] sm:$0xff]
          %v1437 = vld [vmem:[#allocation2 + $0x10] sm:$0xff]
          %v1438 = vld [vmem:[#allocation2 + $0x18] sm:$0xff]
          %v1439 = vadd.f32 %v1435, %v1431
          %v1440 = vadd.f32 %v1436, %v1432
          %v1441 = vadd.f32 %v1437, %v1433
          %v1442 = vadd.f32 %v1438, %v1434
          %v1443 = vld [vmem:[%s14] sm:$0xff]
          %v1444 = vld [vmem:[%s14 + $0x8] sm:$0xff]
          %v1445 = vld [vmem:[%s14 + $0x10] sm:$0xff]
          %v1446 = vld [vmem:[%s14 + $0x18] sm:$0xff]
          %v1447 = vld [vmem:[%s14 + $0x20] sm:$0xff]
          %v1448 = vld [vmem:[%s14 + $0x28] sm:$0xff]
          %v1449 = vld [vmem:[%s14 + $0x30] sm:$0xff]
          %v1450 = vld [vmem:[%s14 + $0x38] sm:$0xff]
          %v1451 = vld [vmem:[%s14 + $0x40] sm:$0xff]
          %v1452 = vld [vmem:[%s14 + $0x48] sm:$0xff]
          %v1453 = vld [vmem:[%s14 + $0x50] sm:$0xff]
          %v1454 = vld [vmem:[%s14 + $0x58] sm:$0xff]
          %v1455 = vld [vmem:[%s14 + $0x60] sm:$0xff]
          %v1456 = vld [vmem:[%s14 + $0x68] sm:$0xff]
          %v1457 = vld [vmem:[%s14 + $0x70] sm:$0xff]
          %v1458 = vld [vmem:[%s14 + $0x78] sm:$0xff]
          %v1459 = vld [vmem:[%s15] sm:$0x1]
          %v1461 = vlaneseq
          %v1462 = vshrl.u32 %v1461, 7
          %v1463 = vsub.s32 0, %v1462
          %v1464 = vrot.slane %v1459, %v1463
          %1466 = vmatprep.subr.mxu0 0.0
          %1467 = vmatpush1.msra.mxu0 %v1458
          %1468 = vmatprep.subr.mxu0 0.0
          %1469 = vmatpush1.msra.mxu0 %v1457
          %1470 = vmatprep.subr.mxu0 0.0
          %1471 = vmatpush1.msra.mxu0 %v1456
          %1472 = vmatprep.subr.mxu0 0.0
          %1473 = vmatpush1.msra.mxu0 %v1455
          %1474 = vmatprep.subr.mxu0 0.0
          %1475 = vmatpush1.msra.mxu0 %v1454
          %1476 = vmatprep.subr.mxu0 0.0
          %1477 = vmatpush1.msra.mxu0 %v1453
          %1478 = vmatprep.subr.mxu0 0.0
          %1479 = vmatpush1.msra.mxu0 %v1452
          %1480 = vmatprep.subr.mxu0 0.0
          %1481 = vmatpush1.msra.mxu0 %v1451
          %1482 = vmatprep.subr.mxu0 0.0
          %1483 = vmatpush1.msra.mxu0 %v1450
          %1484 = vmatprep.subr.mxu0 0.0
          %1485 = vmatpush1.msra.mxu0 %v1449
          %1486 = vmatprep.subr.mxu0 0.0
          %1487 = vmatpush1.msra.mxu0 %v1448
          %1488 = vmatprep.subr.mxu0 0.0
          %1489 = vmatpush1.msra.mxu0 %v1447
          %1490 = vmatprep.subr.mxu0 0.0
          %1491 = vmatpush1.msra.mxu0 %v1446
          %1492 = vmatprep.subr.mxu0 0.0
          %1493 = vmatpush1.msra.mxu0 %v1445
          %1494 = vmatprep.subr.mxu0 0.0
          %1495 = vmatpush1.msra.mxu0 %v1444
          %1496 = vmatprep.subr.mxu0 0.0
          %1497 = vmatpush1.msra.mxu0 %v1443
          %1498 = vmatprep.subr.mxu0 0.0
          %1499 = vmatpush2.msra.mxu0 0.0
          %1500 = vmatprep.subr.mxu0 0.0
          %1501 = vmatpush2.msra.mxu0 0.0
          %1502 = vmatprep.subr.mxu0 0.0
          %1503 = vmatpush2.msra.mxu0 0.0
          %1504 = vmatprep.subr.mxu0 0.0
          %1505 = vmatpush2.msra.mxu0 0.0
          %1506 = vmatprep.subr.mxu0 0.0
          %1507 = vmatpush2.msra.mxu0 0.0
          %1508 = vmatprep.subr.mxu0 0.0
          %1509 = vmatpush2.msra.mxu0 0.0
          %1510 = vmatprep.subr.mxu0 0.0
          %1511 = vmatpush2.msra.mxu0 0.0
          %1512 = vmatprep.subr.mxu0 0.0
          %1513 = vmatpush2.msra.mxu0 0.0
          %1514 = vmatprep.subr.mxu0 0.0
          %1515 = vmatpush2.msra.mxu0 0.0
          %1516 = vmatprep.subr.mxu0 0.0
          %1517 = vmatpush2.msra.mxu0 0.0
          %1518 = vmatprep.subr.mxu0 0.0
          %1519 = vmatpush2.msra.mxu0 0.0
          %1520 = vmatprep.subr.mxu0 0.0
          %1521 = vmatpush2.msra.mxu0 0.0
          %1522 = vmatprep.subr.mxu0 0.0
          %1523 = vmatpush2.msra.mxu0 0.0
          %1524 = vmatprep.subr.mxu0 0.0
          %1525 = vmatpush2.msra.mxu0 0.0
          %1526 = vmatprep.subr.mxu0 0.0
          %1527 = vmatpush2.msra.mxu0 0.0
          %1528 = vmatprep.subr.mxu0 0.0
          %1529 = vmatpush2.msra.mxu0 0.0
          %1530 = vmatprep.mubr.f32.mxu0 0.0
          %1531 = vmatmul.mubr.f32.gmra.mxu0 %v1439
          %v1532 = vpop.f32.mrf.mxu0
          %v1533 = vadd.f32 %v1464, %v1532
          %v1534 = vpop.f32.mrf.mxu0
          %1535 = vmatprep.mubr.f32.mxu0 0.0
          %1536 = vmatmul.mubr.f32.gmra.mxu0 %v1440
          %v1537 = vpop.f32.mrf.mxu0
          %v1538 = vadd.f32 %v1464, %v1537
          %v1539 = vpop.f32.mrf.mxu0
          %1540 = vmatprep.mubr.f32.mxu0 0.0
          %1541 = vmatmul.mubr.f32.gmra.mxu0 %v1441
          %v1542 = vpop.f32.mrf.mxu0
          %v1543 = vadd.f32 %v1464, %v1542
          %v1544 = vpop.f32.mrf.mxu0
          %1545 = vmatprep.mubr.f32.mxu0 0.0
          %1546 = vmatmul.mubr.f32.gmra.mxu0 %v1442
          %v1547 = vpop.f32.mrf.mxu0
          %v1548 = vadd.f32 %v1464, %v1547
          %v1549 = vpop.f32.mrf.mxu0
          %1550 = vdwg.mxu0
          %v1551 = vmax.f32 %v1533, 0.0
          %v1552 = vmax.f32 %v1538, 0.0
          %v1553 = vmax.f32 %v1543, 0.0
          %v1554 = vmax.f32 %v1548, 0.0
          %v1555 = vld [vmem:[%s16] sm:$0xff]
          %v1556 = vld [vmem:[%s16 + $0x8] sm:$0xff]
          %v1557 = vld [vmem:[%s16 + $0x10] sm:$0xff]
          %v1558 = vld [vmem:[%s16 + $0x18] sm:$0xff]
          %v1559 = vld [vmem:[%s16 + $0x20] sm:$0xff]
          %v1560 = vld [vmem:[%s16 + $0x28] sm:$0xff]
          %v1561 = vld [vmem:[%s16 + $0x30] sm:$0xff]
          %v1562 = vld [vmem:[%s16 + $0x38] sm:$0xff]
          %v1563 = vld [vmem:[%s16 + $0x40] sm:$0xff]
          %v1564 = vld [vmem:[%s16 + $0x48] sm:$0xff]
          %v1565 = vld [vmem:[%s16 + $0x50] sm:$0xff]
          %v1566 = vld [vmem:[%s16 + $0x58] sm:$0xff]
          %v1567 = vld [vmem:[%s16 + $0x60] sm:$0xff]
          %v1568 = vld [vmem:[%s16 + $0x68] sm:$0xff]
          %v1569 = vld [vmem:[%s16 + $0x70] sm:$0xff]
          %v1570 = vld [vmem:[%s16 + $0x78] sm:$0xff]
          %v1571 = vld [vmem:[%s17] sm:$0x1]
          %v1573 = vlaneseq
          %v1574 = vshrl.u32 %v1573, 7
          %v1575 = vsub.s32 0, %v1574
          %v1576 = vrot.slane %v1571, %v1575
          %1578 = vmatprep.subr.mxu0 0.0
          %1579 = vmatpush1.msra.mxu0 %v1570
          %1580 = vmatprep.subr.mxu0 0.0
          %1581 = vmatpush1.msra.mxu0 %v1569
          %1582 = vmatprep.subr.mxu0 0.0
          %1583 = vmatpush1.msra.mxu0 %v1568
          %1584 = vmatprep.subr.mxu0 0.0
          %1585 = vmatpush1.msra.mxu0 %v1567
          %1586 = vmatprep.subr.mxu0 0.0
          %1587 = vmatpush1.msra.mxu0 %v1566
          %1588 = vmatprep.subr.mxu0 0.0
          %1589 = vmatpush1.msra.mxu0 %v1565
          %1590 = vmatprep.subr.mxu0 0.0
          %1591 = vmatpush1.msra.mxu0 %v1564
          %1592 = vmatprep.subr.mxu0 0.0
          %1593 = vmatpush1.msra.mxu0 %v1563
          %1594 = vmatprep.subr.mxu0 0.0
          %1595 = vmatpush1.msra.mxu0 %v1562
          %1596 = vmatprep.subr.mxu0 0.0
          %1597 = vmatpush1.msra.mxu0 %v1561
          %1598 = vmatprep.subr.mxu0 0.0
          %1599 = vmatpush1.msra.mxu0 %v1560
          %1600 = vmatprep.subr.mxu0 0.0
          %1601 = vmatpush1.msra.mxu0 %v1559
          %1602 = vmatprep.subr.mxu0 0.0
          %1603 = vmatpush1.msra.mxu0 %v1558
          %1604 = vmatprep.subr.mxu0 0.0
          %1605 = vmatpush1.msra.mxu0 %v1557
          %1606 = vmatprep.subr.mxu0 0.0
          %1607 = vmatpush1.msra.mxu0 %v1556
          %1608 = vmatprep.subr.mxu0 0.0
          %1609 = vmatpush1.msra.mxu0 %v1555
          %1610 = vmatprep.subr.mxu0 0.0
          %1611 = vmatpush2.msra.mxu0 0.0
          %1612 = vmatprep.subr.mxu0 0.0
          %1613 = vmatpush2.msra.mxu0 0.0
          %1614 = vmatprep.subr.mxu0 0.0
          %1615 = vmatpush2.msra.mxu0 0.0
          %1616 = vmatprep.subr.mxu0 0.0
          %1617 = vmatpush2.msra.mxu0 0.0
          %1618 = vmatprep.subr.mxu0 0.0
          %1619 = vmatpush2.msra.mxu0 0.0
          %1620 = vmatprep.subr.mxu0 0.0
          %1621 = vmatpush2.msra.mxu0 0.0
          %1622 = vmatprep.subr.mxu0 0.0
          %1623 = vmatpush2.msra.mxu0 0.0
          %1624 = vmatprep.subr.mxu0 0.0
          %1625 = vmatpush2.msra.mxu0 0.0
          %1626 = vmatprep.subr.mxu0 0.0
          %1627 = vmatpush2.msra.mxu0 0.0
          %1628 = vmatprep.subr.mxu0 0.0
          %1629 = vmatpush2.msra.mxu0 0.0
          %1630 = vmatprep.subr.mxu0 0.0
          %1631 = vmatpush2.msra.mxu0 0.0
          %1632 = vmatprep.subr.mxu0 0.0
          %1633 = vmatpush2.msra.mxu0 0.0
          %1634 = vmatprep.subr.mxu0 0.0
          %1635 = vmatpush2.msra.mxu0 0.0
          %1636 = vmatprep.subr.mxu0 0.0
          %1637 = vmatpush2.msra.mxu0 0.0
          %1638 = vmatprep.subr.mxu0 0.0
          %1639 = vmatpush2.msra.mxu0 0.0
          %1640 = vmatprep.subr.mxu0 0.0
          %1641 = vmatpush2.msra.mxu0 0.0
          %1642 = vmatprep.mubr.f32.mxu0 0.0
          %1643 = vmatmul.mubr.f32.gmra.mxu0 %v1551
          %v1644 = vpop.f32.mrf.mxu0
          %v1645 = vadd.f32 %v1576, %v1644
          %v1646 = vpop.f32.mrf.mxu0
          %1647 = vmatprep.mubr.f32.mxu0 0.0
          %1648 = vmatmul.mubr.f32.gmra.mxu0 %v1552
          %v1649 = vpop.f32.mrf.mxu0
          %v1650 = vadd.f32 %v1576, %v1649
          %v1651 = vpop.f32.mrf.mxu0
          %1652 = vmatprep.mubr.f32.mxu0 0.0
          %1653 = vmatmul.mubr.f32.gmra.mxu0 %v1553
          %v1654 = vpop.f32.mrf.mxu0
          %v1655 = vadd.f32 %v1576, %v1654
          %v1656 = vpop.f32.mrf.mxu0
          %1657 = vmatprep.mubr.f32.mxu0 0.0
          %1658 = vmatmul.mubr.f32.gmra.mxu0 %v1554
          %v1659 = vpop.f32.mrf.mxu0
          %v1660 = vadd.f32 %v1576, %v1659
          %v1661 = vpop.f32.mrf.mxu0
          %1662 = vdwg.mxu0
          %v1663 = vmax.f32 %v1645, 0.0
          %v1664 = vmax.f32 %v1650, 0.0
          %v1665 = vmax.f32 %v1655, 0.0
          %v1666 = vmax.f32 %v1660, 0.0
          %v1667 = vld [vmem:[%s18] sm:$0xff]
          %v1668 = vld [vmem:[%s18 + $0x8] sm:$0xff]
          %v1669 = vld [vmem:[%s18 + $0x10] sm:$0xff]
          %v1670 = vld [vmem:[%s18 + $0x18] sm:$0xff]
          %v1671 = vld [vmem:[%s18 + $0x20] sm:$0xff]
          %v1672 = vld [vmem:[%s18 + $0x28] sm:$0xff]
          %v1673 = vld [vmem:[%s18 + $0x30] sm:$0xff]
          %v1674 = vld [vmem:[%s18 + $0x38] sm:$0xff]
          %v1675 = vld [vmem:[%s18 + $0x40] sm:$0xff]
          %v1676 = vld [vmem:[%s18 + $0x48] sm:$0xff]
          %v1677 = vld [vmem:[%s18 + $0x50] sm:$0xff]
          %v1678 = vld [vmem:[%s18 + $0x58] sm:$0xff]
          %v1679 = vld [vmem:[%s18 + $0x60] sm:$0xff]
          %v1680 = vld [vmem:[%s18 + $0x68] sm:$0xff]
          %v1681 = vld [vmem:[%s18 + $0x70] sm:$0xff]
          %v1682 = vld [vmem:[%s18 + $0x78] sm:$0xff]
          %v1683 = vld [vmem:[%s19] sm:$0x1]
          %v1685 = vlaneseq
          %v1686 = vshrl.u32 %v1685, 7
          %v1687 = vsub.s32 0, %v1686
          %v1688 = vrot.slane %v1683, %v1687
          %1690 = vmatprep.subr.mxu0 0.0
          %1691 = vmatpush1.msra.mxu0 %v1682
          %1692 = vmatprep.subr.mxu0 0.0
          %1693 = vmatpush1.msra.mxu0 %v1681
          %1694 = vmatprep.subr.mxu0 0.0
          %1695 = vmatpush1.msra.mxu0 %v1680
          %1696 = vmatprep.subr.mxu0 0.0
          %1697 = vmatpush1.msra.mxu0 %v1679
          %1698 = vmatprep.subr.mxu0 0.0
          %1699 = vmatpush1.msra.mxu0 %v1678
          %1700 = vmatprep.subr.mxu0 0.0
          %1701 = vmatpush1.msra.mxu0 %v1677
          %1702 = vmatprep.subr.mxu0 0.0
          %1703 = vmatpush1.msra.mxu0 %v1676
          %1704 = vmatprep.subr.mxu0 0.0
          %1705 = vmatpush1.msra.mxu0 %v1675
          %1706 = vmatprep.subr.mxu0 0.0
          %1707 = vmatpush1.msra.mxu0 %v1674
          %1708 = vmatprep.subr.mxu0 0.0
          %1709 = vmatpush1.msra.mxu0 %v1673
          %1710 = vmatprep.subr.mxu0 0.0
          %1711 = vmatpush1.msra.mxu0 %v1672
          %1712 = vmatprep.subr.mxu0 0.0
          %1713 = vmatpush1.msra.mxu0 %v1671
          %1714 = vmatprep.subr.mxu0 0.0
          %1715 = vmatpush1.msra.mxu0 %v1670
          %1716 = vmatprep.subr.mxu0 0.0
          %1717 = vmatpush1.msra.mxu0 %v1669
          %1718 = vmatprep.subr.mxu0 0.0
          %1719 = vmatpush1.msra.mxu0 %v1668
          %1720 = vmatprep.subr.mxu0 0.0
          %1721 = vmatpush1.msra.mxu0 %v1667
          %1722 = vmatprep.subr.mxu0 0.0
          %1723 = vmatpush2.msra.mxu0 0.0
          %1724 = vmatprep.subr.mxu0 0.0
          %1725 = vmatpush2.msra.mxu0 0.0
          %1726 = vmatprep.subr.mxu0 0.0
          %1727 = vmatpush2.msra.mxu0 0.0
          %1728 = vmatprep.subr.mxu0 0.0
          %1729 = vmatpush2.msra.mxu0 0.0
          %1730 = vmatprep.subr.mxu0 0.0
          %1731 = vmatpush2.msra.mxu0 0.0
          %1732 = vmatprep.subr.mxu0 0.0
          %1733 = vmatpush2.msra.mxu0 0.0
          %1734 = vmatprep.subr.mxu0 0.0
          %1735 = vmatpush2.msra.mxu0 0.0
          %1736 = vmatprep.subr.mxu0 0.0
          %1737 = vmatpush2.msra.mxu0 0.0
          %1738 = vmatprep.subr.mxu0 0.0
          %1739 = vmatpush2.msra.mxu0 0.0
          %1740 = vmatprep.subr.mxu0 0.0
          %1741 = vmatpush2.msra.mxu0 0.0
          %1742 = vmatprep.subr.mxu0 0.0
          %1743 = vmatpush2.msra.mxu0 0.0
          %1744 = vmatprep.subr.mxu0 0.0
          %1745 = vmatpush2.msra.mxu0 0.0
          %1746 = vmatprep.subr.mxu0 0.0
          %1747 = vmatpush2.msra.mxu0 0.0
          %1748 = vmatprep.subr.mxu0 0.0
          %1749 = vmatpush2.msra.mxu0 0.0
          %1750 = vmatprep.subr.mxu0 0.0
          %1751 = vmatpush2.msra.mxu0 0.0
          %1752 = vmatprep.subr.mxu0 0.0
          %1753 = vmatpush2.msra.mxu0 0.0
          %1754 = vmatprep.mubr.f32.mxu0 0.0
          %1755 = vmatmul.mubr.f32.gmra.mxu0 %v1663
          %v1756 = vpop.f32.mrf.mxu0
          %v1757 = vadd.f32 %v1688, %v1756
          %v1758 = vpop.f32.mrf.mxu0
          %1759 = vmatprep.mubr.f32.mxu0 0.0
          %1760 = vmatmul.mubr.f32.gmra.mxu0 %v1664
          %v1761 = vpop.f32.mrf.mxu0
          %v1762 = vadd.f32 %v1688, %v1761
          %v1763 = vpop.f32.mrf.mxu0
          %1764 = vmatprep.mubr.f32.mxu0 0.0
          %1765 = vmatmul.mubr.f32.gmra.mxu0 %v1665
          %v1766 = vpop.f32.mrf.mxu0
          %v1767 = vadd.f32 %v1688, %v1766
          %v1768 = vpop.f32.mrf.mxu0
          %1769 = vmatprep.mubr.f32.mxu0 0.0
          %1770 = vmatmul.mubr.f32.gmra.mxu0 %v1666
          %v1771 = vpop.f32.mrf.mxu0
          %v1772 = vadd.f32 %v1688, %v1771
          %v1773 = vpop.f32.mrf.mxu0
          %1774 = vdwg.mxu0
          %1775 = vst [vmem:[%s20] sm:$0xff] %v1757
          %1776 = vst [vmem:[%s20 + $0x8] sm:$0xff] %v1762
          %1777 = vst [vmem:[%s20 + $0x10] sm:$0xff] %v1767
          %1778 = vst [vmem:[%s20 + $0x18] sm:$0xff] %v1772
        $region130: #{monet_forward_pallas.3} parent=91 // pred_fallthru
          _
        // Predicated region
        $region131: #{monet_forward_pallas.3} parent=91 // pred_check
          %p1779 = pneg %p445
        $region132: #{monet_forward_pallas.3} parent=91 // pred_check_branch
          %1781 = sbr.rel (%p1779) target = $region134
        $region133: #{monet_forward_pallas.3} parent=91 // pred_region
          _
        $region134: #{monet_forward_pallas.3} parent=91 // pred_fallthru
          _
        // Predicated region
        $region135: #{monet_forward_pallas.3} parent=91 // pred_check
          %p1782 = pneg %p445
        $region136: #{monet_forward_pallas.3} parent=91 // pred_check_branch
          %1784 = sbr.rel (%p1782) target = $region138
        $region137: #{monet_forward_pallas.3} parent=91 // pred_region
          _
        $region138: #{monet_forward_pallas.3} parent=91 // pred_fallthru
          _
      $region92: #{monet_forward_pallas.3} parent=5 // pred_fallthru
        _
      %p1785 = scmp.le.s32.totalorder 2, %s39
      // Predicated region
      $region139: #{monet_forward_pallas.3} parent=5 // pred_check
        %p1786 = pneg %p1785
      $region140: #{monet_forward_pallas.3} parent=5 // pred_check_branch
        %1788 = sbr.rel (%p1786) target = $region142
      $region141: #{monet_forward_pallas.3} parent=5 // pred_region
        %s1789 = ssub.s32 %s39, 2
      $region142: #{monet_forward_pallas.3} parent=5 // pred_fallthru
        _
    $region6: #{monet_forward_pallas.3} parent=1 // loop_footer
      %s43 = sadd.s32 1, %s39
    $region7: #{monet_forward_pallas.3} parent=1 // loop_footer_branch
      %38 = sbr.rel target = $region3
    $region8: #{monet_forward_pallas.3} parent=1 // loop_exit
      _
    %1790 = vsyncpa [#allocation11], 1
    %s1791 = scalar_lea.sflag [#allocation11], 1
    %1792 = vsyncpa %s1791, 1
    %1793 = vsyncpa [#allocation13], 1
    %1794 = vsyncpa [#allocation16], 1

</llo_original>
